<compile_context>
chip_gen: v7x
topology: tpu7x:2x2x1
jax: 0.10.0
libtpu: 0.0.40
codegen_flags: <defaults>
</compile_context>

<pallas_src>
import jax
import jax.numpy as jnp
from jax import lax
from jax.experimental import pallas as pl
from jax.experimental.pallas import tpu as pltpu


MATMUL_DTYPE = jnp.bfloat16   # MXU operand dtype (f32 accumulation everywhere)
LN_EPS = 1e-5
_VMEM_LIMIT_BYTES = 40 * 1024 * 1024   # raised scoped-VMEM cap (safe on v5e/v6e/v7x)
_NUM_TC = None


# ----------------------------- tiling helpers -----------------------------

def _num_tensorcores_per_device():
    """1 TensorCore per device on v5e/v6e (and v2/v3); 2 on v4/v5p/v7x (megacore)."""
    global _NUM_TC
    if _NUM_TC is None:
        try:
            kind = jax.devices()[0].device_kind.lower()
        except Exception:
            kind = ""
        if ("lite" in kind) or ("v5e" in kind) or ("v6" in kind) or ("v2" in kind) or ("v3" in kind):
            _NUM_TC = 1
        elif ("v4" in kind) or ("v5" in kind) or ("v7" in kind) or ("7x" in kind):
            _NUM_TC = 2
        else:
            _NUM_TC = 1
    return _NUM_TC


def _ceil_to(x, m):
    return ((x + m - 1) // m) * m


def _row_tiling(R):
    """Return (tm, R_padded).  tm is a multiple of 16 (bf16 row tiles).  On dual-TC
    chips prefer an even tile count so the 'parallel' grid axis feeds both cores; on
    single-TC chips take the largest VMEM-fitting tile (often a single tile)."""
    n_tc = _num_tensorcores_per_device()
    max_tm = 512 if n_tc > 1 else 1024   # per-generation cap (v7x has 64 MiB VMEM/TC)
    if n_tc > 1:
        Rp = _ceil_to(R, 32)
        if Rp // 2 <= max_tm:
            return Rp // 2, Rp
    Rp = _ceil_to(R, 16)
    if Rp <= max_tm:
        return Rp, Rp
    Rp = _ceil_to(R, max_tm)
    return max_tm, Rp


def _pad_rows(x, Rp):
    R = x.shape[0]
    if Rp == R:
        return x
    return jnp.pad(x, ((0, Rp - R), (0, 0)))


# ----------------------------- Pallas kernels -----------------------------

def _make_proj_kernel(has_pos):
    """value = src @ Wv + bv (bf16 out);  [offsets|logits] = (src + pos) @ Wsa + bsa (f32 out)."""
    def kernel(*refs):
        i = 0
        src_ref = refs[i]; i += 1
        if has_pos:
            pos_ref = refs[i]; i += 1
        wv_ref, wsa_ref, bv_ref, bsa_ref = refs[i:i + 4]; i += 4
        val_ref, sa_ref = refs[i], refs[i + 1]

        src = src_ref[...]
        if has_pos:
            q = src + pos_ref[...]          # VPU add; no zero-block matmul
        else:
            q = src
        val = jnp.dot(src.astype(MATMUL_DTYPE), wv_ref[...],
                      preferred_element_type=jnp.float32) + bv_ref[...]
        sa = jnp.dot(q.astype(MATMUL_DTYPE), wsa_ref[...],
                     preferred_element_type=jnp.float32) + bsa_ref[...]
        val_ref[...] = val.astype(val_ref.dtype)
        sa_ref[...] = sa.astype(sa_ref.dtype)
    return kernel


def _make_tail_kernel(has_pos, with_next):
    """out-proj + residual + LN1 + FFN + residual + LN2, optionally fused with the NEXT
    layer's value / offset / logit projections (saves one (R,C) HBM round trip/layer)."""
    def kernel(*refs):
        i = 0
        attn_ref = refs[i]; i += 1
        src_ref = refs[i]; i += 1
        if with_next and has_pos:
            pos_ref = refs[i]; i += 1
        (ow_ref, ob_ref, g1_ref, b1_ref, w1_ref, fb1_ref,
         w2_ref, fb2_ref, g2_ref, b2_ref) = refs[i:i + 10]; i += 10
        if with_next:
            wv_ref, wsa_ref, bv_ref, bsa_ref = refs[i:i + 4]; i += 4
        x_ref = refs[i]; i += 1
        if with_next:
            val_ref, sa_ref = refs[i], refs[i + 1]

        # MSDeformAttn output projection (attn arrives in bf16)
        y = jnp.dot(attn_ref[...], ow_ref[...],
                    preferred_element_type=jnp.float32) + ob_ref[...]
        # residual + LayerNorm1
        s = src_ref[...] + y
        mean = jnp.mean(s, axis=-1, keepdims=True)
        var = jnp.mean((s - mean) ** 2, axis=-1, keepdims=True)
        x1 = (s - mean) * lax.rsqrt(var + LN_EPS) * g1_ref[...] + b1_ref[...]
        # FFN
        h = jnp.maximum(jnp.dot(x1.astype(MATMUL_DTYPE), w1_ref[...],
                                preferred_element_type=jnp.float32) + fb1_ref[...], 0.0)
        y2 = jnp.dot(h.astype(MATMUL_DTYPE), w2_ref[...],
                     preferred_element_type=jnp.float32) + fb2_ref[...]
        # residual + LayerNorm2
        s2 = x1 + y2
        mean2 = jnp.mean(s2, axis=-1, keepdims=True)
        var2 = jnp.mean((s2 - mean2) ** 2, axis=-1, keepdims=True)
        x2 = (s2 - mean2) * lax.rsqrt(var2 + LN_EPS) * g2_ref[...] + b2_ref[...]
        x_ref[...] = x2.astype(x_ref.dtype)

        if with_next:
            # next layer's projections while x2 is still in vregs
            if has_pos:
                q = x2 + pos_ref[...]
            else:
                q = x2
            val = jnp.dot(x2.astype(MATMUL_DTYPE), wv_ref[...],
                          preferred_element_type=jnp.float32) + bv_ref[...]
            sa = jnp.dot(q.astype(MATMUL_DTYPE), wsa_ref[...],
                         preferred_element_type=jnp.float32) + bsa_ref[...]
            val_ref[...] = val.astype(val_ref.dtype)
            sa_ref[...] = sa.astype(sa_ref.dtype)
    return kernel


# ----------------------------- kernel wrappers -----------------------------

_ROW_MAP = lambda i: (i, 0)
_CONST_MAP = lambda i: (0, 0)
# TODO(synk): once pipeline_mode=pl.Buffered(1) is reliably supported, single-buffer the
# constant-index weight BlockSpecs below to halve their VMEM footprint.


def pallas_fused_projections(src2, pos2, p):
    """src2/pos2: (R, C) f32 -> value (R, C) bf16 and [offsets|logits] (R, Dsa) f32."""
    R, C = src2.shape
    Dsa = p['wsa'].shape[1]
    has_pos = pos2 is not None
    tm, Rp = _row_tiling(R)

    in_arrays = [_pad_rows(src2, Rp)]
    in_specs = [pl.BlockSpec((tm, C), _ROW_MAP)]
    if has_pos:
        in_arrays.append(_pad_rows(pos2, Rp))
        in_specs.append(pl.BlockSpec((tm, C), _ROW_MAP))
    in_arrays += [p['wv'], p['wsa'], p['bv'].reshape(1, C), p['bsa'].reshape(1, Dsa)]
    in_specs += [pl.BlockSpec((C, C), _CONST_MAP), pl.BlockSpec((C, Dsa), _CONST_MAP),
                 pl.BlockSpec((1, C), _CONST_MAP), pl.BlockSpec((1, Dsa), _CONST_MAP)]

    val, sa = pl.pallas_call(
        _make_proj_kernel(has_pos),
        out_shape=(jax.ShapeDtypeStruct((Rp, C), MATMUL_DTYPE),
                   jax.ShapeDtypeStruct((Rp, Dsa), jnp.float32)),
        grid_spec=pltpu.PrefetchScalarGridSpec(
            num_scalar_prefetch=0, grid=(Rp // tm,),
            in_specs=in_specs,
            out_specs=(pl.BlockSpec((tm, C), _ROW_MAP),
                       pl.BlockSpec((tm, Dsa), _ROW_MAP))),
        compiler_params=pltpu.CompilerParams(
            dimension_semantics=("parallel",),
            vmem_limit_bytes=_VMEM_LIMIT_BYTES),
    )(*in_arrays)
    return val[:R], sa[:R]


def pallas_layer_tail(attn2, src2, p, next_p=None, pos2=None):
    """x2 = LN2(x1 + FFN(x1)) with x1 = LN1(src + attn @ out_w + out_b).
    If next_p is given, also returns the next layer's value / offset-logit projections
    of x2 (value from x2, offsets/logits from x2 + pos)."""
    R, C = src2.shape
    Dff = p['ffn_w1'].shape[1]
    with_next = next_p is not None
    has_pos = with_next and (pos2 is not None)
    tm, Rp = _row_tiling(R)

    in_arrays = [_pad_rows(attn2, Rp), _pad_rows(src2, Rp)]
    in_specs = [pl.BlockSpec((tm, C), _ROW_MAP), pl.BlockSpec((tm, C), _ROW_MAP)]
    if has_pos:
        in_arrays.append(_pad_rows(pos2, Rp))
        in_specs.append(pl.BlockSpec((tm, C), _ROW_MAP))

    wlist = [
        (p['out_w'], (C, C)), (p['out_b'].reshape(1, C), (1, C)),
        (p['ln1_g'].reshape(1, C), (1, C)), (p['ln1_b'].reshape(1, C), (1, C)),
        (p['ffn_w1'], (C, Dff)), (p['ffn_b1'].reshape(1, Dff), (1, Dff)),
        (p['ffn_w2'], (Dff, C)), (p['ffn_b2'].reshape(1, C), (1, C)),
        (p['ln2_g'].reshape(1, C), (1, C)), (p['ln2_b'].reshape(1, C), (1, C)),
    ]
    if with_next:
        Dsa = next_p['wsa'].shape[1]
        wlist += [(next_p['wv'], (C, C)), (next_p['wsa'], (C, Dsa)),
                  (next_p['bv'].reshape(1, C), (1, C)),
                  (next_p['bsa'].reshape(1, Dsa), (1, Dsa))]
    for arr, shp in wlist:
        in_arrays.append(arr)
        in_specs.append(pl.BlockSpec(shp, _CONST_MAP))

    out_shapes = [jax.ShapeDtypeStruct((Rp, C), jnp.float32)]
    out_specs = [pl.BlockSpec((tm, C), _ROW_MAP)]
    if with_next:
        out_shapes += [jax.ShapeDtypeStruct((Rp, C), MATMUL_DTYPE),
                       jax.ShapeDtypeStruct((Rp, Dsa), jnp.float32)]
        out_specs += [pl.BlockSpec((tm, C), _ROW_MAP),
                      pl.BlockSpec((tm, Dsa), _ROW_MAP)]

    outs = pl.pallas_call(
        _make_tail_kernel(has_pos, with_next),
        out_shape=tuple(out_shapes),
        grid_spec=pltpu.PrefetchScalarGridSpec(
            num_scalar_prefetch=0, grid=(Rp // tm,),
            in_specs=in_specs, out_specs=tuple(out_specs)),
        compiler_params=pltpu.CompilerParams(
            dimension_semantics=("parallel",),
            vmem_limit_bytes=_VMEM_LIMIT_BYTES),
    )(*in_arrays)

    if with_next:
        x, val, sa = outs
        return x[:R], val[:R], sa[:R]
    return outs[0][:R]


# ------------------------ MS-Deformable attention -------------------------

def ms_deform_attn_core(value, spatial_shapes, sampling_locations, attention_weights):
    """value: (N, Lin, M, D) bf16, sampling_locations: (N, Lq, M, L, P, 2) normalized,
    attention_weights: (N, Lq, M, L, P) f32 -> (N, Lq, M*D) bf16.
    Equivalent to ms_deform_attn_core_pytorch (grid_sample bilinear, zeros padding,
    align_corners=False).  Attention weights and the padding mask are folded into the
    four bilinear corner weights; the reduction over points is a VPU weighted sum."""
    N, Lin, M, D = value.shape
    _, Lq, _, L, P, _ = sampling_locations.shape
    aw = jnp.transpose(attention_weights, (0, 2, 1, 3, 4)).reshape(N * M, Lq, L, P)
    acc = jnp.zeros((N * M, Lq, D), jnp.float32)
    bidx = jnp.arange(N * M)[:, None, None]
    start = 0
    for lid, (H, W) in enumerate(spatial_shapes):
        v = value[:, start:start + H * W]                            # (N, HW, M, D) bf16
        start += H * W
        v = jnp.transpose(v, (0, 2, 1, 3)).reshape(N * M, H * W, D)  # (NM, HW, D)
        loc = sampling_locations[:, :, :, lid]                       # (N, Lq, M, P, 2)
        loc = jnp.transpose(loc, (0, 2, 1, 3, 4)).reshape(N * M, Lq, P, 2)
        x = loc[..., 0] * W - 0.5
        y = loc[..., 1] * H - 0.5
        x0 = jnp.floor(x); y0 = jnp.floor(y)
        x1 = x0 + 1.0; y1 = y0 + 1.0
        wx1 = x - x0; wx0 = 1.0 - wx1
        wy1 = y - y0; wy0 = 1.0 - wy1
        aw_l = aw[:, :, lid]                                          # (NM, Lq, P)

        # TODO(synk): data-dependent bilinear gather (torch grid_sample) has no clean
        # rectangular-tile Pallas equivalent; done in plain JAX/XLA.
        def corner(xi, yi, w):
            inb = (xi >= 0) & (xi < W) & (yi >= 0) & (yi < H)
            xi_c = jnp.clip(xi, 0, W - 1).astype(jnp.int32)
            yi_c = jnp.clip(yi, 0, H - 1).astype(jnp.int32)
            g = v[bidx, yi_c * W + xi_c]                              # (NM, Lq, P, D) bf16
            return jnp.sum(g * (w * inb)[..., None], axis=2)          # (NM, Lq, D) f32

        acc = (acc
               + corner(x0, y0, wy0 * wx0 * aw_l) + corner(x1, y0, wy0 * wx1 * aw_l)
               + corner(x0, y1, wy1 * wx0 * aw_l) + corner(x1, y1, wy1 * wx1 * aw_l))
    out = acc.reshape(N, M, Lq, D).transpose(0, 2, 1, 3).reshape(N, Lq, M * D)
    return out.astype(MATMUL_DTYPE)   # consumed by a bf16 MXU dot in the tail kernel


def ms_deform_attend(val2, sa2, N, Lq, reference_points, spatial_shapes, n_heads, n_points):
    """Turn the projection slabs into the MS-deform-attn aggregate (before out-proj)."""
    C = val2.shape[1]
    L = len(spatial_shapes)
    M, P = n_heads, n_points
    D = C // M
    value = val2.reshape(N, Lq, M, D)                                 # bf16
    sa = sa2.reshape(N, Lq, -1)
    n_off = M * L * P * 2
    offs = sa[..., :n_off].reshape(N, Lq, M, L, P, 2)
    # per-head softmax over L*P (tiny segmented reduction, left to XLA)
    aw = jax.nn.softmax(sa[..., n_off:].reshape(N, Lq, M, L * P), axis=-1)
    aw = aw.reshape(N, Lq, M, L, P)

    shapes_arr = jnp.asarray(spatial_shapes, dtype=jnp.float32)       # (L, 2) = (H, W)
    offset_normalizer = jnp.stack([shapes_arr[:, 1], shapes_arr[:, 0]], -1)  # (W, H)
    sampling_locations = (reference_points[:, :, None, :, None, :]
                          + offs / offset_normalizer[None, None, None, :, None, :])
    # padding_mask is None in this configuration -> masked_fill branch skipped.
    return ms_deform_attn_core(value, spatial_shapes, sampling_locations, aw)


# --------------------------- Encoder layer / stack ---------------------------

def compute_reference_points(spatial_dim, valid_ratios):
    """Mirrors DeformableTransformerEncoder.reference_points (torch meshgrid 'ij')."""
    ref_list = []
    for lvl, (H, W) in enumerate(spatial_dim):
        ref_y, ref_x = jnp.meshgrid(jnp.linspace(0.5, H - 0.5, H, dtype=jnp.float32),
                                    jnp.linspace(0.5, W - 0.5, W, dtype=jnp.float32),
                                    indexing='ij')
        ref_y = ref_y.reshape(-1)[None] / (valid_ratios[:, None, lvl, 1] * H)
        ref_x = ref_x.reshape(-1)[None] / (valid_ratios[:, None, lvl, 0] * W)
        ref_list.append(jnp.stack((ref_x, ref_y), -1))                # (N, HW, 2)
    ref_points = jnp.concatenate(ref_list, axis=1)                    # (N, Len, 2)
    ref_points = ref_points[:, :, None] * valid_ratios[:, None]       # (N, Len, L, 2)
    return ref_points


def deformable_transformer_encoder(params, X, spatial_dim, level_start_index, valid_ratios,
                                   pos=None, padding_mask=None, n_heads=4, n_points=4):
    del padding_mask, level_start_index   # mask is None; starts recomputed from spatial_dim
    N, Lq, C = X.shape
    layers = params['layers']
    reference_points = compute_reference_points(spatial_dim, valid_ratios)
    src2 = X.reshape(N * Lq, C)
    pos2 = None if pos is None else pos.reshape(N * Lq, C)

    # Layer 0 input projections (value + sampling-offsets/attention-logits).
    val2, sa2 = pallas_fused_projections(src2, pos2, layers[0])

    for i, layer_p in enumerate(layers):
        attn2 = ms_deform_attend(val2, sa2, N, Lq, reference_points, spatial_dim,
                                 n_heads, n_points).reshape(N * Lq, C)
        next_p = layers[i + 1] if i + 1 < len(layers) else None
        if next_p is not None:
            # fused: this layer's tail + next layer's input projections
            src2, val2, sa2 = pallas_layer_tail(attn2, src2, layer_p,
                                                next_p=next_p, pos2=pos2)
        else:
            src2 = pallas_layer_tail(attn2, src2, layer_p)
    return src2.reshape(N, Lq, C)


# ------------------------------- parameters -------------------------------

def init_params(key, d_model, d_ffn, n_heads, n_levels, n_points, num_layers):
    def dense(k, din, dout, scale=0.05):
        kw, kb = jax.random.split(k)
        return (scale * jax.random.normal(kw, (din, dout), jnp.float32),
                scale * jax.random.normal(kb, (dout,), jnp.float32))

    keys = jax.random.split(key, 6)
    vp_w, vp_b = dense(keys[0], d_model, d_model)
    samp_w, samp_b = dense(keys[1], d_model, n_heads * n_levels * n_points * 2, scale=0.1)
    attnw_w, attnw_b = dense(keys[2], d_model, n_heads * n_levels * n_points)
    out_w, out_b = dense(keys[3], d_model, d_model)
    w1, b1 = dense(keys[4], d_model, d_ffn)
    w2, b2 = dense(keys[5], d_ffn, d_model)

    wdt = MATMUL_DTYPE
    layer = {
        'wv': vp_w.astype(wdt), 'bv': vp_b,
        'wsa': jnp.concatenate([samp_w, attnw_w], axis=1).astype(wdt),   # [offsets | logits]
        'bsa': jnp.concatenate([samp_b, attnw_b], axis=0),
        'out_w': out_w.astype(wdt), 'out_b': out_b,
        'ln1_g': jnp.ones((d_model,), jnp.float32), 'ln1_b': jnp.zeros((d_model,), jnp.float32),
        'ffn_w1': w1.astype(wdt), 'ffn_b1': b1,
        'ffn_w2': w2.astype(wdt), 'ffn_b2': b2,
        'ln2_g': jnp.ones((d_model,), jnp.float32), 'ln2_b': jnp.zeros((d_model,), jnp.float32),
    }
    # create_layers uses copy.deepcopy -> every layer starts with identical parameter values.
    return {'layers': [layer for _ in range(num_layers)]}


# ----------------------------------- main -----------------------------------

if __name__ == "__main__":
    N = 2
    d_model = 128        # lane-dense channel dim (multiple of 128), small but representative
    d_ffn = 256
    n_heads = 4
    n_points = 4
    num_layers = 2
    spatial_dim = ((8, 8), (4, 4))
    n_levels = len(spatial_dim)
    Len = sum(H * W for H, W in spatial_dim)                           # 80
    starts = [0]
    for (H, W) in spatial_dim[:-1]:
        starts.append(starts[-1] + H * W)
    level_start_index = jnp.asarray(starts, dtype=jnp.int32)

    key = jax.random.PRNGKey(0)
    kx, kp, kv, kparam = jax.random.split(key, 4)
    X = jax.random.normal(kx, (N, Len, d_model), jnp.float32)
    pos = jax.random.normal(kp, (N, Len, d_model), jnp.float32)
    valid_ratios = 0.5 + 0.5 * jax.random.uniform(kv, (N, n_levels, 2), dtype=jnp.float32)

    params = init_params(kparam, d_model, d_ffn, n_heads, n_levels, n_points, num_layers)

    enc_fn = jax.jit(deformable_transformer_encoder, static_argnums=(2, 7, 8))
    out = enc_fn(params, X, spatial_dim, level_start_index, valid_ratios,
                 pos, None, n_heads, n_points)
    out = jax.block_until_ready(out)
    assert out.shape == (N, Len, d_model), out.shape
    assert bool(jnp.all(jnp.isfinite(out)))
    print("KERNEL_OK")
</pallas_src>

<mosaic_0001>
module attributes {stable_mosaic.version = 11 : i64} {
  func.func @kernel(%arg0: i32, %arg1: memref<160x128xf32, #tpu.memory_space<vmem>>, %arg2: memref<160x128xf32, #tpu.memory_space<vmem>>, %arg3: memref<128x128xbf16, #tpu.memory_space<vmem>>, %arg4: memref<128x96xbf16, #tpu.memory_space<vmem>>, %arg5: memref<1x128xf32, #tpu.memory_space<vmem>>, %arg6: memref<1x96xf32, #tpu.memory_space<vmem>>, %arg7: memref<160x128xbf16, #tpu.memory_space<vmem>>, %arg8: memref<160x96xf32, #tpu.memory_space<vmem>>) attributes {dimension_semantics = [#tpu.dimension_semantics<parallel>], iteration_bounds = array<i64: 1>, scalar_prefetch = 0 : i64, scratch_operands = 0 : i64, tpu.core_type = #tpu.core_type<tc>, window_params = [{transform_indices = @transform_0, window_bounds = array<i64: 160, 128>}, {transform_indices = @transform_1, window_bounds = array<i64: 160, 128>}, {pipeline_mode = #tpu.pipeline_mode<synchronous>, transform_indices = @transform_2, window_bounds = array<i64: 128, 128>}, {pipeline_mode = #tpu.pipeline_mode<synchronous>, transform_indices = @transform_3, window_bounds = array<i64: 128, 96>}, {pipeline_mode = #tpu.pipeline_mode<synchronous>, transform_indices = @transform_4, window_bounds = array<i64: 1, 128>}, {pipeline_mode = #tpu.pipeline_mode<synchronous>, transform_indices = @transform_5, window_bounds = array<i64: 1, 96>}, {transform_indices = @transform_6, window_bounds = array<i64: 160, 128>}, {transform_indices = @transform_7, window_bounds = array<i64: 160, 96>}]} {
    %c0 = arith.constant 0 : index
    %c0_0 = arith.constant 0 : index
    %0 = vector.load %arg1[%c0, %c0_0] : memref<160x128xf32, #tpu.memory_space<vmem>>, vector<160x128xf32>
    %c0_1 = arith.constant 0 : index
    %c0_2 = arith.constant 0 : index
    %1 = vector.load %arg2[%c0_1, %c0_2] : memref<160x128xf32, #tpu.memory_space<vmem>>, vector<160x128xf32>
    %2 = arith.addf %0, %1 : vector<160x128xf32>
    %3 = arith.truncf %0 : vector<160x128xf32> to vector<160x128xbf16>
    %c0_3 = arith.constant 0 : index
    %c0_4 = arith.constant 0 : index
    %4 = vector.load %arg3[%c0_3, %c0_4] : memref<128x128xbf16, #tpu.memory_space<vmem>>, vector<128x128xbf16>
    %cst = arith.constant dense<0.000000e+00> : vector<160x128xf32>
    %5 = tpu.matmul %3, %4, %cst {dimension_numbers = #tpu.dot_dimension_numbers<[1], [0], [0], [1], [0, 0, 1, 1], [], []>} : vector<160x128xbf16>, vector<128x128xbf16>, vector<160x128xf32> -> vector<160x128xf32>
    %c0_5 = arith.constant 0 : index
    %c0_6 = arith.constant 0 : index
    %6 = vector.load %arg5[%c0_5, %c0_6] : memref<1x128xf32, #tpu.memory_space<vmem>>, vector<1x128xf32>
    %7 = vector.broadcast %6 : vector<1x128xf32> to vector<160x128xf32>
    %8 = arith.addf %5, %7 : vector<160x128xf32>
    %9 = arith.truncf %2 : vector<160x128xf32> to vector<160x128xbf16>
    %c0_7 = arith.constant 0 : index
    %c0_8 = arith.constant 0 : index
    %10 = vector.load %arg4[%c0_7, %c0_8] : memref<128x96xbf16, #tpu.memory_space<vmem>>, vector<128x96xbf16>
    %cst_9 = arith.constant dense<0.000000e+00> : vector<160x96xf32>
    %11 = tpu.matmul %9, %10, %cst_9 {dimension_numbers = #tpu.dot_dimension_numbers<[1], [0], [0], [1], [0, 0, 1, 1], [], []>} : vector<160x128xbf16>, vector<128x96xbf16>, vector<160x96xf32> -> vector<160x96xf32>
    %c0_10 = arith.constant 0 : index
    %c0_11 = arith.constant 0 : index
    %12 = vector.load %arg6[%c0_10, %c0_11] : memref<1x96xf32, #tpu.memory_space<vmem>>, vector<1x96xf32>
    %13 = vector.broadcast %12 : vector<1x96xf32> to vector<160x96xf32>
    %14 = arith.addf %11, %13 : vector<160x96xf32>
    %15 = arith.truncf %8 : vector<160x128xf32> to vector<160x128xbf16>
    %c0_12 = arith.constant 0 : index
    %c0_13 = arith.constant 0 : index
    %16 = vector.load %arg7[%c0_12, %c0_13] : memref<160x128xbf16, #tpu.memory_space<vmem>>, vector<160x128xbf16>
    tpu.vector_store %arg7[%c0_12, %c0_13], %15 {strides = array<i32>} : memref<160x128xbf16, #tpu.memory_space<vmem>>, vector<160x128xbf16>,
    %c0_14 = arith.constant 0 : index
    %c0_15 = arith.constant 0 : index
    %17 = vector.load %arg8[%c0_14, %c0_15] : memref<160x96xf32, #tpu.memory_space<vmem>>, vector<160x96xf32>
    tpu.vector_store %arg8[%c0_14, %c0_15], %14 {strides = array<i32>} : memref<160x96xf32, #tpu.memory_space<vmem>>, vector<160x96xf32>,
    return
  }
  func.func @transform_0(%arg0: i32) -> (i32, i32) {
    %c0_i32 = arith.constant 0 : i32
    %c0_i32_0 = arith.constant 0 : i32
    return %arg0, %c0_i32 : i32, i32
  }
  func.func @transform_1(%arg0: i32) -> (i32, i32) {
    %c0_i32 = arith.constant 0 : i32
    %c0_i32_0 = arith.constant 0 : i32
    return %arg0, %c0_i32 : i32, i32
  }
  func.func @transform_2(%arg0: i32) -> (i32, i32) {
    %c0_i32 = arith.constant 0 : i32
    %c0_i32_0 = arith.constant 0 : i32
    %c0_i32_1 = arith.constant 0 : i32
    return %c0_i32, %c0_i32_0 : i32, i32
  }
  func.func @transform_3(%arg0: i32) -> (i32, i32) {
    %c0_i32 = arith.constant 0 : i32
    %c0_i32_0 = arith.constant 0 : i32
    %c0_i32_1 = arith.constant 0 : i32
    return %c0_i32, %c0_i32_0 : i32, i32
  }
  func.func @transform_4(%arg0: i32) -> (i32, i32) {
    %c0_i32 = arith.constant 0 : i32
    %c0_i32_0 = arith.constant 0 : i32
    %c0_i32_1 = arith.constant 0 : i32
    return %c0_i32, %c0_i32_0 : i32, i32
  }
  func.func @transform_5(%arg0: i32) -> (i32, i32) {
    %c0_i32 = arith.constant 0 : i32
    %c0_i32_0 = arith.constant 0 : i32
    %c0_i32_1 = arith.constant 0 : i32
    return %c0_i32, %c0_i32_0 : i32, i32
  }
  func.func @transform_6(%arg0: i32) -> (i32, i32) {
    %c0_i32 = arith.constant 0 : i32
    %c0_i32_0 = arith.constant 0 : i32
    return %arg0, %c0_i32 : i32, i32
  }
  func.func @transform_7(%arg0: i32) -> (i32, i32) {
    %c0_i32 = arith.constant 0 : i32
    %c0_i32_0 = arith.constant 0 : i32
    return %arg0, %c0_i32 : i32, i32
  }
}

module attributes {stable_mosaic.version = 11 : i64} {
  func.func @kernel(%arg0: i32, %arg1: memref<160x128xbf16, #tpu.memory_space<vmem>>, %arg2: memref<160x128xf32, #tpu.memory_space<vmem>>, %arg3: memref<160x128xf32, #tpu.memory_space<vmem>>, %arg4: memref<128x128xbf16, #tpu.memory_space<vmem>>, %arg5: memref<1x128xf32, #tpu.memory_space<vmem>>, %arg6: memref<1x128xf32, #tpu.memory_space<vmem>>, %arg7: memref<1x128xf32, #tpu.memory_space<vmem>>, %arg8: memref<128x256xbf16, #tpu.memory_space<vmem>>, %arg9: memref<1x256xf32, #tpu.memory_space<vmem>>, %arg10: memref<256x128xbf16, #tpu.memory_space<vmem>>, %arg11: memref<1x128xf32, #tpu.memory_space<vmem>>, %arg12: memref<1x128xf32, #tpu.memory_space<vmem>>, %arg13: memref<1x128xf32, #tpu.memory_space<vmem>>, %arg14: memref<128x128xbf16, #tpu.memory_space<vmem>>, %arg15: memref<128x96xbf16, #tpu.memory_space<vmem>>, %arg16: memref<1x128xf32, #tpu.memory_space<vmem>>, %arg17: memref<1x96xf32, #tpu.memory_space<vmem>>, %arg18: memref<160x128xf32, #tpu.memory_space<vmem>>, %arg19: memref<160x128xbf16, #tpu.memory_space<vmem>>, %arg20: memref<160x96xf32, #tpu.memory_space<vmem>>) attributes {dimension_semantics = [#tpu.dimension_semantics<parallel>], iteration_bounds = array<i64: 1>, scalar_prefetch = 0 : i64, scratch_operands = 0 : i64, tpu.core_type = #tpu.core_type<tc>, window_params = [{transform_indices = @transform_0, window_bounds = array<i64: 160, 128>}, {transform_indices = @transform_1, window_bounds = array<i64: 160, 128>}, {transform_indices = @transform_2, window_bounds = array<i64: 160, 128>}, {pipeline_mode = #tpu.pipeline_mode<synchronous>, transform_indices = @transform_3, window_bounds = array<i64: 128, 128>}, {pipeline_mode = #tpu.pipeline_mode<synchronous>, transform_indices = @transform_4, window_bounds = array<i64: 1, 128>}, {pipeline_mode = #tpu.pipeline_mode<synchronous>, transform_indices = @transform_5, window_bounds = array<i64: 1, 128>}, {pipeline_mode = #tpu.pipeline_mode<synchronous>, transform_indices = @transform_6, window_bounds = array<i64: 1, 128>}, {pipeline_mode = #tpu.pipeline_mode<synchronous>, transform_indices = @transform_7, window_bounds = array<i64: 128, 256>}, {pipeline_mode = #tpu.pipeline_mode<synchronous>, transform_indices = @transform_8, window_bounds = array<i64: 1, 256>}, {pipeline_mode = #tpu.pipeline_mode<synchronous>, transform_indices = @transform_9, window_bounds = array<i64: 256, 128>}, {pipeline_mode = #tpu.pipeline_mode<synchronous>, transform_indices = @transform_10, window_bounds = array<i64: 1, 128>}, {pipeline_mode = #tpu.pipeline_mode<synchronous>, transform_indices = @transform_11, window_bounds = array<i64: 1, 128>}, {pipeline_mode = #tpu.pipeline_mode<synchronous>, transform_indices = @transform_12, window_bounds = array<i64: 1, 128>}, {pipeline_mode = #tpu.pipeline_mode<synchronous>, transform_indices = @transform_13, window_bounds = array<i64: 128, 128>}, {pipeline_mode = #tpu.pipeline_mode<synchronous>, transform_indices = @transform_14, window_bounds = array<i64: 128, 96>}, {pipeline_mode = #tpu.pipeline_mode<synchronous>, transform_indices = @transform_15, window_bounds = array<i64: 1, 128>}, {pipeline_mode = #tpu.pipeline_mode<synchronous>, transform_indices = @transform_16, window_bounds = array<i64: 1, 96>}, {transform_indices = @transform_17, window_bounds = array<i64: 160, 128>}, {transform_indices = @transform_18, window_bounds = array<i64: 160, 128>}, {transform_indices = @transform_19, window_bounds = array<i64: 160, 96>}]} {
    %c0 = arith.constant 0 : index
    %c0_0 = arith.constant 0 : index
    %0 = vector.load %arg1[%c0, %c0_0] : memref<160x128xbf16, #tpu.memory_space<vmem>>, vector<160x128xbf16>
    %c0_1 = arith.constant 0 : index
    %c0_2 = arith.constant 0 : index
    %1 = vector.load %arg4[%c0_1, %c0_2] : memref<128x128xbf16, #tpu.memory_space<vmem>>, vector<128x128xbf16>
    %cst = arith.constant dense<0.000000e+00> : vector<160x128xf32>
    %2 = tpu.matmul %0, %1, %cst {dimension_numbers = #tpu.dot_dimension_numbers<[1], [0], [0], [1], [0, 0, 1, 1], [], []>} : vector<160x128xbf16>, vector<128x128xbf16>, vector<160x128xf32> -> vector<160x128xf32>
    %c0_3 = arith.constant 0 : index
    %c0_4 = arith.constant 0 : index
    %3 = vector.load %arg5[%c0_3, %c0_4] : memref<1x128xf32, #tpu.memory_space<vmem>>, vector<1x128xf32>
    %4 = vector.broadcast %3 : vector<1x128xf32> to vector<160x128xf32>
    %5 = arith.addf %2, %4 : vector<160x128xf32>
    %c0_5 = arith.constant 0 : index
    %c0_6 = arith.constant 0 : index
    %6 = vector.load %arg2[%c0_5, %c0_6] : memref<160x128xf32, #tpu.memory_space<vmem>>, vector<160x128xf32>
    %7 = arith.addf %6, %5 : vector<160x128xf32>
    %cst_7 = arith.constant dense<0.000000e+00> : vector<160xf32>
    %8 = vector.multi_reduction <add>, %7, %cst_7 [1] : vector<160x128xf32> to vector<160xf32>
    %9 = vector.shape_cast %8 : vector<160xf32> to vector<160x1xf32>
    %cst_8 = arith.constant 1.280000e+02 : f32
    %10 = vector.broadcast %cst_8 : f32 to vector<160x1xf32>
    %11 = arith.divf %9, %10 : vector<160x1xf32>
    %12 = vector.broadcast %11 : vector<160x1xf32> to vector<160x128xf32>
    %13 = arith.subf %7, %12 : vector<160x128xf32>
    %14 = arith.mulf %13, %13 : vector<160x128xf32>
    %cst_9 = arith.constant dense<0.000000e+00> : vector<160xf32>
    %15 = vector.multi_reduction <add>, %14, %cst_9 [1] : vector<160x128xf32> to vector<160xf32>
    %16 = vector.shape_cast %15 : vector<160xf32> to vector<160x1xf32>
    %cst_10 = arith.constant 1.280000e+02 : f32
    %17 = vector.broadcast %cst_10 : f32 to vector<160x1xf32>
    %18 = arith.divf %16, %17 : vector<160x1xf32>
    %19 = vector.broadcast %11 : vector<160x1xf32> to vector<160x128xf32>
    %20 = arith.subf %7, %19 : vector<160x128xf32>
    %cst_11 = arith.constant 9.99999974E-6 : f32
    %21 = vector.broadcast %cst_11 : f32 to vector<160x1xf32>
    %22 = arith.addf %18, %21 : vector<160x1xf32>
    %23 = math.rsqrt %22 : vector<160x1xf32>
    %24 = vector.broadcast %23 : vector<160x1xf32> to vector<160x128xf32>
    %25 = arith.mulf %20, %24 : vector<160x128xf32>
    %c0_12 = arith.constant 0 : index
    %c0_13 = arith.constant 0 : index
    %26 = vector.load %arg6[%c0_12, %c0_13] : memref<1x128xf32, #tpu.memory_space<vmem>>, vector<1x128xf32>
    %27 = vector.broadcast %26 : vector<1x128xf32> to vector<160x128xf32>
    %28 = arith.mulf %25, %27 : vector<160x128xf32>
    %c0_14 = arith.constant 0 : index
    %c0_15 = arith.constant 0 : index
    %29 = vector.load %arg7[%c0_14, %c0_15] : memref<1x128xf32, #tpu.memory_space<vmem>>, vector<1x128xf32>
    %30 = vector.broadcast %29 : vector<1x128xf32> to vector<160x128xf32>
    %31 = arith.addf %28, %30 : vector<160x128xf32>
    %32 = arith.truncf %31 : vector<160x128xf32> to vector<160x128xbf16>
    %c0_16 = arith.constant 0 : index
    %c0_17 = arith.constant 0 : index
    %33 = vector.load %arg8[%c0_16, %c0_17] : memref<128x256xbf16, #tpu.memory_space<vmem>>, vector<128x256xbf16>
    %cst_18 = arith.constant dense<0.000000e+00> : vector<160x256xf32>
    %34 = tpu.matmul %32, %33, %cst_18 {dimension_numbers = #tpu.dot_dimension_numbers<[1], [0], [0], [1], [0, 0, 1, 1], [], []>} : vector<160x128xbf16>, vector<128x256xbf16>, vector<160x256xf32> -> vector<160x256xf32>
    %c0_19 = arith.constant 0 : index
    %c0_20 = arith.constant 0 : index
    %35 = vector.load %arg9[%c0_19, %c0_20] : memref<1x256xf32, #tpu.memory_space<vmem>>, vector<1x256xf32>
    %36 = vector.broadcast %35 : vector<1x256xf32> to vector<160x256xf32>
    %37 = arith.addf %34, %36 : vector<160x256xf32>
    %cst_21 = arith.constant 0.000000e+00 : f32
    %38 = vector.broadcast %cst_21 : f32 to vector<160x256xf32>
    %39 = arith.maximumf %37, %38 : vector<160x256xf32>
    %40 = arith.truncf %39 : vector<160x256xf32> to vector<160x256xbf16>
    %c0_22 = arith.constant 0 : index
    %c0_23 = arith.constant 0 : index
    %41 = vector.load %arg10[%c0_22, %c0_23] : memref<256x128xbf16, #tpu.memory_space<vmem>>, vector<256x128xbf16>
    %cst_24 = arith.constant dense<0.000000e+00> : vector<160x128xf32>
    %42 = tpu.matmul %40, %41, %cst_24 {dimension_numbers = #tpu.dot_dimension_numbers<[1], [0], [0], [1], [0, 0, 1, 1], [], []>} : vector<160x256xbf16>, vector<256x128xbf16>, vector<160x128xf32> -> vector<160x128xf32>
    %c0_25 = arith.constant 0 : index
    %c0_26 = arith.constant 0 : index
    %43 = vector.load %arg11[%c0_25, %c0_26] : memref<1x128xf32, #tpu.memory_space<vmem>>, vector<1x128xf32>
    %44 = vector.broadcast %43 : vector<1x128xf32> to vector<160x128xf32>
    %45 = arith.addf %42, %44 : vector<160x128xf32>
    %46 = arith.addf %31, %45 : vector<160x128xf32>
    %cst_27 = arith.constant dense<0.000000e+00> : vector<160xf32>
    %47 = vector.multi_reduction <add>, %46, %cst_27 [1] : vector<160x128xf32> to vector<160xf32>
    %48 = vector.shape_cast %47 : vector<160xf32> to vector<160x1xf32>
    %cst_28 = arith.constant 1.280000e+02 : f32
    %49 = vector.broadcast %cst_28 : f32 to vector<160x1xf32>
    %50 = arith.divf %48, %49 : vector<160x1xf32>
    %51 = vector.broadcast %50 : vector<160x1xf32> to vector<160x128xf32>
    %52 = arith.subf %46, %51 : vector<160x128xf32>
    %53 = arith.mulf %52, %52 : vector<160x128xf32>
    %cst_29 = arith.constant dense<0.000000e+00> : vector<160xf32>
    %54 = vector.multi_reduction <add>, %53, %cst_29 [1] : vector<160x128xf32> to vector<160xf32>
    %55 = vector.shape_cast %54 : vector<160xf32> to vector<160x1xf32>
    %cst_30 = arith.constant 1.280000e+02 : f32
    %56 = vector.broadcast %cst_30 : f32 to vector<160x1xf32>
    %57 = arith.divf %55, %56 : vector<160x1xf32>
    %58 = vector.broadcast %50 : vector<160x1xf32> to vector<160x128xf32>
    %59 = arith.subf %46, %58 : vector<160x128xf32>
    %cst_31 = arith.constant 9.99999974E-6 : f32
    %60 = vector.broadcast %cst_31 : f32 to vector<160x1xf32>
    %61 = arith.addf %57, %60 : vector<160x1xf32>
    %62 = math.rsqrt %61 : vector<160x1xf32>
    %63 = vector.broadcast %62 : vector<160x1xf32> to vector<160x128xf32>
    %64 = arith.mulf %59, %63 : vector<160x128xf32>
    %c0_32 = arith.constant 0 : index
    %c0_33 = arith.constant 0 : index
    %65 = vector.load %arg12[%c0_32, %c0_33] : memref<1x128xf32, #tpu.memory_space<vmem>>, vector<1x128xf32>
    %66 = vector.broadcast %65 : vector<1x128xf32> to vector<160x128xf32>
    %67 = arith.mulf %64, %66 : vector<160x128xf32>
    %c0_34 = arith.constant 0 : index
    %c0_35 = arith.constant 0 : index
    %68 = vector.load %arg13[%c0_34, %c0_35] : memref<1x128xf32, #tpu.memory_space<vmem>>, vector<1x128xf32>
    %69 = vector.broadcast %68 : vector<1x128xf32> to vector<160x128xf32>
    %70 = arith.addf %67, %69 : vector<160x128xf32>
    %c0_36 = arith.constant 0 : index
    %c0_37 = arith.constant 0 : index
    %71 = vector.load %arg18[%c0_36, %c0_37] : memref<160x128xf32, #tpu.memory_space<vmem>>, vector<160x128xf32>
    tpu.vector_store %arg18[%c0_36, %c0_37], %70 {strides = array<i32>} : memref<160x128xf32, #tpu.memory_space<vmem>>, vector<160x128xf32>,
    %c0_38 = arith.constant 0 : index
    %c0_39 = arith.constant 0 : index
    %72 = vector.load %arg3[%c0_38, %c0_39] : memref<160x128xf32, #tpu.memory_space<vmem>>, vector<160x128xf32>
    %73 = arith.addf %70, %72 : vector<160x128xf32>
    %74 = arith.truncf %70 : vector<160x128xf32> to vector<160x128xbf16>
    %c0_40 = arith.constant 0 : index
    %c0_41 = arith.constant 0 : index
    %75 = vector.load %arg14[%c0_40, %c0_41] : memref<128x128xbf16, #tpu.memory_space<vmem>>, vector<128x128xbf16>
    %cst_42 = arith.constant dense<0.000000e+00> : vector<160x128xf32>
    %76 = tpu.matmul %74, %75, %cst_42 {dimension_numbers = #tpu.dot_dimension_numbers<[1], [0], [0], [1], [0, 0, 1, 1], [], []>} : vector<160x128xbf16>, vector<128x128xbf16>, vector<160x128xf32> -> vector<160x128xf32>
    %c0_43 = arith.constant 0 : index
    %c0_44 = arith.constant 0 : index
    %77 = vector.load %arg16[%c0_43, %c0_44] : memref<1x128xf32, #tpu.memory_space<vmem>>, vector<1x128xf32>
    %78 = vector.broadcast %77 : vector<1x128xf32> to vector<160x128xf32>
    %79 = arith.addf %76, %78 : vector<160x128xf32>
    %80 = arith.truncf %73 : vector<160x128xf32> to vector<160x128xbf16>
    %c0_45 = arith.constant 0 : index
    %c0_46 = arith.constant 0 : index
    %81 = vector.load %arg15[%c0_45, %c0_46] : memref<128x96xbf16, #tpu.memory_space<vmem>>, vector<128x96xbf16>
    %cst_47 = arith.constant dense<0.000000e+00> : vector<160x96xf32>
    %82 = tpu.matmul %80, %81, %cst_47 {dimension_numbers = #tpu.dot_dimension_numbers<[1], [0], [0], [1], [0, 0, 1, 1], [], []>} : vector<160x128xbf16>, vector<128x96xbf16>, vector<160x96xf32> -> vector<160x96xf32>
    %c0_48 = arith.constant 0 : index
    %c0_49 = arith.constant 0 : index
    %83 = vector.load %arg17[%c0_48, %c0_49] : memref<1x96xf32, #tpu.memory_space<vmem>>, vector<1x96xf32>
    %84 = vector.broadcast %83 : vector<1x96xf32> to vector<160x96xf32>
    %85 = arith.addf %82, %84 : vector<160x96xf32>
    %86 = arith.truncf %79 : vector<160x128xf32> to vector<160x128xbf16>
    %c0_50 = arith.constant 0 : index
    %c0_51 = arith.constant 0 : index
    %87 = vector.load %arg19[%c0_50, %c0_51] : memref<160x128xbf16, #tpu.memory_space<vmem>>, vector<160x128xbf16>
    tpu.vector_store %arg19[%c0_50, %c0_51], %86 {strides = array<i32>} : memref<160x128xbf16, #tpu.memory_space<vmem>>, vector<160x128xbf16>,
    %c0_52 = arith.constant 0 : index
    %c0_53 = arith.constant 0 : index
    %88 = vector.load %arg20[%c0_52, %c0_53] : memref<160x96xf32, #tpu.memory_space<vmem>>, vector<160x96xf32>
    tpu.vector_store %arg20[%c0_52, %c0_53], %85 {strides = array<i32>} : memref<160x96xf32, #tpu.memory_space<vmem>>, vector<160x96xf32>,
    return
  }
  func.func @transform_0(%arg0: i32) -> (i32, i32) {
    %c0_i32 = arith.constant 0 : i32
    %c0_i32_0 = arith.constant 0 : i32
    return %arg0, %c0_i32 : i32, i32
  }
  func.func @transform_1(%arg0: i32) -> (i32, i32) {
    %c0_i32 = arith.constant 0 : i32
    %c0_i32_0 = arith.constant 0 : i32
    return %arg0, %c0_i32 : i32, i32
  }
  func.func @transform_2(%arg0: i32) -> (i32, i32) {
    %c0_i32 = arith.constant 0 : i32
    %c0_i32_0 = arith.constant 0 : i32
    return %arg0, %c0_i32 : i32, i32
  }
  func.func @transform_3(%arg0: i32) -> (i32, i32) {
    %c0_i32 = arith.constant 0 : i32
    %c0_i32_0 = arith.constant 0 : i32
    %c0_i32_1 = arith.constant 0 : i32
    return %c0_i32, %c0_i32_0 : i32, i32
  }
  func.func @transform_4(%arg0: i32) -> (i32, i32) {
    %c0_i32 = arith.constant 0 : i32
    %c0_i32_0 = arith.constant 0 : i32
    %c0_i32_1 = arith.constant 0 : i32
    return %c0_i32, %c0_i32_0 : i32, i32
  }
  func.func @transform_5(%arg0: i32) -> (i32, i32) {
    %c0_i32 = arith.constant 0 : i32
    %c0_i32_0 = arith.constant 0 : i32
    %c0_i32_1 = arith.constant 0 : i32
    return %c0_i32, %c0_i32_0 : i32, i32
  }
  func.func @transform_6(%arg0: i32) -> (i32, i32) {
    %c0_i32 = arith.constant 0 : i32
    %c0_i32_0 = arith.constant 0 : i32
    %c0_i32_1 = arith.constant 0 : i32
    return %c0_i32, %c0_i32_0 : i32, i32
  }
  func.func @transform_7(%arg0: i32) -> (i32, i32) {
    %c0_i32 = arith.constant 0 : i32
    %c0_i32_0 = arith.constant 0 : i32
    %c0_i32_1 = arith.constant 0 : i32
    return %c0_i32, %c0_i32_0 : i32, i32
  }
  func.func @transform_8(%arg0: i32) -> (i32, i32) {
    %c0_i32 = arith.constant 0 : i32
    %c0_i32_0 = arith.constant 0 : i32
    %c0_i32_1 = arith.constant 0 : i32
    return %c0_i32, %c0_i32_0 : i32, i32
  }
  func.func @transform_9(%arg0: i32) -> (i32, i32) {
    %c0_i32 = arith.constant 0 : i32
    %c0_i32_0 = arith.constant 0 : i32
    %c0_i32_1 = arith.constant 0 : i32
    return %c0_i32, %c0_i32_0 : i32, i32
  }
  func.func @transform_10(%arg0: i32) -> (i32, i32) {
    %c0_i32 = arith.constant 0 : i32
    %c0_i32_0 = arith.constant 0 : i32
    %c0_i32_1 = arith.constant 0 : i32
    return %c0_i32, %c0_i32_0 : i32, i32
  }
  func.func @transform_11(%arg0: i32) -> (i32, i32) {
    %c0_i32 = arith.constant 0 : i32
    %c0_i32_0 = arith.constant 0 : i32
    %c0_i32_1 = arith.constant 0 : i32
    return %c0_i32, %c0_i32_0 : i32, i32
  }
  func.func @transform_12(%arg0: i32) -> (i32, i32) {
    %c0_i32 = arith.constant 0 : i32
    %c0_i32_0 = arith.constant 0 : i32
    %c0_i32_1 = arith.constant 0 : i32
    return %c0_i32, %c0_i32_0 : i32, i32
  }
  func.func @transform_13(%arg0: i32) -> (i32, i32) {
    %c0_i32 = arith.constant 0 : i32
    %c0_i32_0 = arith.constant 0 : i32
    %c0_i32_1 = arith.constant 0 : i32
    return %c0_i32, %c0_i32_0 : i32, i32
  }
  func.func @transform_14(%arg0: i32) -> (i32, i32) {
    %c0_i32 = arith.constant 0 : i32
    %c0_i32_0 = arith.constant 0 : i32
    %c0_i32_1 = arith.constant 0 : i32
    return %c0_i32, %c0_i32_0 : i32, i32
  }
  func.func @transform_15(%arg0: i32) -> (i32, i32) {
    %c0_i32 = arith.constant 0 : i32
    %c0_i32_0 = arith.constant 0 : i32
    %c0_i32_1 = arith.constant 0 : i32
    return %c0_i32, %c0_i32_0 : i32, i32
  }
  func.func @transform_16(%arg0: i32) -> (i32, i32) {
    %c0_i32 = arith.constant 0 : i32
    %c0_i32_0 = arith.constant 0 : i32
    %c0_i32_1 = arith.constant 0 : i32
    return %c0_i32, %c0_i32_0 : i32, i32
  }
  func.func @transform_17(%arg0: i32) -> (i32, i32) {
    %c0_i32 = arith.constant 0 : i32
    %c0_i32_0 = arith.constant 0 : i32
    return %arg0, %c0_i32 : i32, i32
  }
  func.func @transform_18(%arg0: i32) -> (i32, i32) {
    %c0_i32 = arith.constant 0 : i32
    %c0_i32_0 = arith.constant 0 : i32
    return %arg0, %c0_i32 : i32, i32
  }
  func.func @transform_19(%arg0: i32) -> (i32, i32) {
    %c0_i32 = arith.constant 0 : i32
    %c0_i32_0 = arith.constant 0 : i32
    return %arg0, %c0_i32 : i32, i32
  }
}

module attributes {stable_mosaic.version = 11 : i64} {
  func.func @kernel(%arg0: i32, %arg1: memref<160x128xbf16, #tpu.memory_space<vmem>>, %arg2: memref<160x128xf32, #tpu.memory_space<vmem>>, %arg3: memref<128x128xbf16, #tpu.memory_space<vmem>>, %arg4: memref<1x128xf32, #tpu.memory_space<vmem>>, %arg5: memref<1x128xf32, #tpu.memory_space<vmem>>, %arg6: memref<1x128xf32, #tpu.memory_space<vmem>>, %arg7: memref<128x256xbf16, #tpu.memory_space<vmem>>, %arg8: memref<1x256xf32, #tpu.memory_space<vmem>>, %arg9: memref<256x128xbf16, #tpu.memory_space<vmem>>, %arg10: memref<1x128xf32, #tpu.memory_space<vmem>>, %arg11: memref<1x128xf32, #tpu.memory_space<vmem>>, %arg12: memref<1x128xf32, #tpu.memory_space<vmem>>, %arg13: memref<160x128xf32, #tpu.memory_space<vmem>>) attributes {dimension_semantics = [#tpu.dimension_semantics<parallel>], iteration_bounds = array<i64: 1>, scalar_prefetch = 0 : i64, scratch_operands = 0 : i64, tpu.core_type = #tpu.core_type<tc>, window_params = [{transform_indices = @transform_0, window_bounds = array<i64: 160, 128>}, {transform_indices = @transform_1, window_bounds = array<i64: 160, 128>}, {pipeline_mode = #tpu.pipeline_mode<synchronous>, transform_indices = @transform_2, window_bounds = array<i64: 128, 128>}, {pipeline_mode = #tpu.pipeline_mode<synchronous>, transform_indices = @transform_3, window_bounds = array<i64: 1, 128>}, {pipeline_mode = #tpu.pipeline_mode<synchronous>, transform_indices = @transform_4, window_bounds = array<i64: 1, 128>}, {pipeline_mode = #tpu.pipeline_mode<synchronous>, transform_indices = @transform_5, window_bounds = array<i64: 1, 128>}, {pipeline_mode = #tpu.pipeline_mode<synchronous>, transform_indices = @transform_6, window_bounds = array<i64: 128, 256>}, {pipeline_mode = #tpu.pipeline_mode<synchronous>, transform_indices = @transform_7, window_bounds = array<i64: 1, 256>}, {pipeline_mode = #tpu.pipeline_mode<synchronous>, transform_indices = @transform_8, window_bounds = array<i64: 256, 128>}, {pipeline_mode = #tpu.pipeline_mode<synchronous>, transform_indices = @transform_9, window_bounds = array<i64: 1, 128>}, {pipeline_mode = #tpu.pipeline_mode<synchronous>, transform_indices = @transform_10, window_bounds = array<i64: 1, 128>}, {pipeline_mode = #tpu.pipeline_mode<synchronous>, transform_indices = @transform_11, window_bounds = array<i64: 1, 128>}, {transform_indices = @transform_12, window_bounds = array<i64: 160, 128>}]} {
    %c0 = arith.constant 0 : index
    %c0_0 = arith.constant 0 : index
    %0 = vector.load %arg1[%c0, %c0_0] : memref<160x128xbf16, #tpu.memory_space<vmem>>, vector<160x128xbf16>
    %c0_1 = arith.constant 0 : index
    %c0_2 = arith.constant 0 : index
    %1 = vector.load %arg3[%c0_1, %c0_2] : memref<128x128xbf16, #tpu.memory_space<vmem>>, vector<128x128xbf16>
    %cst = arith.constant dense<0.000000e+00> : vector<160x128xf32>
    %2 = tpu.matmul %0, %1, %cst {dimension_numbers = #tpu.dot_dimension_numbers<[1], [0], [0], [1], [0, 0, 1, 1], [], []>} : vector<160x128xbf16>, vector<128x128xbf16>, vector<160x128xf32> -> vector<160x128xf32>
    %c0_3 = arith.constant 0 : index
    %c0_4 = arith.constant 0 : index
    %3 = vector.load %arg4[%c0_3, %c0_4] : memref<1x128xf32, #tpu.memory_space<vmem>>, vector<1x128xf32>
    %4 = vector.broadcast %3 : vector<1x128xf32> to vector<160x128xf32>
    %5 = arith.addf %2, %4 : vector<160x128xf32>
    %c0_5 = arith.constant 0 : index
    %c0_6 = arith.constant 0 : index
    %6 = vector.load %arg2[%c0_5, %c0_6] : memref<160x128xf32, #tpu.memory_space<vmem>>, vector<160x128xf32>
    %7 = arith.addf %6, %5 : vector<160x128xf32>
    %cst_7 = arith.constant dense<0.000000e+00> : vector<160xf32>
    %8 = vector.multi_reduction <add>, %7, %cst_7 [1] : vector<160x128xf32> to vector<160xf32>
    %9 = vector.shape_cast %8 : vector<160xf32> to vector<160x1xf32>
    %cst_8 = arith.constant 1.280000e+02 : f32
    %10 = vector.broadcast %cst_8 : f32 to vector<160x1xf32>
    %11 = arith.divf %9, %10 : vector<160x1xf32>
    %12 = vector.broadcast %11 : vector<160x1xf32> to vector<160x128xf32>
    %13 = arith.subf %7, %12 : vector<160x128xf32>
    %14 = arith.mulf %13, %13 : vector<160x128xf32>
    %cst_9 = arith.constant dense<0.000000e+00> : vector<160xf32>
    %15 = vector.multi_reduction <add>, %14, %cst_9 [1] : vector<160x128xf32> to vector<160xf32>
    %16 = vector.shape_cast %15 : vector<160xf32> to vector<160x1xf32>
    %cst_10 = arith.constant 1.280000e+02 : f32
    %17 = vector.broadcast %cst_10 : f32 to vector<160x1xf32>
    %18 = arith.divf %16, %17 : vector<160x1xf32>
    %19 = vector.broadcast %11 : vector<160x1xf32> to vector<160x128xf32>
    %20 = arith.subf %7, %19 : vector<160x128xf32>
    %cst_11 = arith.constant 9.99999974E-6 : f32
    %21 = vector.broadcast %cst_11 : f32 to vector<160x1xf32>
    %22 = arith.addf %18, %21 : vector<160x1xf32>
    %23 = math.rsqrt %22 : vector<160x1xf32>
    %24 = vector.broadcast %23 : vector<160x1xf32> to vector<160x128xf32>
    %25 = arith.mulf %20, %24 : vector<160x128xf32>
    %c0_12 = arith.constant 0 : index
    %c0_13 = arith.constant 0 : index
    %26 = vector.load %arg5[%c0_12, %c0_13] : memref<1x128xf32, #tpu.memory_space<vmem>>, vector<1x128xf32>
    %27 = vector.broadcast %26 : vector<1x128xf32> to vector<160x128xf32>
    %28 = arith.mulf %25, %27 : vector<160x128xf32>
    %c0_14 = arith.constant 0 : index
    %c0_15 = arith.constant 0 : index
    %29 = vector.load %arg6[%c0_14, %c0_15] : memref<1x128xf32, #tpu.memory_space<vmem>>, vector<1x128xf32>
    %30 = vector.broadcast %29 : vector<1x128xf32> to vector<160x128xf32>
    %31 = arith.addf %28, %30 : vector<160x128xf32>
    %32 = arith.truncf %31 : vector<160x128xf32> to vector<160x128xbf16>
    %c0_16 = arith.constant 0 : index
    %c0_17 = arith.constant 0 : index
    %33 = vector.load %arg7[%c0_16, %c0_17] : memref<128x256xbf16, #tpu.memory_space<vmem>>, vector<128x256xbf16>
    %cst_18 = arith.constant dense<0.000000e+00> : vector<160x256xf32>
    %34 = tpu.matmul %32, %33, %cst_18 {dimension_numbers = #tpu.dot_dimension_numbers<[1], [0], [0], [1], [0, 0, 1, 1], [], []>} : vector<160x128xbf16>, vector<128x256xbf16>, vector<160x256xf32> -> vector<160x256xf32>
    %c0_19 = arith.constant 0 : index
    %c0_20 = arith.constant 0 : index
    %35 = vector.load %arg8[%c0_19, %c0_20] : memref<1x256xf32, #tpu.memory_space<vmem>>, vector<1x256xf32>
    %36 = vector.broadcast %35 : vector<1x256xf32> to vector<160x256xf32>
    %37 = arith.addf %34, %36 : vector<160x256xf32>
    %cst_21 = arith.constant 0.000000e+00 : f32
    %38 = vector.broadcast %cst_21 : f32 to vector<160x256xf32>
    %39 = arith.maximumf %37, %38 : vector<160x256xf32>
    %40 = arith.truncf %39 : vector<160x256xf32> to vector<160x256xbf16>
    %c0_22 = arith.constant 0 : index
    %c0_23 = arith.constant 0 : index
    %41 = vector.load %arg9[%c0_22, %c0_23] : memref<256x128xbf16, #tpu.memory_space<vmem>>, vector<256x128xbf16>
    %cst_24 = arith.constant dense<0.000000e+00> : vector<160x128xf32>
    %42 = tpu.matmul %40, %41, %cst_24 {dimension_numbers = #tpu.dot_dimension_numbers<[1], [0], [0], [1], [0, 0, 1, 1], [], []>} : vector<160x256xbf16>, vector<256x128xbf16>, vector<160x128xf32> -> vector<160x128xf32>
    %c0_25 = arith.constant 0 : index
    %c0_26 = arith.constant 0 : index
    %43 = vector.load %arg10[%c0_25, %c0_26] : memref<1x128xf32, #tpu.memory_space<vmem>>, vector<1x128xf32>
    %44 = vector.broadcast %43 : vector<1x128xf32> to vector<160x128xf32>
    %45 = arith.addf %42, %44 : vector<160x128xf32>
    %46 = arith.addf %31, %45 : vector<160x128xf32>
    %cst_27 = arith.constant dense<0.000000e+00> : vector<160xf32>
    %47 = vector.multi_reduction <add>, %46, %cst_27 [1] : vector<160x128xf32> to vector<160xf32>
    %48 = vector.shape_cast %47 : vector<160xf32> to vector<160x1xf32>
    %cst_28 = arith.constant 1.280000e+02 : f32
    %49 = vector.broadcast %cst_28 : f32 to vector<160x1xf32>
    %50 = arith.divf %48, %49 : vector<160x1xf32>
    %51 = vector.broadcast %50 : vector<160x1xf32> to vector<160x128xf32>
    %52 = arith.subf %46, %51 : vector<160x128xf32>
    %53 = arith.mulf %52, %52 : vector<160x128xf32>
    %cst_29 = arith.constant dense<0.000000e+00> : vector<160xf32>
    %54 = vector.multi_reduction <add>, %53, %cst_29 [1] : vector<160x128xf32> to vector<160xf32>
    %55 = vector.shape_cast %54 : vector<160xf32> to vector<160x1xf32>
    %cst_30 = arith.constant 1.280000e+02 : f32
    %56 = vector.broadcast %cst_30 : f32 to vector<160x1xf32>
    %57 = arith.divf %55, %56 : vector<160x1xf32>
    %58 = vector.broadcast %50 : vector<160x1xf32> to vector<160x128xf32>
    %59 = arith.subf %46, %58 : vector<160x128xf32>
    %cst_31 = arith.constant 9.99999974E-6 : f32
    %60 = vector.broadcast %cst_31 : f32 to vector<160x1xf32>
    %61 = arith.addf %57, %60 : vector<160x1xf32>
    %62 = math.rsqrt %61 : vector<160x1xf32>
    %63 = vector.broadcast %62 : vector<160x1xf32> to vector<160x128xf32>
    %64 = arith.mulf %59, %63 : vector<160x128xf32>
    %c0_32 = arith.constant 0 : index
    %c0_33 = arith.constant 0 : index
    %65 = vector.load %arg11[%c0_32, %c0_33] : memref<1x128xf32, #tpu.memory_space<vmem>>, vector<1x128xf32>
    %66 = vector.broadcast %65 : vector<1x128xf32> to vector<160x128xf32>
    %67 = arith.mulf %64, %66 : vector<160x128xf32>
    %c0_34 = arith.constant 0 : index
    %c0_35 = arith.constant 0 : index
    %68 = vector.load %arg12[%c0_34, %c0_35] : memref<1x128xf32, #tpu.memory_space<vmem>>, vector<1x128xf32>
    %69 = vector.broadcast %68 : vector<1x128xf32> to vector<160x128xf32>
    %70 = arith.addf %67, %69 : vector<160x128xf32>
    %c0_36 = arith.constant 0 : index
    %c0_37 = arith.constant 0 : index
    %71 = vector.load %arg13[%c0_36, %c0_37] : memref<160x128xf32, #tpu.memory_space<vmem>>, vector<160x128xf32>
    tpu.vector_store %arg13[%c0_36, %c0_37], %70 {strides = array<i32>} : memref<160x128xf32, #tpu.memory_space<vmem>>, vector<160x128xf32>,
    return
  }
  func.func @transform_0(%arg0: i32) -> (i32, i32) {
    %c0_i32 = arith.constant 0 : i32
    %c0_i32_0 = arith.constant 0 : i32
    return %arg0, %c0_i32 : i32, i32
  }
  func.func @transform_1(%arg0: i32) -> (i32, i32) {
    %c0_i32 = arith.constant 0 : i32
    %c0_i32_0 = arith.constant 0 : i32
    return %arg0, %c0_i32 : i32, i32
  }
  func.func @transform_2(%arg0: i32) -> (i32, i32) {
    %c0_i32 = arith.constant 0 : i32
    %c0_i32_0 = arith.constant 0 : i32
    %c0_i32_1 = arith.constant 0 : i32
    return %c0_i32, %c0_i32_0 : i32, i32
  }
  func.func @transform_3(%arg0: i32) -> (i32, i32) {
    %c0_i32 = arith.constant 0 : i32
    %c0_i32_0 = arith.constant 0 : i32
    %c0_i32_1 = arith.constant 0 : i32
    return %c0_i32, %c0_i32_0 : i32, i32
  }
  func.func @transform_4(%arg0: i32) -> (i32, i32) {
    %c0_i32 = arith.constant 0 : i32
    %c0_i32_0 = arith.constant 0 : i32
    %c0_i32_1 = arith.constant 0 : i32
    return %c0_i32, %c0_i32_0 : i32, i32
  }
  func.func @transform_5(%arg0: i32) -> (i32, i32) {
    %c0_i32 = arith.constant 0 : i32
    %c0_i32_0 = arith.constant 0 : i32
    %c0_i32_1 = arith.constant 0 : i32
    return %c0_i32, %c0_i32_0 : i32, i32
  }
  func.func @transform_6(%arg0: i32) -> (i32, i32) {
    %c0_i32 = arith.constant 0 : i32
    %c0_i32_0 = arith.constant 0 : i32
    %c0_i32_1 = arith.constant 0 : i32
    return %c0_i32, %c0_i32_0 : i32, i32
  }
  func.func @transform_7(%arg0: i32) -> (i32, i32) {
    %c0_i32 = arith.constant 0 : i32
    %c0_i32_0 = arith.constant 0 : i32
    %c0_i32_1 = arith.constant 0 : i32
    return %c0_i32, %c0_i32_0 : i32, i32
  }
  func.func @transform_8(%arg0: i32) -> (i32, i32) {
    %c0_i32 = arith.constant 0 : i32
    %c0_i32_0 = arith.constant 0 : i32
    %c0_i32_1 = arith.constant 0 : i32
    return %c0_i32, %c0_i32_0 : i32, i32
  }
  func.func @transform_9(%arg0: i32) -> (i32, i32) {
    %c0_i32 = arith.constant 0 : i32
    %c0_i32_0 = arith.constant 0 : i32
    %c0_i32_1 = arith.constant 0 : i32
    return %c0_i32, %c0_i32_0 : i32, i32
  }
  func.func @transform_10(%arg0: i32) -> (i32, i32) {
    %c0_i32 = arith.constant 0 : i32
    %c0_i32_0 = arith.constant 0 : i32
    %c0_i32_1 = arith.constant 0 : i32
    return %c0_i32, %c0_i32_0 : i32, i32
  }
  func.func @transform_11(%arg0: i32) -> (i32, i32) {
    %c0_i32 = arith.constant 0 : i32
    %c0_i32_0 = arith.constant 0 : i32
    %c0_i32_1 = arith.constant 0 : i32
    return %c0_i32, %c0_i32_0 : i32, i32
  }
  func.func @transform_12(%arg0: i32) -> (i32, i32) {
    %c0_i32 = arith.constant 0 : i32
    %c0_i32_0 = arith.constant 0 : i32
    return %arg0, %c0_i32 : i32, i32
  }
}

</mosaic_0001>

<llo_original>
// kernel: deformable_transformer_encoder.3
$region0: #{deformable_transformer_encoder.3}
  #allocation0 [shape = 'u32[]', space=smem, size = 0x4, offset = 0x4, fixed_abs, tag = 'smem constant byte address 0x4 - core index']
  #allocation1 [shape = 'u32[144,128]{1,0:T(1,128)}', space=vmem, size = 0x12000, scoped, tag = 'internal scratch']
  %s0 = inlined_call_operand.hbm [shape: f32[160,128], index: 0, kind: input, shape index: {}]
  %s1 = inlined_call_operand.hbm [shape: f32[160,128], index: 1, kind: input, shape index: {}]
  %s2 = inlined_call_operand.hbm [shape: bf16[128,128], index: 2, kind: input, shape index: {}]
  %s3 = inlined_call_operand.vmem [shape: bf16[128,96], index: 3, kind: input, shape index: {}]
  %s4 = inlined_call_operand.hbm [shape: f32[1,128], index: 4, kind: input, shape index: {}]
  %s5 = inlined_call_operand.hbm [shape: f32[1,96], index: 5, kind: input, shape index: {}]
  %s6 = inlined_call_operand.vmem [shape: bf16[160,128], index: 6, kind: output, shape index: {0}]
  %s7 = inlined_call_operand.vmem [shape: f32[160,96], index: 7, kind: output, shape index: {1}]
  %8 = xla_tuple %s6, %s7
  %s9 = sld [smem:[#allocation0]]
  $region62: #{deformable_transformer_encoder.3} parent=0
    _
  %s11 = ssub.s32 1, %s9
  %s12 = scalar_select 0, %s11, %s9
  $region1: #{deformable_transformer_encoder.3} parent=0
    #allocation2 [shape = 'u8[81920]{0}', space=vmem, size = 0x14000, scoped, tag = 'input window, operand 0, single buffered']
    #allocation3 [shape = 's32[1]{0}', space=sflag, size = 0x4, scoped, tag = 'scoped memory for deformable_transformer_encoder.3']
    #allocation4 [shape = 'u8[81920]{0}', space=vmem, size = 0x14000, scoped, tag = 'input window, operand 1, single buffered']
    #allocation5 [shape = 's32[1]{0}', space=sflag, size = 0x4, scoped, tag = 'scoped memory for deformable_transformer_encoder.3']
    #allocation6 [shape = 'u8[32768]{0}', space=vmem, size = 0x8000, scoped, tag = 'input window, operand 2, single buffered']
    #allocation7 [shape = 'u8[512]{0}', space=vmem, size = 0x400, scoped, tag = 'input window, operand 4, single buffered']
    #allocation8 [shape = 's32[1]{0}', space=sflag, size = 0x4, scoped, tag = 'scoped memory for deformable_transformer_encoder.3']
    #allocation9 [shape = 'u8[512]{0}', space=vmem, size = 0x400, scoped, tag = 'input window, operand 5, single buffered']
    %13 = vsyncpa [#allocation3], 0
    %14 = vsyncpa [#allocation5], 0
    %15 = vsyncpa [#allocation8], 0
    // Predicated region
    $region2: #{deformable_transformer_encoder.3} parent=1 // pred_check
      _
    $region3: #{deformable_transformer_encoder.3} parent=1 // pred_check_branch
      %17 = sbr.rel (0) target = $region5
    $region4: #{deformable_transformer_encoder.3} parent=1 // pred_region
      %s19 = ssub.s32 2560, 2560
      %20 = vsyncadd [#allocation3], %s19
      %s21 = sshll.u32 [#allocation2], 4
      %s22 = int_to_ptr.vmem [resolvable:$true] %s21
      %27 = dma.hbm_to_vmem [thread:$0]  %s0, 2560, %s22, [#allocation3], 128, 128, 8
    $region5: #{deformable_transformer_encoder.3} parent=1 // pred_fallthru
      _
    // Predicated region
    $region6: #{deformable_transformer_encoder.3} parent=1 // pred_check
      _
    $region7: #{deformable_transformer_encoder.3} parent=1 // pred_check_branch
      %29 = sbr.rel (0) target = $region9
    $region8: #{deformable_transformer_encoder.3} parent=1 // pred_region
      %s31 = ssub.s32 2560, 2560
      %32 = vsyncadd [#allocation5], %s31
      %s33 = sshll.u32 [#allocation4], 4
      %s34 = int_to_ptr.vmem [resolvable:$true] %s33
      %39 = dma.hbm_to_vmem [thread:$0]  %s1, 2560, %s34, [#allocation5], 128, 128, 8
    $region9: #{deformable_transformer_encoder.3} parent=1 // pred_fallthru
      _
    // Predicated region
    $region10: #{deformable_transformer_encoder.3} parent=1 // pred_check
      _
    $region11: #{deformable_transformer_encoder.3} parent=1 // pred_check_branch
      %41 = sbr.rel (0) target = $region13
    $region12: #{deformable_transformer_encoder.3} parent=1 // pred_region
      %s43 = ssub.s32 1024, 1024
      %44 = vsyncadd [#allocation5], %s43
      %s45 = sshll.u32 [#allocation6], 4
      %s46 = int_to_ptr.vmem [resolvable:$true] %s45
      %51 = dma.hbm_to_vmem [thread:$0]  %s2, 1024, %s46, [#allocation5], 64, 64, 4
    $region13: #{deformable_transformer_encoder.3} parent=1 // pred_fallthru
      _
    // Predicated region
    $region14: #{deformable_transformer_encoder.3} parent=1 // pred_check
      _
    $region15: #{deformable_transformer_encoder.3} parent=1 // pred_check_branch
      %53 = sbr.rel (0) target = $region17
    $region16: #{deformable_transformer_encoder.3} parent=1 // pred_region
      _
    $region17: #{deformable_transformer_encoder.3} parent=1 // pred_fallthru
      _
    // Predicated region
    $region18: #{deformable_transformer_encoder.3} parent=1 // pred_check
      _
    $region19: #{deformable_transformer_encoder.3} parent=1 // pred_check_branch
      %55 = sbr.rel (0) target = $region21
    $region20: #{deformable_transformer_encoder.3} parent=1 // pred_region
      %s57 = ssub.s32 16, 16
      %58 = vsyncadd [#allocation8], %s57
      %s60 = sshll.u32 [#allocation7], 4
      %s61 = int_to_ptr.vmem [resolvable:$true] %s60
      %63 = dma.hbm_to_vmem [thread:$0]  %s4, 16, %s61, [#allocation8]
    $region21: #{deformable_transformer_encoder.3} parent=1 // pred_fallthru
      _
    // Predicated region
    $region22: #{deformable_transformer_encoder.3} parent=1 // pred_check
      _
    $region23: #{deformable_transformer_encoder.3} parent=1 // pred_check_branch
      %65 = sbr.rel (0) target = $region25
    $region24: #{deformable_transformer_encoder.3} parent=1 // pred_region
      %s67 = ssub.s32 16, 16
      %68 = vsyncadd [#allocation8], %s67
      %s70 = sshll.u32 [#allocation9], 4
      %s71 = int_to_ptr.vmem [resolvable:$true] %s70
      %73 = dma.hbm_to_vmem [thread:$0]  %s5, 16, %s71, [#allocation8]
    $region25: #{deformable_transformer_encoder.3} parent=1 // pred_fallthru
      _
    // Predicated region
    $region26: #{deformable_transformer_encoder.3} parent=1 // pred_check
      _
    $region27: #{deformable_transformer_encoder.3} parent=1 // pred_check_branch
      %75 = sbr.rel (0) target = $region29
    $region28: #{deformable_transformer_encoder.3} parent=1 // pred_region
      %76 = dma.done [#allocation3], 2560
    $region29: #{deformable_transformer_encoder.3} parent=1 // pred_fallthru
      _
    // Predicated region
    $region30: #{deformable_transformer_encoder.3} parent=1 // pred_check
      _
    $region31: #{deformable_transformer_encoder.3} parent=1 // pred_check_branch
      %78 = sbr.rel (0) target = $region33
    $region32: #{deformable_transformer_encoder.3} parent=1 // pred_region
      %79 = dma.done [#allocation5], 2560
    $region33: #{deformable_transformer_encoder.3} parent=1 // pred_fallthru
      _
    // Predicated region
    $region34: #{deformable_transformer_encoder.3} parent=1 // pred_check
      _
    $region35: #{deformable_transformer_encoder.3} parent=1 // pred_check_branch
      %81 = sbr.rel (0) target = $region37
    $region36: #{deformable_transformer_encoder.3} parent=1 // pred_region
      %82 = dma.done [#allocation5], 1024
    $region37: #{deformable_transformer_encoder.3} parent=1 // pred_fallthru
      _
    // Predicated region
    $region38: #{deformable_transformer_encoder.3} parent=1 // pred_check
      _
    $region39: #{deformable_transformer_encoder.3} parent=1 // pred_check_branch
      %84 = sbr.rel (0) target = $region41
    $region40: #{deformable_transformer_encoder.3} parent=1 // pred_region
      %85 = dma.done [#allocation8], 16
    $region41: #{deformable_transformer_encoder.3} parent=1 // pred_fallthru
      _
    // Predicated region
    $region42: #{deformable_transformer_encoder.3} parent=1 // pred_check
      _
    $region43: #{deformable_transformer_encoder.3} parent=1 // pred_check_branch
      %87 = sbr.rel (0) target = $region45
    $region44: #{deformable_transformer_encoder.3} parent=1 // pred_region
      %88 = dma.done [#allocation8], 16
    $region45: #{deformable_transformer_encoder.3} parent=1 // pred_fallthru
      _
    %v90 = vld [vmem:[#allocation2] sm:$0xff]
    %v91 = vld [vmem:[#allocation2 + $0x8] sm:$0xff]
    %v92 = vld [vmem:[#allocation2 + $0x10] sm:$0xff]
    %v93 = vld [vmem:[#allocation2 + $0x18] sm:$0xff]
    %v94 = vld [vmem:[#allocation2 + $0x20] sm:$0xff]
    %v95 = vld [vmem:[#allocation2 + $0x28] sm:$0xff]
    %v96 = vld [vmem:[#allocation2 + $0x30] sm:$0xff]
    %v97 = vld [vmem:[#allocation2 + $0x38] sm:$0xff]
    %v98 = vld [vmem:[#allocation2 + $0x40] sm:$0xff]
    %v99 = vld [vmem:[#allocation2 + $0x48] sm:$0xff]
    %v100 = vld [vmem:[#allocation2 + $0x50] sm:$0xff]
    %v101 = vld [vmem:[#allocation2 + $0x58] sm:$0xff]
    %v102 = vld [vmem:[#allocation2 + $0x60] sm:$0xff]
    %v103 = vld [vmem:[#allocation2 + $0x68] sm:$0xff]
    %v104 = vld [vmem:[#allocation2 + $0x70] sm:$0xff]
    %v105 = vld [vmem:[#allocation2 + $0x78] sm:$0xff]
    %v106 = vld [vmem:[#allocation2 + $0x80] sm:$0xff]
    %v107 = vld [vmem:[#allocation2 + $0x88] sm:$0xff]
    %v108 = vld [vmem:[#allocation2 + $0x90] sm:$0xff]
    %v109 = vld [vmem:[#allocation2 + $0x98] sm:$0xff]
    %v110 = vld [vmem:[#allocation4] sm:$0xff]
    %v111 = vld [vmem:[#allocation4 + $0x8] sm:$0xff]
    %v112 = vld [vmem:[#allocation4 + $0x10] sm:$0xff]
    %v113 = vld [vmem:[#allocation4 + $0x18] sm:$0xff]
    %v114 = vld [vmem:[#allocation4 + $0x20] sm:$0xff]
    %v115 = vld [vmem:[#allocation4 + $0x28] sm:$0xff]
    %v116 = vld [vmem:[#allocation4 + $0x30] sm:$0xff]
    %v117 = vld [vmem:[#allocation4 + $0x38] sm:$0xff]
    %v118 = vld [vmem:[#allocation4 + $0x40] sm:$0xff]
    %v119 = vld [vmem:[#allocation4 + $0x48] sm:$0xff]
    %v120 = vld [vmem:[#allocation4 + $0x50] sm:$0xff]
    %v121 = vld [vmem:[#allocation4 + $0x58] sm:$0xff]
    %v122 = vld [vmem:[#allocation4 + $0x60] sm:$0xff]
    %v123 = vld [vmem:[#allocation4 + $0x68] sm:$0xff]
    %v124 = vld [vmem:[#allocation4 + $0x70] sm:$0xff]
    %v125 = vld [vmem:[#allocation4 + $0x78] sm:$0xff]
    %v126 = vld [vmem:[#allocation4 + $0x80] sm:$0xff]
    %v127 = vld [vmem:[#allocation4 + $0x88] sm:$0xff]
    %v128 = vld [vmem:[#allocation4 + $0x90] sm:$0xff]
    %v129 = vld [vmem:[#allocation4 + $0x98] sm:$0xff]
    %v130 = vadd.f32 %v90, %v110
    %v131 = vadd.f32 %v91, %v111
    %v132 = vadd.f32 %v92, %v112
    %v133 = vadd.f32 %v93, %v113
    %v134 = vadd.f32 %v94, %v114
    %v135 = vadd.f32 %v95, %v115
    %v136 = vadd.f32 %v96, %v116
    %v137 = vadd.f32 %v97, %v117
    %v138 = vadd.f32 %v98, %v118
    %v139 = vadd.f32 %v99, %v119
    %v140 = vadd.f32 %v100, %v120
    %v141 = vadd.f32 %v101, %v121
    %v142 = vadd.f32 %v102, %v122
    %v143 = vadd.f32 %v103, %v123
    %v144 = vadd.f32 %v104, %v124
    %v145 = vadd.f32 %v105, %v125
    %v146 = vadd.f32 %v106, %v126
    %v147 = vadd.f32 %v107, %v127
    %v148 = vadd.f32 %v108, %v128
    %v149 = vadd.f32 %v109, %v129
    %v150 = vpack.c.bf16 %v91, %v90
    %v151 = vpack.c.bf16 %v93, %v92
    %v152 = vpack.c.bf16 %v95, %v94
    %v153 = vpack.c.bf16 %v97, %v96
    %v154 = vpack.c.bf16 %v99, %v98
    %v155 = vpack.c.bf16 %v101, %v100
    %v156 = vpack.c.bf16 %v103, %v102
    %v157 = vpack.c.bf16 %v105, %v104
    %v158 = vpack.c.bf16 %v107, %v106
    %v159 = vpack.c.bf16 %v109, %v108
    %v160 = vld [vmem:[#allocation6] sm:$0xf]
    %v161 = vld [vmem:[#allocation6 + $0x4] sm:$0xf]
    %v162 = vld [vmem:[#allocation6 + $0x8] sm:$0xf]
    %v163 = vld [vmem:[#allocation6 + $0xc] sm:$0xf]
    %v164 = vld [vmem:[#allocation6 + $0x10] sm:$0xf]
    %v165 = vld [vmem:[#allocation6 + $0x14] sm:$0xf]
    %v166 = vld [vmem:[#allocation6 + $0x18] sm:$0xf]
    %v167 = vld [vmem:[#allocation6 + $0x1c] sm:$0xf]
    %v168 = vld [vmem:[#allocation6 + $0x20] sm:$0xf]
    %v169 = vld [vmem:[#allocation6 + $0x24] sm:$0xf]
    %v170 = vld [vmem:[#allocation6 + $0x28] sm:$0xf]
    %v171 = vld [vmem:[#allocation6 + $0x2c] sm:$0xf]
    %v172 = vld [vmem:[#allocation6 + $0x30] sm:$0xf]
    %v173 = vld [vmem:[#allocation6 + $0x34] sm:$0xf]
    %v174 = vld [vmem:[#allocation6 + $0x38] sm:$0xf]
    %v175 = vld [vmem:[#allocation6 + $0x3c] sm:$0xf]
    %v176 = vld [vmem:[#allocation7] sm:$0x1]
    %v178 = vlaneseq
    %v179 = vshrl.u32 %v178, 7
    %v180 = vsub.s32 0, %v179
    %v181 = vrot.slane %v176, %v180
    %v199 = vunpack.c.l.b16 %v160
    %v200 = vunpack.c.l.b16 %v161
    %v201 = vunpack.c.l.b16 %v162
    %v202 = vunpack.c.l.b16 %v163
    %v203 = vunpack.c.l.b16 %v164
    %v204 = vunpack.c.l.b16 %v165
    %v205 = vunpack.c.l.b16 %v166
    %v206 = vunpack.c.l.b16 %v167
    %v207 = vunpack.c.l.b16 %v168
    %v208 = vunpack.c.l.b16 %v169
    %v209 = vunpack.c.l.b16 %v170
    %v210 = vunpack.c.l.b16 %v171
    %v211 = vunpack.c.l.b16 %v172
    %v212 = vunpack.c.l.b16 %v173
    %v213 = vunpack.c.l.b16 %v174
    %v214 = vunpack.c.l.b16 %v175
    %v215 = vpack.c.b16 %v200, %v199
    %v216 = vpack.c.b16 %v202, %v201
    %v217 = vpack.c.b16 %v204, %v203
    %v218 = vpack.c.b16 %v206, %v205
    %v219 = vpack.c.b16 %v208, %v207
    %v220 = vpack.c.b16 %v210, %v209
    %v221 = vpack.c.b16 %v212, %v211
    %v222 = vpack.c.b16 %v214, %v213
    %231 = vmatprep.subr.bf16.mxu0 0
    %232 = vmatpush1.bf16.msra.mxu0 %v215
    %233 = vmatprep.subr.bf16.mxu0 0
    %234 = vmatpush1.bf16.msra.mxu0 %v216
    %235 = vmatprep.subr.bf16.mxu0 0
    %236 = vmatpush1.bf16.msra.mxu0 %v217
    %237 = vmatprep.subr.bf16.mxu0 0
    %238 = vmatpush1.bf16.msra.mxu0 %v218
    %239 = vmatprep.subr.bf16.mxu0 0
    %240 = vmatpush1.bf16.msra.mxu0 %v219
    %241 = vmatprep.subr.bf16.mxu0 0
    %242 = vmatpush1.bf16.msra.mxu0 %v220
    %243 = vmatprep.subr.bf16.mxu0 0
    %244 = vmatpush1.bf16.msra.mxu0 %v221
    %245 = vmatprep.subr.bf16.mxu0 0
    %246 = vmatpush1.bf16.msra.mxu0 %v222
    %247 = vmatprep.subr.bf16.mxu0 0
    %248 = vmatpush1.bf16.msra.mxu0 0
    %249 = vmatprep.subr.bf16.mxu0 0
    %250 = vmatpush1.bf16.msra.mxu0 0
    %251 = vmatprep.subr.bf16.mxu0 0
    %252 = vmatpush1.bf16.msra.mxu0 0
    %253 = vmatprep.subr.bf16.mxu0 0
    %254 = vmatpush1.bf16.msra.mxu0 0
    %255 = vmatprep.subr.bf16.mxu0 0
    %256 = vmatpush1.bf16.msra.mxu0 0
    %257 = vmatprep.subr.bf16.mxu0 0
    %258 = vmatpush1.bf16.msra.mxu0 0
    %259 = vmatprep.subr.bf16.mxu0 0
    %260 = vmatpush1.bf16.msra.mxu0 0
    %261 = vmatprep.subr.bf16.mxu0 0
    %262 = vmatpush1.bf16.msra.mxu0 0
    %263 = vmatprep.mubr.bf16.mxu0 0
    %264 = vmatmul.mubr.bf16.gmra.mrb[0].mxu0 %v150
    %v265 = vpop.f32.mrb[0].mxu0
    %v266 = vadd.f32 %v181, %v265
    %v267 = vpop.f32.mrb[0].mxu0
    %v268 = vpop.f32.mrb[0].mxu0
    %v269 = vadd.f32 %v181, %v268
    %v270 = vpop.f32.mrb[0].mxu0
    %271 = vmatprep.mubr.bf16.mxu0 0
    %272 = vmatmul.mubr.bf16.gmra.mrb[0].mxu0 %v151
    %v273 = vpop.f32.mrb[0].mxu0
    %v274 = vadd.f32 %v181, %v273
    %v275 = vpop.f32.mrb[0].mxu0
    %v276 = vpop.f32.mrb[0].mxu0
    %v277 = vadd.f32 %v181, %v276
    %v278 = vpop.f32.mrb[0].mxu0
    %279 = vmatprep.mubr.bf16.mxu0 0
    %280 = vmatmul.mubr.bf16.gmra.mrb[0].mxu0 %v152
    %v281 = vpop.f32.mrb[0].mxu0
    %v282 = vadd.f32 %v181, %v281
    %v283 = vpop.f32.mrb[0].mxu0
    %v284 = vpop.f32.mrb[0].mxu0
    %v285 = vadd.f32 %v181, %v284
    %v286 = vpop.f32.mrb[0].mxu0
    %287 = vmatprep.mubr.bf16.mxu0 0
    %288 = vmatmul.mubr.bf16.gmra.mrb[0].mxu0 %v153
    %v289 = vpop.f32.mrb[0].mxu0
    %v290 = vadd.f32 %v181, %v289
    %v291 = vpop.f32.mrb[0].mxu0
    %v292 = vpop.f32.mrb[0].mxu0
    %v293 = vadd.f32 %v181, %v292
    %v294 = vpop.f32.mrb[0].mxu0
    %295 = vmatprep.mubr.bf16.mxu0 0
    %296 = vmatmul.mubr.bf16.gmra.mrb[0].mxu0 %v154
    %v297 = vpop.f32.mrb[0].mxu0
    %v298 = vadd.f32 %v181, %v297
    %v299 = vpop.f32.mrb[0].mxu0
    %v300 = vpop.f32.mrb[0].mxu0
    %v301 = vadd.f32 %v181, %v300
    %v302 = vpop.f32.mrb[0].mxu0
    %303 = vmatprep.mubr.bf16.mxu0 0
    %304 = vmatmul.mubr.bf16.gmra.mrb[0].mxu0 %v155
    %v305 = vpop.f32.mrb[0].mxu0
    %v306 = vadd.f32 %v181, %v305
    %v307 = vpop.f32.mrb[0].mxu0
    %v308 = vpop.f32.mrb[0].mxu0
    %v309 = vadd.f32 %v181, %v308
    %v310 = vpop.f32.mrb[0].mxu0
    %311 = vmatprep.mubr.bf16.mxu0 0
    %312 = vmatmul.mubr.bf16.gmra.mrb[0].mxu0 %v156
    %v313 = vpop.f32.mrb[0].mxu0
    %v314 = vadd.f32 %v181, %v313
    %v315 = vpop.f32.mrb[0].mxu0
    %v316 = vpop.f32.mrb[0].mxu0
    %v317 = vadd.f32 %v181, %v316
    %v318 = vpop.f32.mrb[0].mxu0
    %319 = vmatprep.mubr.bf16.mxu0 0
    %320 = vmatmul.mubr.bf16.gmra.mrb[0].mxu0 %v157
    %v321 = vpop.f32.mrb[0].mxu0
    %v322 = vadd.f32 %v181, %v321
    %v323 = vpop.f32.mrb[0].mxu0
    %v324 = vpop.f32.mrb[0].mxu0
    %v325 = vadd.f32 %v181, %v324
    %v326 = vpop.f32.mrb[0].mxu0
    %327 = vmatprep.mubr.bf16.mxu0 0
    %328 = vmatmul.mubr.bf16.gmra.mrb[0].mxu0 %v158
    %v329 = vpop.f32.mrb[0].mxu0
    %v330 = vadd.f32 %v181, %v329
    %v331 = vpop.f32.mrb[0].mxu0
    %v332 = vpop.f32.mrb[0].mxu0
    %v333 = vadd.f32 %v181, %v332
    %v334 = vpop.f32.mrb[0].mxu0
    %335 = vmatprep.mubr.bf16.mxu0 0
    %336 = vmatmul.mubr.bf16.gmra.mrb[0].mxu0 %v159
    %v337 = vpop.f32.mrb[0].mxu0
    %v338 = vadd.f32 %v181, %v337
    %v339 = vpop.f32.mrb[0].mxu0
    %v340 = vpop.f32.mrb[0].mxu0
    %v341 = vadd.f32 %v181, %v340
    %v342 = vpop.f32.mrb[0].mxu0
    %343 = vdwg.mxu0
    %v344 = vpack.c.bf16 %v131, %v130
    %v345 = vpack.c.bf16 %v133, %v132
    %v346 = vpack.c.bf16 %v135, %v134
    %v347 = vpack.c.bf16 %v137, %v136
    %v348 = vpack.c.bf16 %v139, %v138
    %v349 = vpack.c.bf16 %v141, %v140
    %v350 = vpack.c.bf16 %v143, %v142
    %v351 = vpack.c.bf16 %v145, %v144
    %v352 = vpack.c.bf16 %v147, %v146
    %v353 = vpack.c.bf16 %v149, %v148
    %v354 = vld [vmem:[%s3] sm:$0xf]
    %v355 = vld [vmem:[%s3 + $0x4] sm:$0xf]
    %v356 = vld [vmem:[%s3 + $0x8] sm:$0xf]
    %v357 = vld [vmem:[%s3 + $0xc] sm:$0xf]
    %v358 = vld [vmem:[%s3 + $0x10] sm:$0xf]
    %v359 = vld [vmem:[%s3 + $0x14] sm:$0xf]
    %v360 = vld [vmem:[%s3 + $0x18] sm:$0xf]
    %v361 = vld [vmem:[%s3 + $0x1c] sm:$0xf]
    %v362 = vld [vmem:[%s3 + $0x20] sm:$0xf]
    %v363 = vld [vmem:[%s3 + $0x24] sm:$0xf]
    %v364 = vld [vmem:[%s3 + $0x28] sm:$0xf]
    %v365 = vld [vmem:[%s3 + $0x2c] sm:$0xf]
    %v366 = vld [vmem:[%s3 + $0x30] sm:$0xf]
    %v367 = vld [vmem:[%s3 + $0x34] sm:$0xf]
    %v368 = vld [vmem:[%s3 + $0x38] sm:$0xf]
    %v369 = vld [vmem:[%s3 + $0x3c] sm:$0xf]
    %v370 = vld [vmem:[#allocation9] sm:$0x1]
    %v372 = vlaneseq
    %v373 = vshrl.u32 %v372, 7
    %v374 = vsub.s32 0, %v373
    %v375 = vrot.slane %v370, %v374
    %v393 = vunpack.c.l.b16 %v354
    %v394 = vunpack.c.l.b16 %v355
    %v395 = vunpack.c.l.b16 %v356
    %v396 = vunpack.c.l.b16 %v357
    %v397 = vunpack.c.l.b16 %v358
    %v398 = vunpack.c.l.b16 %v359
    %v399 = vunpack.c.l.b16 %v360
    %v400 = vunpack.c.l.b16 %v361
    %v401 = vunpack.c.l.b16 %v362
    %v402 = vunpack.c.l.b16 %v363
    %v403 = vunpack.c.l.b16 %v364
    %v404 = vunpack.c.l.b16 %v365
    %v405 = vunpack.c.l.b16 %v366
    %v406 = vunpack.c.l.b16 %v367
    %v407 = vunpack.c.l.b16 %v368
    %v408 = vunpack.c.l.b16 %v369
    %v409 = vpack.c.b16 %v394, %v393
    %v410 = vpack.c.b16 %v396, %v395
    %v411 = vpack.c.b16 %v398, %v397
    %v412 = vpack.c.b16 %v400, %v399
    %v413 = vpack.c.b16 %v402, %v401
    %v414 = vpack.c.b16 %v404, %v403
    %v415 = vpack.c.b16 %v406, %v405
    %v416 = vpack.c.b16 %v408, %v407
    %425 = vmatprep.subr.bf16.mxu0 0
    %426 = vmatpush1.bf16.msra.mxu0 %v409
    %427 = vmatprep.subr.bf16.mxu0 0
    %428 = vmatpush1.bf16.msra.mxu0 %v410
    %429 = vmatprep.subr.bf16.mxu0 0
    %430 = vmatpush1.bf16.msra.mxu0 %v411
    %431 = vmatprep.subr.bf16.mxu0 0
    %432 = vmatpush1.bf16.msra.mxu0 %v412
    %433 = vmatprep.subr.bf16.mxu0 0
    %434 = vmatpush1.bf16.msra.mxu0 %v413
    %435 = vmatprep.subr.bf16.mxu0 0
    %436 = vmatpush1.bf16.msra.mxu0 %v414
    %437 = vmatprep.subr.bf16.mxu0 0
    %438 = vmatpush1.bf16.msra.mxu0 %v415
    %439 = vmatprep.subr.bf16.mxu0 0
    %440 = vmatpush1.bf16.msra.mxu0 %v416
    %441 = vmatprep.subr.bf16.mxu0 0
    %442 = vmatpush1.bf16.msra.mxu0 0
    %443 = vmatprep.subr.bf16.mxu0 0
    %444 = vmatpush1.bf16.msra.mxu0 0
    %445 = vmatprep.subr.bf16.mxu0 0
    %446 = vmatpush1.bf16.msra.mxu0 0
    %447 = vmatprep.subr.bf16.mxu0 0
    %448 = vmatpush1.bf16.msra.mxu0 0
    %449 = vmatprep.subr.bf16.mxu0 0
    %450 = vmatpush1.bf16.msra.mxu0 0
    %451 = vmatprep.subr.bf16.mxu0 0
    %452 = vmatpush1.bf16.msra.mxu0 0
    %453 = vmatprep.subr.bf16.mxu0 0
    %454 = vmatpush1.bf16.msra.mxu0 0
    %455 = vmatprep.subr.bf16.mxu0 0
    %456 = vmatpush1.bf16.msra.mxu0 0
    %457 = vmatprep.mubr.bf16.mxu0 0
    %458 = vmatmul.mubr.bf16.gmra.mrb[0].mxu0 %v344
    %v459 = vpop.f32.mrb[0].mxu0
    %v460 = vadd.f32 %v375, %v459
    %v461 = vpop.f32.mrb[0].mxu0
    %v462 = vpop.f32.mrb[0].mxu0
    %v463 = vadd.f32 %v375, %v462
    %v464 = vpop.f32.mrb[0].mxu0
    %465 = vmatprep.mubr.bf16.mxu0 0
    %466 = vmatmul.mubr.bf16.gmra.mrb[0].mxu0 %v345
    %v467 = vpop.f32.mrb[0].mxu0
    %v468 = vadd.f32 %v375, %v467
    %v469 = vpop.f32.mrb[0].mxu0
    %v470 = vpop.f32.mrb[0].mxu0
    %v471 = vadd.f32 %v375, %v470
    %v472 = vpop.f32.mrb[0].mxu0
    %473 = vmatprep.mubr.bf16.mxu0 0
    %474 = vmatmul.mubr.bf16.gmra.mrb[0].mxu0 %v346
    %v475 = vpop.f32.mrb[0].mxu0
    %v476 = vadd.f32 %v375, %v475
    %v477 = vpop.f32.mrb[0].mxu0
    %v478 = vpop.f32.mrb[0].mxu0
    %v479 = vadd.f32 %v375, %v478
    %v480 = vpop.f32.mrb[0].mxu0
    %481 = vmatprep.mubr.bf16.mxu0 0
    %482 = vmatmul.mubr.bf16.gmra.mrb[0].mxu0 %v347
    %v483 = vpop.f32.mrb[0].mxu0
    %v484 = vadd.f32 %v375, %v483
    %v485 = vpop.f32.mrb[0].mxu0
    %v486 = vpop.f32.mrb[0].mxu0
    %v487 = vadd.f32 %v375, %v486
    %v488 = vpop.f32.mrb[0].mxu0
    %489 = vmatprep.mubr.bf16.mxu0 0
    %490 = vmatmul.mubr.bf16.gmra.mrb[0].mxu0 %v348
    %v491 = vpop.f32.mrb[0].mxu0
    %v492 = vadd.f32 %v375, %v491
    %v493 = vpop.f32.mrb[0].mxu0
    %v494 = vpop.f32.mrb[0].mxu0
    %v495 = vadd.f32 %v375, %v494
    %v496 = vpop.f32.mrb[0].mxu0
    %497 = vmatprep.mubr.bf16.mxu0 0
    %498 = vmatmul.mubr.bf16.gmra.mrb[0].mxu0 %v349
    %v499 = vpop.f32.mrb[0].mxu0
    %v500 = vadd.f32 %v375, %v499
    %v501 = vpop.f32.mrb[0].mxu0
    %v502 = vpop.f32.mrb[0].mxu0
    %v503 = vadd.f32 %v375, %v502
    %v504 = vpop.f32.mrb[0].mxu0
    %505 = vmatprep.mubr.bf16.mxu0 0
    %506 = vmatmul.mubr.bf16.gmra.mrb[0].mxu0 %v350
    %v507 = vpop.f32.mrb[0].mxu0
    %v508 = vadd.f32 %v375, %v507
    %v509 = vpop.f32.mrb[0].mxu0
    %v510 = vpop.f32.mrb[0].mxu0
    %v511 = vadd.f32 %v375, %v510
    %v512 = vpop.f32.mrb[0].mxu0
    %513 = vmatprep.mubr.bf16.mxu0 0
    %514 = vmatmul.mubr.bf16.gmra.mrb[0].mxu0 %v351
    %v515 = vpop.f32.mrb[0].mxu0
    %v516 = vadd.f32 %v375, %v515
    %v517 = vpop.f32.mrb[0].mxu0
    %v518 = vpop.f32.mrb[0].mxu0
    %v519 = vadd.f32 %v375, %v518
    %v520 = vpop.f32.mrb[0].mxu0
    %521 = vmatprep.mubr.bf16.mxu0 0
    %522 = vmatmul.mubr.bf16.gmra.mrb[0].mxu0 %v352
    %v523 = vpop.f32.mrb[0].mxu0
    %v524 = vadd.f32 %v375, %v523
    %v525 = vpop.f32.mrb[0].mxu0
    %v526 = vpop.f32.mrb[0].mxu0
    %v527 = vadd.f32 %v375, %v526
    %v528 = vpop.f32.mrb[0].mxu0
    %529 = vmatprep.mubr.bf16.mxu0 0
    %530 = vmatmul.mubr.bf16.gmra.mrb[0].mxu0 %v353
    %v531 = vpop.f32.mrb[0].mxu0
    %v532 = vadd.f32 %v375, %v531
    %v533 = vpop.f32.mrb[0].mxu0
    %v534 = vpop.f32.mrb[0].mxu0
    %v535 = vadd.f32 %v375, %v534
    %v536 = vpop.f32.mrb[0].mxu0
    %537 = vdwg.mxu0
    %v538 = vpack.c.bf16 %v269, %v266
    %v539 = vpack.c.bf16 %v277, %v274
    %v540 = vpack.c.bf16 %v285, %v282
    %v541 = vpack.c.bf16 %v293, %v290
    %v542 = vpack.c.bf16 %v301, %v298
    %v543 = vpack.c.bf16 %v309, %v306
    %v544 = vpack.c.bf16 %v317, %v314
    %v545 = vpack.c.bf16 %v325, %v322
    %v546 = vpack.c.bf16 %v333, %v330
    %v547 = vpack.c.bf16 %v341, %v338
    %v558 = vunpack.c.l.b16 %v538
    %v559 = vunpack.c.h.b16 %v538
    %v560 = vunpack.c.l.b16 %v539
    %v561 = vunpack.c.h.b16 %v539
    %v562 = vunpack.c.l.b16 %v540
    %v563 = vunpack.c.h.b16 %v540
    %v564 = vunpack.c.l.b16 %v541
    %v565 = vunpack.c.h.b16 %v541
    %v566 = vunpack.c.l.b16 %v542
    %v567 = vunpack.c.h.b16 %v542
    %v568 = vunpack.c.l.b16 %v543
    %v569 = vunpack.c.h.b16 %v543
    %v570 = vunpack.c.l.b16 %v544
    %v571 = vunpack.c.h.b16 %v544
    %v572 = vunpack.c.l.b16 %v545
    %v573 = vunpack.c.h.b16 %v545
    %v574 = vunpack.c.l.b16 %v546
    %v575 = vunpack.c.h.b16 %v546
    %v576 = vunpack.c.l.b16 %v547
    %v577 = vunpack.c.h.b16 %v547
    %v578 = vpack.c.b16 %v558, %v558
    %v579 = vpack.c.b16 %v559, %v559
    %v580 = vpack.c.b16 %v560, %v560
    %v581 = vpack.c.b16 %v561, %v561
    %v582 = vpack.c.b16 %v562, %v562
    %v583 = vpack.c.b16 %v563, %v563
    %v584 = vpack.c.b16 %v564, %v564
    %v585 = vpack.c.b16 %v565, %v565
    %v586 = vpack.c.b16 %v566, %v566
    %v587 = vpack.c.b16 %v567, %v567
    %v588 = vpack.c.b16 %v568, %v568
    %v589 = vpack.c.b16 %v569, %v569
    %v590 = vpack.c.b16 %v570, %v570
    %v591 = vpack.c.b16 %v571, %v571
    %v592 = vpack.c.b16 %v572, %v572
    %v593 = vpack.c.b16 %v573, %v573
    %v594 = vpack.c.b16 %v574, %v574
    %v595 = vpack.c.b16 %v575, %v575
    %v596 = vpack.c.b16 %v576, %v576
    %v597 = vpack.c.b16 %v577, %v577
    %618 = vst [vmem:[%s6] sm:$0xf] %v578
    %619 = vst [vmem:[%s6 + $0x4] sm:$0xf] %v579
    %620 = vst [vmem:[%s6 + $0x8] sm:$0xf] %v580
    %621 = vst [vmem:[%s6 + $0xc] sm:$0xf] %v581
    %622 = vst [vmem:[%s6 + $0x10] sm:$0xf] %v582
    %623 = vst [vmem:[%s6 + $0x14] sm:$0xf] %v583
    %624 = vst [vmem:[%s6 + $0x18] sm:$0xf] %v584
    %625 = vst [vmem:[%s6 + $0x1c] sm:$0xf] %v585
    %626 = vst [vmem:[%s6 + $0x20] sm:$0xf] %v586
    %627 = vst [vmem:[%s6 + $0x24] sm:$0xf] %v587
    %628 = vst [vmem:[%s6 + $0x28] sm:$0xf] %v588
    %629 = vst [vmem:[%s6 + $0x2c] sm:$0xf] %v589
    %630 = vst [vmem:[%s6 + $0x30] sm:$0xf] %v590
    %631 = vst [vmem:[%s6 + $0x34] sm:$0xf] %v591
    %632 = vst [vmem:[%s6 + $0x38] sm:$0xf] %v592
    %633 = vst [vmem:[%s6 + $0x3c] sm:$0xf] %v593
    %634 = vst [vmem:[%s6 + $0x40] sm:$0xf] %v594
    %635 = vst [vmem:[%s6 + $0x44] sm:$0xf] %v595
    %636 = vst [vmem:[%s6 + $0x48] sm:$0xf] %v596
    %637 = vst [vmem:[%s6 + $0x4c] sm:$0xf] %v597
    %vm638 = vcmask 785408
    %639 = vst.msk [vmem:[%s7] sm:$0xff] %vm638, %v460
    %640 = vst.msk [vmem:[%s7 + $0x8] sm:$0xff] %vm638, %v463
    %641 = vst.msk [vmem:[%s7 + $0x10] sm:$0xff] %vm638, %v468
    %642 = vst.msk [vmem:[%s7 + $0x18] sm:$0xff] %vm638, %v471
    %643 = vst.msk [vmem:[%s7 + $0x20] sm:$0xff] %vm638, %v476
    %644 = vst.msk [vmem:[%s7 + $0x28] sm:$0xff] %vm638, %v479
    %645 = vst.msk [vmem:[%s7 + $0x30] sm:$0xff] %vm638, %v484
    %646 = vst.msk [vmem:[%s7 + $0x38] sm:$0xff] %vm638, %v487
    %647 = vst.msk [vmem:[%s7 + $0x40] sm:$0xff] %vm638, %v492
    %648 = vst.msk [vmem:[%s7 + $0x48] sm:$0xff] %vm638, %v495
    %649 = vst.msk [vmem:[%s7 + $0x50] sm:$0xff] %vm638, %v500
    %650 = vst.msk [vmem:[%s7 + $0x58] sm:$0xff] %vm638, %v503
    %651 = vst.msk [vmem:[%s7 + $0x60] sm:$0xff] %vm638, %v508
    %652 = vst.msk [vmem:[%s7 + $0x68] sm:$0xff] %vm638, %v511
    %653 = vst.msk [vmem:[%s7 + $0x70] sm:$0xff] %vm638, %v516
    %654 = vst.msk [vmem:[%s7 + $0x78] sm:$0xff] %vm638, %v519
    %655 = vst.msk [vmem:[%s7 + $0x80] sm:$0xff] %vm638, %v524
    %656 = vst.msk [vmem:[%s7 + $0x88] sm:$0xff] %vm638, %v527
    %657 = vst.msk [vmem:[%s7 + $0x90] sm:$0xff] %vm638, %v532
    %658 = vst.msk [vmem:[%s7 + $0x98] sm:$0xff] %vm638, %v535
    // Predicated region
    $region46: #{deformable_transformer_encoder.3} parent=1 // pred_check
      _
    $region47: #{deformable_transformer_encoder.3} parent=1 // pred_check_branch
      %660 = sbr.rel (0) target = $region49
    $region48: #{deformable_transformer_encoder.3} parent=1 // pred_region
      _
    $region49: #{deformable_transformer_encoder.3} parent=1 // pred_fallthru
      _
    // Predicated region
    $region50: #{deformable_transformer_encoder.3} parent=1 // pred_check
      _
    $region51: #{deformable_transformer_encoder.3} parent=1 // pred_check_branch
      %662 = sbr.rel (0) target = $region53
    $region52: #{deformable_transformer_encoder.3} parent=1 // pred_region
      _
    $region53: #{deformable_transformer_encoder.3} parent=1 // pred_fallthru
      _
    // Predicated region
    $region54: #{deformable_transformer_encoder.3} parent=1 // pred_check
      _
    $region55: #{deformable_transformer_encoder.3} parent=1 // pred_check_branch
      %664 = sbr.rel (0) target = $region57
    $region56: #{deformable_transformer_encoder.3} parent=1 // pred_region
      _
    $region57: #{deformable_transformer_encoder.3} parent=1 // pred_fallthru
      _
    // Predicated region
    $region58: #{deformable_transformer_encoder.3} parent=1 // pred_check
      _
    $region59: #{deformable_transformer_encoder.3} parent=1 // pred_check_branch
      %666 = sbr.rel (0) target = $region61
    $region60: #{deformable_transformer_encoder.3} parent=1 // pred_region
      _
    $region61: #{deformable_transformer_encoder.3} parent=1 // pred_fallthru
      _
    %667 = vsyncpa [#allocation3], 1
    %668 = vsyncpa [#allocation5], 1
    %669 = vsyncpa [#allocation8], 1

// kernel: deformable_transformer_encoder.4
$region0: #{deformable_transformer_encoder.4}
  #allocation0 [shape = 'u32[]', space=smem, size = 0x4, offset = 0x4, fixed_abs, tag = 'smem constant byte address 0x4 - core index']
  #allocation1 [shape = 'u32[144,128]{1,0:T(1,128)}', space=vmem, size = 0x12000, scoped, tag = 'internal scratch']
  %s0 = inlined_call_operand.vmem [shape: bf16[160,128], index: 0, kind: input, shape index: {}]
  %s1 = inlined_call_operand.vmem [shape: f32[160,128], index: 1, kind: input, shape index: {}]
  %s2 = inlined_call_operand.vmem [shape: f32[160,128], index: 2, kind: input, shape index: {}]
  %s3 = inlined_call_operand.vmem [shape: bf16[128,128], index: 3, kind: input, shape index: {}]
  %s4 = inlined_call_operand.vmem [shape: f32[1,128], index: 4, kind: input, shape index: {}]
  %s5 = inlined_call_operand.vmem [shape: f32[1,128], index: 5, kind: input, shape index: {}]
  %s6 = inlined_call_operand.vmem [shape: f32[1,128], index: 6, kind: input, shape index: {}]
  %s7 = inlined_call_operand.vmem [shape: bf16[128,256], index: 7, kind: input, shape index: {}]
  %s8 = inlined_call_operand.vmem [shape: f32[1,256], index: 8, kind: input, shape index: {}]
  %s9 = inlined_call_operand.vmem [shape: bf16[256,128], index: 9, kind: input, shape index: {}]
  %s10 = inlined_call_operand.vmem [shape: f32[1,128], index: 10, kind: input, shape index: {}]
  %s11 = inlined_call_operand.vmem [shape: f32[1,128], index: 11, kind: input, shape index: {}]
  %s12 = inlined_call_operand.vmem [shape: f32[1,128], index: 12, kind: input, shape index: {}]
  %s13 = inlined_call_operand.vmem [shape: bf16[128,128], index: 13, kind: input, shape index: {}]
  %s14 = inlined_call_operand.vmem [shape: bf16[128,96], index: 14, kind: input, shape index: {}]
  %s15 = inlined_call_operand.vmem [shape: f32[1,128], index: 15, kind: input, shape index: {}]
  %s16 = inlined_call_operand.vmem [shape: f32[1,96], index: 16, kind: input, shape index: {}]
  %s17 = inlined_call_operand.vmem [shape: f32[160,128], index: 17, kind: output, shape index: {0}]
  %s18 = inlined_call_operand.vmem [shape: bf16[160,128], index: 18, kind: output, shape index: {1}]
  %s19 = inlined_call_operand.vmem [shape: f32[160,96], index: 19, kind: output, shape index: {2}]
  %20 = xla_tuple %s17, %s18, %s19
  %s21 = sld [smem:[#allocation0]]
  $region94: #{deformable_transformer_encoder.4} parent=0
    _
  %s23 = ssub.s32 1, %s21
  %s24 = scalar_select 0, %s23, %s21
  // Predicated region
  $region2: #{deformable_transformer_encoder.4} parent=0 // pred_check
    _
  $region3: #{deformable_transformer_encoder.4} parent=0 // pred_check_branch
    %26 = sbr.rel (0) target = $region5
  $region4: #{deformable_transformer_encoder.4} parent=0 // pred_region
    _
  $region5: #{deformable_transformer_encoder.4} parent=0 // pred_fallthru
    _
  // Predicated region
  $region6: #{deformable_transformer_encoder.4} parent=0 // pred_check
    _
  $region7: #{deformable_transformer_encoder.4} parent=0 // pred_check_branch
    %28 = sbr.rel (0) target = $region9
  $region8: #{deformable_transformer_encoder.4} parent=0 // pred_region
    _
  $region9: #{deformable_transformer_encoder.4} parent=0 // pred_fallthru
    _
  // Predicated region
  $region10: #{deformable_transformer_encoder.4} parent=0 // pred_check
    _
  $region11: #{deformable_transformer_encoder.4} parent=0 // pred_check_branch
    %30 = sbr.rel (0) target = $region13
  $region12: #{deformable_transformer_encoder.4} parent=0 // pred_region
    _
  $region13: #{deformable_transformer_encoder.4} parent=0 // pred_fallthru
    _
  // Predicated region
  $region14: #{deformable_transformer_encoder.4} parent=0 // pred_check
    _
  $region15: #{deformable_transformer_encoder.4} parent=0 // pred_check_branch
    %32 = sbr.rel (0) target = $region17
  $region16: #{deformable_transformer_encoder.4} parent=0 // pred_region
    _
  $region17: #{deformable_transformer_encoder.4} parent=0 // pred_fallthru
    _
  // Predicated region
  $region18: #{deformable_transformer_encoder.4} parent=0 // pred_check
    _
  $region19: #{deformable_transformer_encoder.4} parent=0 // pred_check_branch
    %34 = sbr.rel (0) target = $region21
  $region20: #{deformable_transformer_encoder.4} parent=0 // pred_region
    _
  $region21: #{deformable_transformer_encoder.4} parent=0 // pred_fallthru
    _
  // Predicated region
  $region22: #{deformable_transformer_encoder.4} parent=0 // pred_check
    _
  $region23: #{deformable_transformer_encoder.4} parent=0 // pred_check_branch
    %36 = sbr.rel (0) target = $region25
  $region24: #{deformable_transformer_encoder.4} parent=0 // pred_region
    _
  $region25: #{deformable_transformer_encoder.4} parent=0 // pred_fallthru
    _
  // Predicated region
  $region26: #{deformable_transformer_encoder.4} parent=0 // pred_check
    _
  $region27: #{deformable_transformer_encoder.4} parent=0 // pred_check_branch
    %38 = sbr.rel (0) target = $region29
  $region28: #{deformable_transformer_encoder.4} parent=0 // pred_region
    _
  $region29: #{deformable_transformer_encoder.4} parent=0 // pred_fallthru
    _
  // Predicated region
  $region30: #{deformable_transformer_encoder.4} parent=0 // pred_check
    _
  $region31: #{deformable_transformer_encoder.4} parent=0 // pred_check_branch
    %40 = sbr.rel (0) target = $region33
  $region32: #{deformable_transformer_encoder.4} parent=0 // pred_region
    _
  $region33: #{deformable_transformer_encoder.4} parent=0 // pred_fallthru
    _
  // Predicated region
  $region34: #{deformable_transformer_encoder.4} parent=0 // pred_check
    _
  $region35: #{deformable_transformer_encoder.4} parent=0 // pred_check_branch
    %42 = sbr.rel (0) target = $region37
  $region36: #{deformable_transformer_encoder.4} parent=0 // pred_region
    _
  $region37: #{deformable_transformer_encoder.4} parent=0 // pred_fallthru
    _
  // Predicated region
  $region38: #{deformable_transformer_encoder.4} parent=0 // pred_check
    _
  $region39: #{deformable_transformer_encoder.4} parent=0 // pred_check_branch
    %44 = sbr.rel (0) target = $region41
  $region40: #{deformable_transformer_encoder.4} parent=0 // pred_region
    _
  $region41: #{deformable_transformer_encoder.4} parent=0 // pred_fallthru
    _
  // Predicated region
  $region42: #{deformable_transformer_encoder.4} parent=0 // pred_check
    _
  $region43: #{deformable_transformer_encoder.4} parent=0 // pred_check_branch
    %46 = sbr.rel (0) target = $region45
  $region44: #{deformable_transformer_encoder.4} parent=0 // pred_region
    _
  $region45: #{deformable_transformer_encoder.4} parent=0 // pred_fallthru
    _
  // Predicated region
  $region46: #{deformable_transformer_encoder.4} parent=0 // pred_check
    _
  $region47: #{deformable_transformer_encoder.4} parent=0 // pred_check_branch
    %48 = sbr.rel (0) target = $region49
  $region48: #{deformable_transformer_encoder.4} parent=0 // pred_region
    _
  $region49: #{deformable_transformer_encoder.4} parent=0 // pred_fallthru
    _
  // Predicated region
  $region50: #{deformable_transformer_encoder.4} parent=0 // pred_check
    _
  $region51: #{deformable_transformer_encoder.4} parent=0 // pred_check_branch
    %50 = sbr.rel (0) target = $region53
  $region52: #{deformable_transformer_encoder.4} parent=0 // pred_region
    _
  $region53: #{deformable_transformer_encoder.4} parent=0 // pred_fallthru
    _
  // Predicated region
  $region54: #{deformable_transformer_encoder.4} parent=0 // pred_check
    _
  $region55: #{deformable_transformer_encoder.4} parent=0 // pred_check_branch
    %52 = sbr.rel (0) target = $region57
  $region56: #{deformable_transformer_encoder.4} parent=0 // pred_region
    _
  $region57: #{deformable_transformer_encoder.4} parent=0 // pred_fallthru
    _
  // Predicated region
  $region58: #{deformable_transformer_encoder.4} parent=0 // pred_check
    _
  $region59: #{deformable_transformer_encoder.4} parent=0 // pred_check_branch
    %54 = sbr.rel (0) target = $region61
  $region60: #{deformable_transformer_encoder.4} parent=0 // pred_region
    _
  $region61: #{deformable_transformer_encoder.4} parent=0 // pred_fallthru
    _
  // Predicated region
  $region62: #{deformable_transformer_encoder.4} parent=0 // pred_check
    _
  $region63: #{deformable_transformer_encoder.4} parent=0 // pred_check_branch
    %56 = sbr.rel (0) target = $region65
  $region64: #{deformable_transformer_encoder.4} parent=0 // pred_region
    _
  $region65: #{deformable_transformer_encoder.4} parent=0 // pred_fallthru
    _
  // Predicated region
  $region66: #{deformable_transformer_encoder.4} parent=0 // pred_check
    _
  $region67: #{deformable_transformer_encoder.4} parent=0 // pred_check_branch
    %58 = sbr.rel (0) target = $region69
  $region68: #{deformable_transformer_encoder.4} parent=0 // pred_region
    _
  $region69: #{deformable_transformer_encoder.4} parent=0 // pred_fallthru
    _
  %v60 = vld [vmem:[%s0] sm:$0xf]
  %v61 = vld [vmem:[%s0 + $0x4] sm:$0xf]
  %v62 = vld [vmem:[%s0 + $0x8] sm:$0xf]
  %v63 = vld [vmem:[%s0 + $0xc] sm:$0xf]
  %v64 = vld [vmem:[%s0 + $0x10] sm:$0xf]
  %v65 = vld [vmem:[%s0 + $0x14] sm:$0xf]
  %v66 = vld [vmem:[%s0 + $0x18] sm:$0xf]
  %v67 = vld [vmem:[%s0 + $0x1c] sm:$0xf]
  %v68 = vld [vmem:[%s0 + $0x20] sm:$0xf]
  %v69 = vld [vmem:[%s0 + $0x24] sm:$0xf]
  %v70 = vld [vmem:[%s0 + $0x28] sm:$0xf]
  %v71 = vld [vmem:[%s0 + $0x2c] sm:$0xf]
  %v72 = vld [vmem:[%s0 + $0x30] sm:$0xf]
  %v73 = vld [vmem:[%s0 + $0x34] sm:$0xf]
  %v74 = vld [vmem:[%s0 + $0x38] sm:$0xf]
  %v75 = vld [vmem:[%s0 + $0x3c] sm:$0xf]
  %v76 = vld [vmem:[%s0 + $0x40] sm:$0xf]
  %v77 = vld [vmem:[%s0 + $0x44] sm:$0xf]
  %v78 = vld [vmem:[%s0 + $0x48] sm:$0xf]
  %v79 = vld [vmem:[%s0 + $0x4c] sm:$0xf]
  %v80 = vld [vmem:[%s3] sm:$0xf]
  %v81 = vld [vmem:[%s3 + $0x4] sm:$0xf]
  %v82 = vld [vmem:[%s3 + $0x8] sm:$0xf]
  %v83 = vld [vmem:[%s3 + $0xc] sm:$0xf]
  %v84 = vld [vmem:[%s3 + $0x10] sm:$0xf]
  %v85 = vld [vmem:[%s3 + $0x14] sm:$0xf]
  %v86 = vld [vmem:[%s3 + $0x18] sm:$0xf]
  %v87 = vld [vmem:[%s3 + $0x1c] sm:$0xf]
  %v88 = vld [vmem:[%s3 + $0x20] sm:$0xf]
  %v89 = vld [vmem:[%s3 + $0x24] sm:$0xf]
  %v90 = vld [vmem:[%s3 + $0x28] sm:$0xf]
  %v91 = vld [vmem:[%s3 + $0x2c] sm:$0xf]
  %v92 = vld [vmem:[%s3 + $0x30] sm:$0xf]
  %v93 = vld [vmem:[%s3 + $0x34] sm:$0xf]
  %v94 = vld [vmem:[%s3 + $0x38] sm:$0xf]
  %v95 = vld [vmem:[%s3 + $0x3c] sm:$0xf]
  %v96 = vld [vmem:[%s4] sm:$0x1]
  %v98 = vlaneseq
  %v99 = vshrl.u32 %v98, 7
  %v100 = vsub.s32 0, %v99
  %v101 = vrot.slane %v96, %v100
  %v123 = vunpack.c.l.b16 %v60
  %v124 = vunpack.c.l.b16 %v61
  %v125 = vunpack.c.l.b16 %v62
  %v126 = vunpack.c.l.b16 %v63
  %v127 = vunpack.c.l.b16 %v64
  %v128 = vunpack.c.l.b16 %v65
  %v129 = vunpack.c.l.b16 %v66
  %v130 = vunpack.c.l.b16 %v67
  %v131 = vunpack.c.l.b16 %v68
  %v132 = vunpack.c.l.b16 %v69
  %v133 = vunpack.c.l.b16 %v70
  %v134 = vunpack.c.l.b16 %v71
  %v135 = vunpack.c.l.b16 %v72
  %v136 = vunpack.c.l.b16 %v73
  %v137 = vunpack.c.l.b16 %v74
  %v138 = vunpack.c.l.b16 %v75
  %v139 = vunpack.c.l.b16 %v76
  %v140 = vunpack.c.l.b16 %v77
  %v141 = vunpack.c.l.b16 %v78
  %v142 = vunpack.c.l.b16 %v79
  %v143 = vpack.c.b16 %v124, %v123
  %v144 = vpack.c.b16 %v126, %v125
  %v145 = vpack.c.b16 %v128, %v127
  %v146 = vpack.c.b16 %v130, %v129
  %v147 = vpack.c.b16 %v132, %v131
  %v148 = vpack.c.b16 %v134, %v133
  %v149 = vpack.c.b16 %v136, %v135
  %v150 = vpack.c.b16 %v138, %v137
  %v151 = vpack.c.b16 %v140, %v139
  %v152 = vpack.c.b16 %v142, %v141
  %v179 = vunpack.c.l.b16 %v80
  %v180 = vunpack.c.l.b16 %v81
  %v181 = vunpack.c.l.b16 %v82
  %v182 = vunpack.c.l.b16 %v83
  %v183 = vunpack.c.l.b16 %v84
  %v184 = vunpack.c.l.b16 %v85
  %v185 = vunpack.c.l.b16 %v86
  %v186 = vunpack.c.l.b16 %v87
  %v187 = vunpack.c.l.b16 %v88
  %v188 = vunpack.c.l.b16 %v89
  %v189 = vunpack.c.l.b16 %v90
  %v190 = vunpack.c.l.b16 %v91
  %v191 = vunpack.c.l.b16 %v92
  %v192 = vunpack.c.l.b16 %v93
  %v193 = vunpack.c.l.b16 %v94
  %v194 = vunpack.c.l.b16 %v95
  %v195 = vpack.c.b16 %v180, %v179
  %v196 = vpack.c.b16 %v182, %v181
  %v197 = vpack.c.b16 %v184, %v183
  %v198 = vpack.c.b16 %v186, %v185
  %v199 = vpack.c.b16 %v188, %v187
  %v200 = vpack.c.b16 %v190, %v189
  %v201 = vpack.c.b16 %v192, %v191
  %v202 = vpack.c.b16 %v194, %v193
  %211 = vmatprep.subr.bf16.mxu0 0
  %212 = vmatpush1.bf16.msra.mxu0 %v195
  %213 = vmatprep.subr.bf16.mxu0 0
  %214 = vmatpush1.bf16.msra.mxu0 %v196
  %215 = vmatprep.subr.bf16.mxu0 0
  %216 = vmatpush1.bf16.msra.mxu0 %v197
  %217 = vmatprep.subr.bf16.mxu0 0
  %218 = vmatpush1.bf16.msra.mxu0 %v198
  %219 = vmatprep.subr.bf16.mxu0 0
  %220 = vmatpush1.bf16.msra.mxu0 %v199
  %221 = vmatprep.subr.bf16.mxu0 0
  %222 = vmatpush1.bf16.msra.mxu0 %v200
  %223 = vmatprep.subr.bf16.mxu0 0
  %224 = vmatpush1.bf16.msra.mxu0 %v201
  %225 = vmatprep.subr.bf16.mxu0 0
  %226 = vmatpush1.bf16.msra.mxu0 %v202
  %227 = vmatprep.subr.bf16.mxu0 0
  %228 = vmatpush1.bf16.msra.mxu0 0
  %229 = vmatprep.subr.bf16.mxu0 0
  %230 = vmatpush1.bf16.msra.mxu0 0
  %231 = vmatprep.subr.bf16.mxu0 0
  %232 = vmatpush1.bf16.msra.mxu0 0
  %233 = vmatprep.subr.bf16.mxu0 0
  %234 = vmatpush1.bf16.msra.mxu0 0
  %235 = vmatprep.subr.bf16.mxu0 0
  %236 = vmatpush1.bf16.msra.mxu0 0
  %237 = vmatprep.subr.bf16.mxu0 0
  %238 = vmatpush1.bf16.msra.mxu0 0
  %239 = vmatprep.subr.bf16.mxu0 0
  %240 = vmatpush1.bf16.msra.mxu0 0
  %241 = vmatprep.subr.bf16.mxu0 0
  %242 = vmatpush1.bf16.msra.mxu0 0
  %243 = vmatprep.mubr.bf16.mxu0 0
  %244 = vmatmul.mubr.bf16.gmra.mrb[0].mxu0 %v143
  %v245 = vpop.f32.mrb[0].mxu0
  %v246 = vadd.f32 %v101, %v245
  %v247 = vpop.f32.mrb[0].mxu0
  %v248 = vpop.f32.mrb[0].mxu0
  %v249 = vadd.f32 %v101, %v248
  %v250 = vpop.f32.mrb[0].mxu0
  %251 = vmatprep.mubr.bf16.mxu0 0
  %252 = vmatmul.mubr.bf16.gmra.mrb[0].mxu0 %v144
  %v253 = vpop.f32.mrb[0].mxu0
  %v254 = vadd.f32 %v101, %v253
  %v255 = vpop.f32.mrb[0].mxu0
  %v256 = vpop.f32.mrb[0].mxu0
  %v257 = vadd.f32 %v101, %v256
  %v258 = vpop.f32.mrb[0].mxu0
  %259 = vmatprep.mubr.bf16.mxu0 0
  %260 = vmatmul.mubr.bf16.gmra.mrb[0].mxu0 %v145
  %v261 = vpop.f32.mrb[0].mxu0
  %v262 = vadd.f32 %v101, %v261
  %v263 = vpop.f32.mrb[0].mxu0
  %v264 = vpop.f32.mrb[0].mxu0
  %v265 = vadd.f32 %v101, %v264
  %v266 = vpop.f32.mrb[0].mxu0
  %267 = vmatprep.mubr.bf16.mxu0 0
  %268 = vmatmul.mubr.bf16.gmra.mrb[0].mxu0 %v146
  %v269 = vpop.f32.mrb[0].mxu0
  %v270 = vadd.f32 %v101, %v269
  %v271 = vpop.f32.mrb[0].mxu0
  %v272 = vpop.f32.mrb[0].mxu0
  %v273 = vadd.f32 %v101, %v272
  %v274 = vpop.f32.mrb[0].mxu0
  %275 = vmatprep.mubr.bf16.mxu0 0
  %276 = vmatmul.mubr.bf16.gmra.mrb[0].mxu0 %v147
  %v277 = vpop.f32.mrb[0].mxu0
  %v278 = vadd.f32 %v101, %v277
  %v279 = vpop.f32.mrb[0].mxu0
  %v280 = vpop.f32.mrb[0].mxu0
  %v281 = vadd.f32 %v101, %v280
  %v282 = vpop.f32.mrb[0].mxu0
  %283 = vmatprep.mubr.bf16.mxu0 0
  %284 = vmatmul.mubr.bf16.gmra.mrb[0].mxu0 %v148
  %v285 = vpop.f32.mrb[0].mxu0
  %v286 = vadd.f32 %v101, %v285
  %v287 = vpop.f32.mrb[0].mxu0
  %v288 = vpop.f32.mrb[0].mxu0
  %v289 = vadd.f32 %v101, %v288
  %v290 = vpop.f32.mrb[0].mxu0
  %291 = vmatprep.mubr.bf16.mxu0 0
  %292 = vmatmul.mubr.bf16.gmra.mrb[0].mxu0 %v149
  %v293 = vpop.f32.mrb[0].mxu0
  %v294 = vadd.f32 %v101, %v293
  %v295 = vpop.f32.mrb[0].mxu0
  %v296 = vpop.f32.mrb[0].mxu0
  %v297 = vadd.f32 %v101, %v296
  %v298 = vpop.f32.mrb[0].mxu0
  %299 = vmatprep.mubr.bf16.mxu0 0
  %300 = vmatmul.mubr.bf16.gmra.mrb[0].mxu0 %v150
  %v301 = vpop.f32.mrb[0].mxu0
  %v302 = vadd.f32 %v101, %v301
  %v303 = vpop.f32.mrb[0].mxu0
  %v304 = vpop.f32.mrb[0].mxu0
  %v305 = vadd.f32 %v101, %v304
  %v306 = vpop.f32.mrb[0].mxu0
  %307 = vmatprep.mubr.bf16.mxu0 0
  %308 = vmatmul.mubr.bf16.gmra.mrb[0].mxu0 %v151
  %v309 = vpop.f32.mrb[0].mxu0
  %v310 = vadd.f32 %v101, %v309
  %v311 = vpop.f32.mrb[0].mxu0
  %v312 = vpop.f32.mrb[0].mxu0
  %v313 = vadd.f32 %v101, %v312
  %v314 = vpop.f32.mrb[0].mxu0
  %315 = vmatprep.mubr.bf16.mxu0 0
  %316 = vmatmul.mubr.bf16.gmra.mrb[0].mxu0 %v152
  %v317 = vpop.f32.mrb[0].mxu0
  %v318 = vadd.f32 %v101, %v317
  %v319 = vpop.f32.mrb[0].mxu0
  %v320 = vpop.f32.mrb[0].mxu0
  %v321 = vadd.f32 %v101, %v320
  %v322 = vpop.f32.mrb[0].mxu0
  %323 = vdwg.mxu0
  %v324 = vld [vmem:[%s1] sm:$0xff]
  %v325 = vld [vmem:[%s1 + $0x8] sm:$0xff]
  %v326 = vld [vmem:[%s1 + $0x10] sm:$0xff]
  %v327 = vld [vmem:[%s1 + $0x18] sm:$0xff]
  %v328 = vld [vmem:[%s1 + $0x20] sm:$0xff]
  %v329 = vld [vmem:[%s1 + $0x28] sm:$0xff]
  %v330 = vld [vmem:[%s1 + $0x30] sm:$0xff]
  %v331 = vld [vmem:[%s1 + $0x38] sm:$0xff]
  %v332 = vld [vmem:[%s1 + $0x40] sm:$0xff]
  %v333 = vld [vmem:[%s1 + $0x48] sm:$0xff]
  %v334 = vld [vmem:[%s1 + $0x50] sm:$0xff]
  %v335 = vld [vmem:[%s1 + $0x58] sm:$0xff]
  %v336 = vld [vmem:[%s1 + $0x60] sm:$0xff]
  %v337 = vld [vmem:[%s1 + $0x68] sm:$0xff]
  %v338 = vld [vmem:[%s1 + $0x70] sm:$0xff]
  %v339 = vld [vmem:[%s1 + $0x78] sm:$0xff]
  %v340 = vld [vmem:[%s1 + $0x80] sm:$0xff]
  %v341 = vld [vmem:[%s1 + $0x88] sm:$0xff]
  %v342 = vld [vmem:[%s1 + $0x90] sm:$0xff]
  %v343 = vld [vmem:[%s1 + $0x98] sm:$0xff]
  %v344 = vadd.f32 %v324, %v246
  %v345 = vadd.f32 %v325, %v249
  %v346 = vadd.f32 %v326, %v254
  %v347 = vadd.f32 %v327, %v257
  %v348 = vadd.f32 %v328, %v262
  %v349 = vadd.f32 %v329, %v265
  %v350 = vadd.f32 %v330, %v270
  %v351 = vadd.f32 %v331, %v273
  %v352 = vadd.f32 %v332, %v278
  %v353 = vadd.f32 %v333, %v281
  %v354 = vadd.f32 %v334, %v286
  %v355 = vadd.f32 %v335, %v289
  %v356 = vadd.f32 %v336, %v294
  %v357 = vadd.f32 %v337, %v297
  %v358 = vadd.f32 %v338, %v302
  %v359 = vadd.f32 %v339, %v305
  %v360 = vadd.f32 %v340, %v310
  %v361 = vadd.f32 %v341, %v313
  %v362 = vadd.f32 %v342, %v318
  %v363 = vadd.f32 %v343, %v321
  %364 = vadd.xlane.f32.xlu0 %v344
  %v365 = vpop.xlane.xlu0 %364
  %366 = vadd.xlane.f32.xlu0 %v345
  %v367 = vpop.xlane.xlu0 %366
  %368 = vadd.xlane.f32.xlu0 %v346
  %v369 = vpop.xlane.xlu0 %368
  %370 = vadd.xlane.f32.xlu0 %v347
  %v371 = vpop.xlane.xlu0 %370
  %372 = vadd.xlane.f32.xlu0 %v348
  %v373 = vpop.xlane.xlu0 %372
  %374 = vadd.xlane.f32.xlu0 %v349
  %v375 = vpop.xlane.xlu0 %374
  %376 = vadd.xlane.f32.xlu0 %v350
  %v377 = vpop.xlane.xlu0 %376
  %378 = vadd.xlane.f32.xlu0 %v351
  %v379 = vpop.xlane.xlu0 %378
  %380 = vadd.xlane.f32.xlu0 %v352
  %v381 = vpop.xlane.xlu0 %380
  %382 = vadd.xlane.f32.xlu0 %v353
  %v383 = vpop.xlane.xlu0 %382
  %384 = vadd.xlane.f32.xlu0 %v354
  %v385 = vpop.xlane.xlu0 %384
  %386 = vadd.xlane.f32.xlu0 %v355
  %v387 = vpop.xlane.xlu0 %386
  %388 = vadd.xlane.f32.xlu0 %v356
  %v389 = vpop.xlane.xlu0 %388
  %390 = vadd.xlane.f32.xlu0 %v357
  %v391 = vpop.xlane.xlu0 %390
  %392 = vadd.xlane.f32.xlu0 %v358
  %v393 = vpop.xlane.xlu0 %392
  %394 = vadd.xlane.f32.xlu0 %v359
  %v395 = vpop.xlane.xlu0 %394
  %396 = vadd.xlane.f32.xlu0 %v360
  %v397 = vpop.xlane.xlu0 %396
  %398 = vadd.xlane.f32.xlu0 %v361
  %v399 = vpop.xlane.xlu0 %398
  %400 = vadd.xlane.f32.xlu0 %v362
  %v401 = vpop.xlane.xlu0 %400
  %402 = vadd.xlane.f32.xlu0 %v363
  %v403 = vpop.xlane.xlu0 %402
  %v404 = vrcp.pop 128.0
  %v405 = vmul.f32 %v365, %v404
  %v406 = vmul.f32 %v367, %v404
  %v407 = vmul.f32 %v369, %v404
  %v408 = vmul.f32 %v371, %v404
  %v409 = vmul.f32 %v373, %v404
  %v410 = vmul.f32 %v375, %v404
  %v411 = vmul.f32 %v377, %v404
  %v412 = vmul.f32 %v379, %v404
  %v413 = vmul.f32 %v381, %v404
  %v414 = vmul.f32 %v383, %v404
  %v415 = vmul.f32 %v385, %v404
  %v416 = vmul.f32 %v387, %v404
  %v417 = vmul.f32 %v389, %v404
  %v418 = vmul.f32 %v391, %v404
  %v419 = vmul.f32 %v393, %v404
  %v420 = vmul.f32 %v395, %v404
  %v421 = vmul.f32 %v397, %v404
  %v422 = vmul.f32 %v399, %v404
  %v423 = vmul.f32 %v401, %v404
  %v424 = vmul.f32 %v403, %v404
  %v425 = vsub.f32 %v344, %v405
  %v426 = vsub.f32 %v345, %v406
  %v427 = vsub.f32 %v346, %v407
  %v428 = vsub.f32 %v347, %v408
  %v429 = vsub.f32 %v348, %v409
  %v430 = vsub.f32 %v349, %v410
  %v431 = vsub.f32 %v350, %v411
  %v432 = vsub.f32 %v351, %v412
  %v433 = vsub.f32 %v352, %v413
  %v434 = vsub.f32 %v353, %v414
  %v435 = vsub.f32 %v354, %v415
  %v436 = vsub.f32 %v355, %v416
  %v437 = vsub.f32 %v356, %v417
  %v438 = vsub.f32 %v357, %v418
  %v439 = vsub.f32 %v358, %v419
  %v440 = vsub.f32 %v359, %v420
  %v441 = vsub.f32 %v360, %v421
  %v442 = vsub.f32 %v361, %v422
  %v443 = vsub.f32 %v362, %v423
  %v444 = vsub.f32 %v363, %v424
  %v445 = vmul.f32 %v425, %v425
  %v446 = vmul.f32 %v426, %v426
  %v447 = vmul.f32 %v427, %v427
  %v448 = vmul.f32 %v428, %v428
  %v449 = vmul.f32 %v429, %v429
  %v450 = vmul.f32 %v430, %v430
  %v451 = vmul.f32 %v431, %v431
  %v452 = vmul.f32 %v432, %v432
  %v453 = vmul.f32 %v433, %v433
  %v454 = vmul.f32 %v434, %v434
  %v455 = vmul.f32 %v435, %v435
  %v456 = vmul.f32 %v436, %v436
  %v457 = vmul.f32 %v437, %v437
  %v458 = vmul.f32 %v438, %v438
  %v459 = vmul.f32 %v439, %v439
  %v460 = vmul.f32 %v440, %v440
  %v461 = vmul.f32 %v441, %v441
  %v462 = vmul.f32 %v442, %v442
  %v463 = vmul.f32 %v443, %v443
  %v464 = vmul.f32 %v444, %v444
  %465 = vadd.xlane.f32.xlu0 %v445
  %v466 = vpop.xlane.xlu0 %465
  %467 = vadd.xlane.f32.xlu0 %v446
  %v468 = vpop.xlane.xlu0 %467
  %469 = vadd.xlane.f32.xlu0 %v447
  %v470 = vpop.xlane.xlu0 %469
  %471 = vadd.xlane.f32.xlu0 %v448
  %v472 = vpop.xlane.xlu0 %471
  %473 = vadd.xlane.f32.xlu0 %v449
  %v474 = vpop.xlane.xlu0 %473
  %475 = vadd.xlane.f32.xlu0 %v450
  %v476 = vpop.xlane.xlu0 %475
  %477 = vadd.xlane.f32.xlu0 %v451
  %v478 = vpop.xlane.xlu0 %477
  %479 = vadd.xlane.f32.xlu0 %v452
  %v480 = vpop.xlane.xlu0 %479
  %481 = vadd.xlane.f32.xlu0 %v453
  %v482 = vpop.xlane.xlu0 %481
  %483 = vadd.xlane.f32.xlu0 %v454
  %v484 = vpop.xlane.xlu0 %483
  %485 = vadd.xlane.f32.xlu0 %v455
  %v486 = vpop.xlane.xlu0 %485
  %487 = vadd.xlane.f32.xlu0 %v456
  %v488 = vpop.xlane.xlu0 %487
  %489 = vadd.xlane.f32.xlu0 %v457
  %v490 = vpop.xlane.xlu0 %489
  %491 = vadd.xlane.f32.xlu0 %v458
  %v492 = vpop.xlane.xlu0 %491
  %493 = vadd.xlane.f32.xlu0 %v459
  %v494 = vpop.xlane.xlu0 %493
  %495 = vadd.xlane.f32.xlu0 %v460
  %v496 = vpop.xlane.xlu0 %495
  %497 = vadd.xlane.f32.xlu0 %v461
  %v498 = vpop.xlane.xlu0 %497
  %499 = vadd.xlane.f32.xlu0 %v462
  %v500 = vpop.xlane.xlu0 %499
  %501 = vadd.xlane.f32.xlu0 %v463
  %v502 = vpop.xlane.xlu0 %501
  %503 = vadd.xlane.f32.xlu0 %v464
  %v504 = vpop.xlane.xlu0 %503
  %v505 = vmul.f32 %v466, %v404
  %v506 = vmul.f32 %v468, %v404
  %v507 = vmul.f32 %v470, %v404
  %v508 = vmul.f32 %v472, %v404
  %v509 = vmul.f32 %v474, %v404
  %v510 = vmul.f32 %v476, %v404
  %v511 = vmul.f32 %v478, %v404
  %v512 = vmul.f32 %v480, %v404
  %v513 = vmul.f32 %v482, %v404
  %v514 = vmul.f32 %v484, %v404
  %v515 = vmul.f32 %v486, %v404
  %v516 = vmul.f32 %v488, %v404
  %v517 = vmul.f32 %v490, %v404
  %v518 = vmul.f32 %v492, %v404
  %v519 = vmul.f32 %v494, %v404
  %v520 = vmul.f32 %v496, %v404
  %v521 = vmul.f32 %v498, %v404
  %v522 = vmul.f32 %v500, %v404
  %v523 = vmul.f32 %v502, %v404
  %v524 = vmul.f32 %v504, %v404
  %v525 = vadd.f32 %v505, 1e-05
  %v526 = vadd.f32 %v506, 1e-05
  %v527 = vadd.f32 %v507, 1e-05
  %v528 = vadd.f32 %v508, 1e-05
  %v529 = vadd.f32 %v509, 1e-05
  %v530 = vadd.f32 %v510, 1e-05
  %v531 = vadd.f32 %v511, 1e-05
  %v532 = vadd.f32 %v512, 1e-05
  %v533 = vadd.f32 %v513, 1e-05
  %v534 = vadd.f32 %v514, 1e-05
  %v535 = vadd.f32 %v515, 1e-05
  %v536 = vadd.f32 %v516, 1e-05
  %v537 = vadd.f32 %v517, 1e-05
  %v538 = vadd.f32 %v518, 1e-05
  %v539 = vadd.f32 %v519, 1e-05
  %v540 = vadd.f32 %v520, 1e-05
  %v541 = vadd.f32 %v521, 1e-05
  %v542 = vadd.f32 %v522, 1e-05
  %v543 = vadd.f32 %v523, 1e-05
  %v544 = vadd.f32 %v524, 1e-05
  %v545 = vrsqrt.pop %v525
  %v546 = vrsqrt.pop %v526
  %v547 = vrsqrt.pop %v527
  %v548 = vrsqrt.pop %v528
  %v549 = vrsqrt.pop %v529
  %v550 = vrsqrt.pop %v530
  %v551 = vrsqrt.pop %v531
  %v552 = vrsqrt.pop %v532
  %v553 = vrsqrt.pop %v533
  %v554 = vrsqrt.pop %v534
  %v555 = vrsqrt.pop %v535
  %v556 = vrsqrt.pop %v536
  %v557 = vrsqrt.pop %v537
  %v558 = vrsqrt.pop %v538
  %v559 = vrsqrt.pop %v539
  %v560 = vrsqrt.pop %v540
  %v561 = vrsqrt.pop %v541
  %v562 = vrsqrt.pop %v542
  %v563 = vrsqrt.pop %v543
  %v564 = vrsqrt.pop %v544
  %v565 = vmul.f32 %v425, %v545
  %v566 = vmul.f32 %v426, %v546
  %v567 = vmul.f32 %v427, %v547
  %v568 = vmul.f32 %v428, %v548
  %v569 = vmul.f32 %v429, %v549
  %v570 = vmul.f32 %v430, %v550
  %v571 = vmul.f32 %v431, %v551
  %v572 = vmul.f32 %v432, %v552
  %v573 = vmul.f32 %v433, %v553
  %v574 = vmul.f32 %v434, %v554
  %v575 = vmul.f32 %v435, %v555
  %v576 = vmul.f32 %v436, %v556
  %v577 = vmul.f32 %v437, %v557
  %v578 = vmul.f32 %v438, %v558
  %v579 = vmul.f32 %v439, %v559
  %v580 = vmul.f32 %v440, %v560
  %v581 = vmul.f32 %v441, %v561
  %v582 = vmul.f32 %v442, %v562
  %v583 = vmul.f32 %v443, %v563
  %v584 = vmul.f32 %v444, %v564
  %v585 = vld [vmem:[%s5] sm:$0x1]
  %v587 = vlaneseq
  %v588 = vshrl.u32 %v587, 7
  %v589 = vsub.s32 0, %v588
  %v590 = vrot.slane %v585, %v589
  %v592 = vmul.f32 %v565, %v590
  %v593 = vmul.f32 %v566, %v590
  %v594 = vmul.f32 %v567, %v590
  %v595 = vmul.f32 %v568, %v590
  %v596 = vmul.f32 %v569, %v590
  %v597 = vmul.f32 %v570, %v590
  %v598 = vmul.f32 %v571, %v590
  %v599 = vmul.f32 %v572, %v590
  %v600 = vmul.f32 %v573, %v590
  %v601 = vmul.f32 %v574, %v590
  %v602 = vmul.f32 %v575, %v590
  %v603 = vmul.f32 %v576, %v590
  %v604 = vmul.f32 %v577, %v590
  %v605 = vmul.f32 %v578, %v590
  %v606 = vmul.f32 %v579, %v590
  %v607 = vmul.f32 %v580, %v590
  %v608 = vmul.f32 %v581, %v590
  %v609 = vmul.f32 %v582, %v590
  %v610 = vmul.f32 %v583, %v590
  %v611 = vmul.f32 %v584, %v590
  %v612 = vld [vmem:[%s6] sm:$0x1]
  %v614 = vlaneseq
  %v615 = vshrl.u32 %v614, 7
  %v616 = vsub.s32 0, %v615
  %v617 = vrot.slane %v612, %v616
  %v619 = vadd.f32 %v592, %v617
  %v620 = vadd.f32 %v593, %v617
  %v621 = vadd.f32 %v594, %v617
  %v622 = vadd.f32 %v595, %v617
  %v623 = vadd.f32 %v596, %v617
  %v624 = vadd.f32 %v597, %v617
  %v625 = vadd.f32 %v598, %v617
  %v626 = vadd.f32 %v599, %v617
  %v627 = vadd.f32 %v600, %v617
  %v628 = vadd.f32 %v601, %v617
  %v629 = vadd.f32 %v602, %v617
  %v630 = vadd.f32 %v603, %v617
  %v631 = vadd.f32 %v604, %v617
  %v632 = vadd.f32 %v605, %v617
  %v633 = vadd.f32 %v606, %v617
  %v634 = vadd.f32 %v607, %v617
  %v635 = vadd.f32 %v608, %v617
  %v636 = vadd.f32 %v609, %v617
  %v637 = vadd.f32 %v610, %v617
  %v638 = vadd.f32 %v611, %v617
  %v639 = vpack.c.bf16 %v620, %v619
  %v640 = vpack.c.bf16 %v622, %v621
  %v641 = vpack.c.bf16 %v624, %v623
  %v642 = vpack.c.bf16 %v626, %v625
  %v643 = vpack.c.bf16 %v628, %v627
  %v644 = vpack.c.bf16 %v630, %v629
  %v645 = vpack.c.bf16 %v632, %v631
  %v646 = vpack.c.bf16 %v634, %v633
  %v647 = vpack.c.bf16 %v636, %v635
  %v648 = vpack.c.bf16 %v638, %v637
  %v649 = vld [vmem:[%s7] sm:$0xff]
  %v650 = vld [vmem:[%s7 + $0x8] sm:$0xff]
  %v651 = vld [vmem:[%s7 + $0x10] sm:$0xff]
  %v652 = vld [vmem:[%s7 + $0x18] sm:$0xff]
  %v653 = vld [vmem:[%s7 + $0x20] sm:$0xff]
  %v654 = vld [vmem:[%s7 + $0x28] sm:$0xff]
  %v655 = vld [vmem:[%s7 + $0x30] sm:$0xff]
  %v656 = vld [vmem:[%s7 + $0x38] sm:$0xff]
  %v657 = vld [vmem:[%s7 + $0x40] sm:$0xff]
  %v658 = vld [vmem:[%s7 + $0x48] sm:$0xff]
  %v659 = vld [vmem:[%s7 + $0x50] sm:$0xff]
  %v660 = vld [vmem:[%s7 + $0x58] sm:$0xff]
  %v661 = vld [vmem:[%s7 + $0x60] sm:$0xff]
  %v662 = vld [vmem:[%s7 + $0x68] sm:$0xff]
  %v663 = vld [vmem:[%s7 + $0x70] sm:$0xff]
  %v664 = vld [vmem:[%s7 + $0x78] sm:$0xff]
  %v665 = vld [vmem:[%s8] sm:$0x3]
  %v667 = vlaneseq
  %v668 = vshrl.u32 %v667, 7
  %v669 = vsub.s32 0, %v668
  %v670 = vrot.slane %v665, %v669
  %v671 = vlaneseq
  %v672 = vshrl.u32 %v671, 7
  %v673 = vsub.s32 1, %v672
  %v674 = vrot.slane %v665, %v673
  %v693 = vunpack.c.l.b16 %v649
  %v694 = vunpack.c.h.b16 %v649
  %v695 = vunpack.c.l.b16 %v650
  %v696 = vunpack.c.h.b16 %v650
  %v697 = vunpack.c.l.b16 %v651
  %v698 = vunpack.c.h.b16 %v651
  %v699 = vunpack.c.l.b16 %v652
  %v700 = vunpack.c.h.b16 %v652
  %v701 = vunpack.c.l.b16 %v653
  %v702 = vunpack.c.h.b16 %v653
  %v703 = vunpack.c.l.b16 %v654
  %v704 = vunpack.c.h.b16 %v654
  %v705 = vunpack.c.l.b16 %v655
  %v706 = vunpack.c.h.b16 %v655
  %v707 = vunpack.c.l.b16 %v656
  %v708 = vunpack.c.h.b16 %v656
  %v709 = vunpack.c.l.b16 %v657
  %v710 = vunpack.c.h.b16 %v657
  %v711 = vunpack.c.l.b16 %v658
  %v712 = vunpack.c.h.b16 %v658
  %v713 = vunpack.c.l.b16 %v659
  %v714 = vunpack.c.h.b16 %v659
  %v715 = vunpack.c.l.b16 %v660
  %v716 = vunpack.c.h.b16 %v660
  %v717 = vunpack.c.l.b16 %v661
  %v718 = vunpack.c.h.b16 %v661
  %v719 = vunpack.c.l.b16 %v662
  %v720 = vunpack.c.h.b16 %v662
  %v721 = vunpack.c.l.b16 %v663
  %v722 = vunpack.c.h.b16 %v663
  %v723 = vunpack.c.l.b16 %v664
  %v724 = vunpack.c.h.b16 %v664
  %v725 = vpack.c.b16 %v695, %v693
  %v726 = vpack.c.b16 %v696, %v694
  %v727 = vpack.c.b16 %v699, %v697
  %v728 = vpack.c.b16 %v700, %v698
  %v729 = vpack.c.b16 %v703, %v701
  %v730 = vpack.c.b16 %v704, %v702
  %v731 = vpack.c.b16 %v707, %v705
  %v732 = vpack.c.b16 %v708, %v706
  %v733 = vpack.c.b16 %v711, %v709
  %v734 = vpack.c.b16 %v712, %v710
  %v735 = vpack.c.b16 %v715, %v713
  %v736 = vpack.c.b16 %v716, %v714
  %v737 = vpack.c.b16 %v719, %v717
  %v738 = vpack.c.b16 %v720, %v718
  %v739 = vpack.c.b16 %v723, %v721
  %v740 = vpack.c.b16 %v724, %v722
  %757 = vmatprep.subr.bf16.mxu0 %v726
  %758 = vmatpush1.bf16.msra.mxu0 %v725
  %759 = vmatprep.subr.bf16.mxu0 %v728
  %760 = vmatpush1.bf16.msra.mxu0 %v727
  %761 = vmatprep.subr.bf16.mxu0 %v730
  %762 = vmatpush1.bf16.msra.mxu0 %v729
  %763 = vmatprep.subr.bf16.mxu0 %v732
  %764 = vmatpush1.bf16.msra.mxu0 %v731
  %765 = vmatprep.subr.bf16.mxu0 %v734
  %766 = vmatpush1.bf16.msra.mxu0 %v733
  %767 = vmatprep.subr.bf16.mxu0 %v736
  %768 = vmatpush1.bf16.msra.mxu0 %v735
  %769 = vmatprep.subr.bf16.mxu0 %v738
  %770 = vmatpush1.bf16.msra.mxu0 %v737
  %771 = vmatprep.subr.bf16.mxu0 %v740
  %772 = vmatpush1.bf16.msra.mxu0 %v739
  %773 = vmatprep.subr.bf16.mxu0 0
  %774 = vmatpush1.bf16.msra.mxu0 0
  %775 = vmatprep.subr.bf16.mxu0 0
  %776 = vmatpush1.bf16.msra.mxu0 0
  %777 = vmatprep.subr.bf16.mxu0 0
  %778 = vmatpush1.bf16.msra.mxu0 0
  %779 = vmatprep.subr.bf16.mxu0 0
  %780 = vmatpush1.bf16.msra.mxu0 0
  %781 = vmatprep.subr.bf16.mxu0 0
  %782 = vmatpush1.bf16.msra.mxu0 0
  %783 = vmatprep.subr.bf16.mxu0 0
  %784 = vmatpush1.bf16.msra.mxu0 0
  %785 = vmatprep.subr.bf16.mxu0 0
  %786 = vmatpush1.bf16.msra.mxu0 0
  %787 = vmatprep.subr.bf16.mxu0 0
  %788 = vmatpush1.bf16.msra.mxu0 0
  %789 = vmatprep.mubr.bf16.mxu0 0
  %790 = vmatmul.mubr.bf16.gmra.mrb[0].mxu0 %v639
  %v791 = vpop.f32.mrb[0].mxu0
  %v792 = vadd.f32 %v670, %v791
  %v793 = vpop.f32.mrb[0].mxu0
  %v794 = vadd.f32 %v674, %v793
  %v795 = vpop.f32.mrb[0].mxu0
  %v796 = vadd.f32 %v670, %v795
  %v797 = vpop.f32.mrb[0].mxu0
  %v798 = vadd.f32 %v674, %v797
  %799 = vmatprep.mubr.bf16.mxu0 0
  %800 = vmatmul.mubr.bf16.gmra.mrb[0].mxu0 %v640
  %v801 = vpop.f32.mrb[0].mxu0
  %v802 = vadd.f32 %v670, %v801
  %v803 = vpop.f32.mrb[0].mxu0
  %v804 = vadd.f32 %v674, %v803
  %v805 = vpop.f32.mrb[0].mxu0
  %v806 = vadd.f32 %v670, %v805
  %v807 = vpop.f32.mrb[0].mxu0
  %v808 = vadd.f32 %v674, %v807
  %809 = vmatprep.mubr.bf16.mxu0 0
  %810 = vmatmul.mubr.bf16.gmra.mrb[0].mxu0 %v641
  %v811 = vpop.f32.mrb[0].mxu0
  %v812 = vadd.f32 %v670, %v811
  %v813 = vpop.f32.mrb[0].mxu0
  %v814 = vadd.f32 %v674, %v813
  %v815 = vpop.f32.mrb[0].mxu0
  %v816 = vadd.f32 %v670, %v815
  %v817 = vpop.f32.mrb[0].mxu0
  %v818 = vadd.f32 %v674, %v817
  %819 = vmatprep.mubr.bf16.mxu0 0
  %820 = vmatmul.mubr.bf16.gmra.mrb[0].mxu0 %v642
  %v821 = vpop.f32.mrb[0].mxu0
  %v822 = vadd.f32 %v670, %v821
  %v823 = vpop.f32.mrb[0].mxu0
  %v824 = vadd.f32 %v674, %v823
  %v825 = vpop.f32.mrb[0].mxu0
  %v826 = vadd.f32 %v670, %v825
  %v827 = vpop.f32.mrb[0].mxu0
  %v828 = vadd.f32 %v674, %v827
  %829 = vmatprep.mubr.bf16.mxu0 0
  %830 = vmatmul.mubr.bf16.gmra.mrb[0].mxu0 %v643
  %v831 = vpop.f32.mrb[0].mxu0
  %v832 = vadd.f32 %v670, %v831
  %v833 = vpop.f32.mrb[0].mxu0
  %v834 = vadd.f32 %v674, %v833
  %v835 = vpop.f32.mrb[0].mxu0
  %v836 = vadd.f32 %v670, %v835
  %v837 = vpop.f32.mrb[0].mxu0
  %v838 = vadd.f32 %v674, %v837
  %839 = vmatprep.mubr.bf16.mxu0 0
  %840 = vmatmul.mubr.bf16.gmra.mrb[0].mxu0 %v644
  %v841 = vpop.f32.mrb[0].mxu0
  %v842 = vadd.f32 %v670, %v841
  %v843 = vpop.f32.mrb[0].mxu0
  %v844 = vadd.f32 %v674, %v843
  %v845 = vpop.f32.mrb[0].mxu0
  %v846 = vadd.f32 %v670, %v845
  %v847 = vpop.f32.mrb[0].mxu0
  %v848 = vadd.f32 %v674, %v847
  %849 = vmatprep.mubr.bf16.mxu0 0
  %850 = vmatmul.mubr.bf16.gmra.mrb[0].mxu0 %v645
  %v851 = vpop.f32.mrb[0].mxu0
  %v852 = vadd.f32 %v670, %v851
  %v853 = vpop.f32.mrb[0].mxu0
  %v854 = vadd.f32 %v674, %v853
  %v855 = vpop.f32.mrb[0].mxu0
  %v856 = vadd.f32 %v670, %v855
  %v857 = vpop.f32.mrb[0].mxu0
  %v858 = vadd.f32 %v674, %v857
  %859 = vmatprep.mubr.bf16.mxu0 0
  %860 = vmatmul.mubr.bf16.gmra.mrb[0].mxu0 %v646
  %v861 = vpop.f32.mrb[0].mxu0
  %v862 = vadd.f32 %v670, %v861
  %v863 = vpop.f32.mrb[0].mxu0
  %v864 = vadd.f32 %v674, %v863
  %v865 = vpop.f32.mrb[0].mxu0
  %v866 = vadd.f32 %v670, %v865
  %v867 = vpop.f32.mrb[0].mxu0
  %v868 = vadd.f32 %v674, %v867
  %869 = vmatprep.mubr.bf16.mxu0 0
  %870 = vmatmul.mubr.bf16.gmra.mrb[0].mxu0 %v647
  %v871 = vpop.f32.mrb[0].mxu0
  %v872 = vadd.f32 %v670, %v871
  %v873 = vpop.f32.mrb[0].mxu0
  %v874 = vadd.f32 %v674, %v873
  %v875 = vpop.f32.mrb[0].mxu0
  %v876 = vadd.f32 %v670, %v875
  %v877 = vpop.f32.mrb[0].mxu0
  %v878 = vadd.f32 %v674, %v877
  %879 = vmatprep.mubr.bf16.mxu0 0
  %880 = vmatmul.mubr.bf16.gmra.mrb[0].mxu0 %v648
  %v881 = vpop.f32.mrb[0].mxu0
  %v882 = vadd.f32 %v670, %v881
  %v883 = vpop.f32.mrb[0].mxu0
  %v884 = vadd.f32 %v674, %v883
  %v885 = vpop.f32.mrb[0].mxu0
  %v886 = vadd.f32 %v670, %v885
  %v887 = vpop.f32.mrb[0].mxu0
  %v888 = vadd.f32 %v674, %v887
  %889 = vdwg.mxu0
  %v890 = vmax.f32 %v792, 0.0
  %v891 = vmax.f32 %v794, 0.0
  %v892 = vmax.f32 %v796, 0.0
  %v893 = vmax.f32 %v798, 0.0
  %v894 = vmax.f32 %v802, 0.0
  %v895 = vmax.f32 %v804, 0.0
  %v896 = vmax.f32 %v806, 0.0
  %v897 = vmax.f32 %v808, 0.0
  %v898 = vmax.f32 %v812, 0.0
  %v899 = vmax.f32 %v814, 0.0
  %v900 = vmax.f32 %v816, 0.0
  %v901 = vmax.f32 %v818, 0.0
  %v902 = vmax.f32 %v822, 0.0
  %v903 = vmax.f32 %v824, 0.0
  %v904 = vmax.f32 %v826, 0.0
  %v905 = vmax.f32 %v828, 0.0
  %v906 = vmax.f32 %v832, 0.0
  %v907 = vmax.f32 %v834, 0.0
  %v908 = vmax.f32 %v836, 0.0
  %v909 = vmax.f32 %v838, 0.0
  %v910 = vmax.f32 %v842, 0.0
  %v911 = vmax.f32 %v844, 0.0
  %v912 = vmax.f32 %v846, 0.0
  %v913 = vmax.f32 %v848, 0.0
  %v914 = vmax.f32 %v852, 0.0
  %v915 = vmax.f32 %v854, 0.0
  %v916 = vmax.f32 %v856, 0.0
  %v917 = vmax.f32 %v858, 0.0
  %v918 = vmax.f32 %v862, 0.0
  %v919 = vmax.f32 %v864, 0.0
  %v920 = vmax.f32 %v866, 0.0
  %v921 = vmax.f32 %v868, 0.0
  %v922 = vmax.f32 %v872, 0.0
  %v923 = vmax.f32 %v874, 0.0
  %v924 = vmax.f32 %v876, 0.0
  %v925 = vmax.f32 %v878, 0.0
  %v926 = vmax.f32 %v882, 0.0
  %v927 = vmax.f32 %v884, 0.0
  %v928 = vmax.f32 %v886, 0.0
  %v929 = vmax.f32 %v888, 0.0
  %v930 = vpack.c.bf16 %v892, %v890
  %v931 = vpack.c.bf16 %v893, %v891
  %v932 = vpack.c.bf16 %v896, %v894
  %v933 = vpack.c.bf16 %v897, %v895
  %v934 = vpack.c.bf16 %v900, %v898
  %v935 = vpack.c.bf16 %v901, %v899
  %v936 = vpack.c.bf16 %v904, %v902
  %v937 = vpack.c.bf16 %v905, %v903
  %v938 = vpack.c.bf16 %v908, %v906
  %v939 = vpack.c.bf16 %v909, %v907
  %v940 = vpack.c.bf16 %v912, %v910
  %v941 = vpack.c.bf16 %v913, %v911
  %v942 = vpack.c.bf16 %v916, %v914
  %v943 = vpack.c.bf16 %v917, %v915
  %v944 = vpack.c.bf16 %v920, %v918
  %v945 = vpack.c.bf16 %v921, %v919
  %v946 = vpack.c.bf16 %v924, %v922
  %v947 = vpack.c.bf16 %v925, %v923
  %v948 = vpack.c.bf16 %v928, %v926
  %v949 = vpack.c.bf16 %v929, %v927
  %v950 = vld [vmem:[%s9] sm:$0xf]
  %v951 = vld [vmem:[%s9 + $0x4] sm:$0xf]
  %v952 = vld [vmem:[%s9 + $0x8] sm:$0xf]
  %v953 = vld [vmem:[%s9 + $0xc] sm:$0xf]
  %v954 = vld [vmem:[%s9 + $0x10] sm:$0xf]
  %v955 = vld [vmem:[%s9 + $0x14] sm:$0xf]
  %v956 = vld [vmem:[%s9 + $0x18] sm:$0xf]
  %v957 = vld [vmem:[%s9 + $0x1c] sm:$0xf]
  %v958 = vld [vmem:[%s9 + $0x20] sm:$0xf]
  %v959 = vld [vmem:[%s9 + $0x24] sm:$0xf]
  %v960 = vld [vmem:[%s9 + $0x28] sm:$0xf]
  %v961 = vld [vmem:[%s9 + $0x2c] sm:$0xf]
  %v962 = vld [vmem:[%s9 + $0x30] sm:$0xf]
  %v963 = vld [vmem:[%s9 + $0x34] sm:$0xf]
  %v964 = vld [vmem:[%s9 + $0x38] sm:$0xf]
  %v965 = vld [vmem:[%s9 + $0x3c] sm:$0xf]
  %v966 = vld [vmem:[%s9 + $0x40] sm:$0xf]
  %v967 = vld [vmem:[%s9 + $0x44] sm:$0xf]
  %v968 = vld [vmem:[%s9 + $0x48] sm:$0xf]
  %v969 = vld [vmem:[%s9 + $0x4c] sm:$0xf]
  %v970 = vld [vmem:[%s9 + $0x50] sm:$0xf]
  %v971 = vld [vmem:[%s9 + $0x54] sm:$0xf]
  %v972 = vld [vmem:[%s9 + $0x58] sm:$0xf]
  %v973 = vld [vmem:[%s9 + $0x5c] sm:$0xf]
  %v974 = vld [vmem:[%s9 + $0x60] sm:$0xf]
  %v975 = vld [vmem:[%s9 + $0x64] sm:$0xf]
  %v976 = vld [vmem:[%s9 + $0x68] sm:$0xf]
  %v977 = vld [vmem:[%s9 + $0x6c] sm:$0xf]
  %v978 = vld [vmem:[%s9 + $0x70] sm:$0xf]
  %v979 = vld [vmem:[%s9 + $0x74] sm:$0xf]
  %v980 = vld [vmem:[%s9 + $0x78] sm:$0xf]
  %v981 = vld [vmem:[%s9 + $0x7c] sm:$0xf]
  %v982 = vld [vmem:[%s10] sm:$0x1]
  %v984 = vlaneseq
  %v985 = vshrl.u32 %v984, 7
  %v986 = vsub.s32 0, %v985
  %v987 = vrot.slane %v982, %v986
  %v1021 = vunpack.c.l.b16 %v950
  %v1022 = vunpack.c.l.b16 %v951
  %v1023 = vunpack.c.l.b16 %v952
  %v1024 = vunpack.c.l.b16 %v953
  %v1025 = vunpack.c.l.b16 %v954
  %v1026 = vunpack.c.l.b16 %v955
  %v1027 = vunpack.c.l.b16 %v956
  %v1028 = vunpack.c.l.b16 %v957
  %v1029 = vunpack.c.l.b16 %v958
  %v1030 = vunpack.c.l.b16 %v959
  %v1031 = vunpack.c.l.b16 %v960
  %v1032 = vunpack.c.l.b16 %v961
  %v1033 = vunpack.c.l.b16 %v962
  %v1034 = vunpack.c.l.b16 %v963
  %v1035 = vunpack.c.l.b16 %v964
  %v1036 = vunpack.c.l.b16 %v965
  %v1037 = vunpack.c.l.b16 %v966
  %v1038 = vunpack.c.l.b16 %v967
  %v1039 = vunpack.c.l.b16 %v968
  %v1040 = vunpack.c.l.b16 %v969
  %v1041 = vunpack.c.l.b16 %v970
  %v1042 = vunpack.c.l.b16 %v971
  %v1043 = vunpack.c.l.b16 %v972
  %v1044 = vunpack.c.l.b16 %v973
  %v1045 = vunpack.c.l.b16 %v974
  %v1046 = vunpack.c.l.b16 %v975
  %v1047 = vunpack.c.l.b16 %v976
  %v1048 = vunpack.c.l.b16 %v977
  %v1049 = vunpack.c.l.b16 %v978
  %v1050 = vunpack.c.l.b16 %v979
  %v1051 = vunpack.c.l.b16 %v980
  %v1052 = vunpack.c.l.b16 %v981
  %v1053 = vpack.c.b16 %v1022, %v1021
  %v1054 = vpack.c.b16 %v1024, %v1023
  %v1055 = vpack.c.b16 %v1026, %v1025
  %v1056 = vpack.c.b16 %v1028, %v1027
  %v1057 = vpack.c.b16 %v1030, %v1029
  %v1058 = vpack.c.b16 %v1032, %v1031
  %v1059 = vpack.c.b16 %v1034, %v1033
  %v1060 = vpack.c.b16 %v1036, %v1035
  %v1061 = vpack.c.b16 %v1038, %v1037
  %v1062 = vpack.c.b16 %v1040, %v1039
  %v1063 = vpack.c.b16 %v1042, %v1041
  %v1064 = vpack.c.b16 %v1044, %v1043
  %v1065 = vpack.c.b16 %v1046, %v1045
  %v1066 = vpack.c.b16 %v1048, %v1047
  %v1067 = vpack.c.b16 %v1050, %v1049
  %v1068 = vpack.c.b16 %v1052, %v1051
  %1085 = vmatprep.subr.bf16.mxu0 0
  %1086 = vmatpush1.bf16.msra.mxu0 %v1053
  %1087 = vmatprep.subr.bf16.mxu0 0
  %1088 = vmatpush1.bf16.msra.mxu0 %v1054
  %1089 = vmatprep.subr.bf16.mxu0 0
  %1090 = vmatpush1.bf16.msra.mxu0 %v1055
  %1091 = vmatprep.subr.bf16.mxu0 0
  %1092 = vmatpush1.bf16.msra.mxu0 %v1056
  %1093 = vmatprep.subr.bf16.mxu0 0
  %1094 = vmatpush1.bf16.msra.mxu0 %v1057
  %1095 = vmatprep.subr.bf16.mxu0 0
  %1096 = vmatpush1.bf16.msra.mxu0 %v1058
  %1097 = vmatprep.subr.bf16.mxu0 0
  %1098 = vmatpush1.bf16.msra.mxu0 %v1059
  %1099 = vmatprep.subr.bf16.mxu0 0
  %1100 = vmatpush1.bf16.msra.mxu0 %v1060
  %1101 = vmatprep.subr.bf16.mxu0 0
  %1102 = vmatpush1.bf16.msra.mxu0 %v1061
  %1103 = vmatprep.subr.bf16.mxu0 0
  %1104 = vmatpush1.bf16.msra.mxu0 %v1062
  %1105 = vmatprep.subr.bf16.mxu0 0
  %1106 = vmatpush1.bf16.msra.mxu0 %v1063
  %1107 = vmatprep.subr.bf16.mxu0 0
  %1108 = vmatpush1.bf16.msra.mxu0 %v1064
  %1109 = vmatprep.subr.bf16.mxu0 0
  %1110 = vmatpush1.bf16.msra.mxu0 %v1065
  %1111 = vmatprep.subr.bf16.mxu0 0
  %1112 = vmatpush1.bf16.msra.mxu0 %v1066
  %1113 = vmatprep.subr.bf16.mxu0 0
  %1114 = vmatpush1.bf16.msra.mxu0 %v1067
  %1115 = vmatprep.subr.bf16.mxu0 0
  %1116 = vmatpush1.bf16.msra.mxu0 %v1068
  %1117 = vmatprep.mubr.bf16.mxu0 %v931
  %1118 = vmatmul.mubr.bf16.gmra.mrb[0].mxu0 %v930
  %v1119 = vpop.f32.mrb[0].mxu0
  %v1120 = vadd.f32 %v987, %v1119
  %v1121 = vpop.f32.mrb[0].mxu0
  %v1122 = vpop.f32.mrb[0].mxu0
  %v1123 = vadd.f32 %v987, %v1122
  %v1124 = vpop.f32.mrb[0].mxu0
  %1125 = vmatprep.mubr.bf16.mxu0 %v933
  %1126 = vmatmul.mubr.bf16.gmra.mrb[0].mxu0 %v932
  %v1127 = vpop.f32.mrb[0].mxu0
  %v1128 = vadd.f32 %v987, %v1127
  %v1129 = vpop.f32.mrb[0].mxu0
  %v1130 = vpop.f32.mrb[0].mxu0
  %v1131 = vadd.f32 %v987, %v1130
  %v1132 = vpop.f32.mrb[0].mxu0
  %1133 = vmatprep.mubr.bf16.mxu0 %v935
  %1134 = vmatmul.mubr.bf16.gmra.mrb[0].mxu0 %v934
  %v1135 = vpop.f32.mrb[0].mxu0
  %v1136 = vadd.f32 %v987, %v1135
  %v1137 = vpop.f32.mrb[0].mxu0
  %v1138 = vpop.f32.mrb[0].mxu0
  %v1139 = vadd.f32 %v987, %v1138
  %v1140 = vpop.f32.mrb[0].mxu0
  %1141 = vmatprep.mubr.bf16.mxu0 %v937
  %1142 = vmatmul.mubr.bf16.gmra.mrb[0].mxu0 %v936
  %v1143 = vpop.f32.mrb[0].mxu0
  %v1144 = vadd.f32 %v987, %v1143
  %v1145 = vpop.f32.mrb[0].mxu0
  %v1146 = vpop.f32.mrb[0].mxu0
  %v1147 = vadd.f32 %v987, %v1146
  %v1148 = vpop.f32.mrb[0].mxu0
  %1149 = vmatprep.mubr.bf16.mxu0 %v939
  %1150 = vmatmul.mubr.bf16.gmra.mrb[0].mxu0 %v938
  %v1151 = vpop.f32.mrb[0].mxu0
  %v1152 = vadd.f32 %v987, %v1151
  %v1153 = vpop.f32.mrb[0].mxu0
  %v1154 = vpop.f32.mrb[0].mxu0
  %v1155 = vadd.f32 %v987, %v1154
  %v1156 = vpop.f32.mrb[0].mxu0
  %1157 = vmatprep.mubr.bf16.mxu0 %v941
  %1158 = vmatmul.mubr.bf16.gmra.mrb[0].mxu0 %v940
  %v1159 = vpop.f32.mrb[0].mxu0
  %v1160 = vadd.f32 %v987, %v1159
  %v1161 = vpop.f32.mrb[0].mxu0
  %v1162 = vpop.f32.mrb[0].mxu0
  %v1163 = vadd.f32 %v987, %v1162
  %v1164 = vpop.f32.mrb[0].mxu0
  %1165 = vmatprep.mubr.bf16.mxu0 %v943
  %1166 = vmatmul.mubr.bf16.gmra.mrb[0].mxu0 %v942
  %v1167 = vpop.f32.mrb[0].mxu0
  %v1168 = vadd.f32 %v987, %v1167
  %v1169 = vpop.f32.mrb[0].mxu0
  %v1170 = vpop.f32.mrb[0].mxu0
  %v1171 = vadd.f32 %v987, %v1170
  %v1172 = vpop.f32.mrb[0].mxu0
  %1173 = vmatprep.mubr.bf16.mxu0 %v945
  %1174 = vmatmul.mubr.bf16.gmra.mrb[0].mxu0 %v944
  %v1175 = vpop.f32.mrb[0].mxu0
  %v1176 = vadd.f32 %v987, %v1175
  %v1177 = vpop.f32.mrb[0].mxu0
  %v1178 = vpop.f32.mrb[0].mxu0
  %v1179 = vadd.f32 %v987, %v1178
  %v1180 = vpop.f32.mrb[0].mxu0
  %1181 = vmatprep.mubr.bf16.mxu0 %v947
  %1182 = vmatmul.mubr.bf16.gmra.mrb[0].mxu0 %v946
  %v1183 = vpop.f32.mrb[0].mxu0
  %v1184 = vadd.f32 %v987, %v1183
  %v1185 = vpop.f32.mrb[0].mxu0
  %v1186 = vpop.f32.mrb[0].mxu0
  %v1187 = vadd.f32 %v987, %v1186
  %v1188 = vpop.f32.mrb[0].mxu0
  %1189 = vmatprep.mubr.bf16.mxu0 %v949
  %1190 = vmatmul.mubr.bf16.gmra.mrb[0].mxu0 %v948
  %v1191 = vpop.f32.mrb[0].mxu0
  %v1192 = vadd.f32 %v987, %v1191
  %v1193 = vpop.f32.mrb[0].mxu0
  %v1194 = vpop.f32.mrb[0].mxu0
  %v1195 = vadd.f32 %v987, %v1194
  %v1196 = vpop.f32.mrb[0].mxu0
  %1197 = vdwg.mxu0
  %v1198 = vadd.f32 %v619, %v1120
  %v1199 = vadd.f32 %v620, %v1123
  %v1200 = vadd.f32 %v621, %v1128
  %v1201 = vadd.f32 %v622, %v1131
  %v1202 = vadd.f32 %v623, %v1136
  %v1203 = vadd.f32 %v624, %v1139
  %v1204 = vadd.f32 %v625, %v1144
  %v1205 = vadd.f32 %v626, %v1147
  %v1206 = vadd.f32 %v627, %v1152
  %v1207 = vadd.f32 %v628, %v1155
  %v1208 = vadd.f32 %v629, %v1160
  %v1209 = vadd.f32 %v630, %v1163
  %v1210 = vadd.f32 %v631, %v1168
  %v1211 = vadd.f32 %v632, %v1171
  %v1212 = vadd.f32 %v633, %v1176
  %v1213 = vadd.f32 %v634, %v1179
  %v1214 = vadd.f32 %v635, %v1184
  %v1215 = vadd.f32 %v636, %v1187
  %v1216 = vadd.f32 %v637, %v1192
  %v1217 = vadd.f32 %v638, %v1195
  %1218 = vadd.xlane.f32.xlu0 %v1198
  %v1219 = vpop.xlane.xlu0 %1218
  %1220 = vadd.xlane.f32.xlu0 %v1199
  %v1221 = vpop.xlane.xlu0 %1220
  %1222 = vadd.xlane.f32.xlu0 %v1200
  %v1223 = vpop.xlane.xlu0 %1222
  %1224 = vadd.xlane.f32.xlu0 %v1201
  %v1225 = vpop.xlane.xlu0 %1224
  %1226 = vadd.xlane.f32.xlu0 %v1202
  %v1227 = vpop.xlane.xlu0 %1226
  %1228 = vadd.xlane.f32.xlu0 %v1203
  %v1229 = vpop.xlane.xlu0 %1228
  %1230 = vadd.xlane.f32.xlu0 %v1204
  %v1231 = vpop.xlane.xlu0 %1230
  %1232 = vadd.xlane.f32.xlu0 %v1205
  %v1233 = vpop.xlane.xlu0 %1232
  %1234 = vadd.xlane.f32.xlu0 %v1206
  %v1235 = vpop.xlane.xlu0 %1234
  %1236 = vadd.xlane.f32.xlu0 %v1207
  %v1237 = vpop.xlane.xlu0 %1236
  %1238 = vadd.xlane.f32.xlu0 %v1208
  %v1239 = vpop.xlane.xlu0 %1238
  %1240 = vadd.xlane.f32.xlu0 %v1209
  %v1241 = vpop.xlane.xlu0 %1240
  %1242 = vadd.xlane.f32.xlu0 %v1210
  %v1243 = vpop.xlane.xlu0 %1242
  %1244 = vadd.xlane.f32.xlu0 %v1211
  %v1245 = vpop.xlane.xlu0 %1244
  %1246 = vadd.xlane.f32.xlu0 %v1212
  %v1247 = vpop.xlane.xlu0 %1246
  %1248 = vadd.xlane.f32.xlu0 %v1213
  %v1249 = vpop.xlane.xlu0 %1248
  %1250 = vadd.xlane.f32.xlu0 %v1214
  %v1251 = vpop.xlane.xlu0 %1250
  %1252 = vadd.xlane.f32.xlu0 %v1215
  %v1253 = vpop.xlane.xlu0 %1252
  %1254 = vadd.xlane.f32.xlu0 %v1216
  %v1255 = vpop.xlane.xlu0 %1254
  %1256 = vadd.xlane.f32.xlu0 %v1217
  %v1257 = vpop.xlane.xlu0 %1256
  %v1258 = vmul.f32 %v1219, %v404
  %v1259 = vmul.f32 %v1221, %v404
  %v1260 = vmul.f32 %v1223, %v404
  %v1261 = vmul.f32 %v1225, %v404
  %v1262 = vmul.f32 %v1227, %v404
  %v1263 = vmul.f32 %v1229, %v404
  %v1264 = vmul.f32 %v1231, %v404
  %v1265 = vmul.f32 %v1233, %v404
  %v1266 = vmul.f32 %v1235, %v404
  %v1267 = vmul.f32 %v1237, %v404
  %v1268 = vmul.f32 %v1239, %v404
  %v1269 = vmul.f32 %v1241, %v404
  %v1270 = vmul.f32 %v1243, %v404
  %v1271 = vmul.f32 %v1245, %v404
  %v1272 = vmul.f32 %v1247, %v404
  %v1273 = vmul.f32 %v1249, %v404
  %v1274 = vmul.f32 %v1251, %v404
  %v1275 = vmul.f32 %v1253, %v404
  %v1276 = vmul.f32 %v1255, %v404
  %v1277 = vmul.f32 %v1257, %v404
  %v1278 = vsub.f32 %v1198, %v1258
  %v1279 = vsub.f32 %v1199, %v1259
  %v1280 = vsub.f32 %v1200, %v1260
  %v1281 = vsub.f32 %v1201, %v1261
  %v1282 = vsub.f32 %v1202, %v1262
  %v1283 = vsub.f32 %v1203, %v1263
  %v1284 = vsub.f32 %v1204, %v1264
  %v1285 = vsub.f32 %v1205, %v1265
  %v1286 = vsub.f32 %v1206, %v1266
  %v1287 = vsub.f32 %v1207, %v1267
  %v1288 = vsub.f32 %v1208, %v1268
  %v1289 = vsub.f32 %v1209, %v1269
  %v1290 = vsub.f32 %v1210, %v1270
  %v1291 = vsub.f32 %v1211, %v1271
  %v1292 = vsub.f32 %v1212, %v1272
  %v1293 = vsub.f32 %v1213, %v1273
  %v1294 = vsub.f32 %v1214, %v1274
  %v1295 = vsub.f32 %v1215, %v1275
  %v1296 = vsub.f32 %v1216, %v1276
  %v1297 = vsub.f32 %v1217, %v1277
  %v1298 = vmul.f32 %v1278, %v1278
  %v1299 = vmul.f32 %v1279, %v1279
  %v1300 = vmul.f32 %v1280, %v1280
  %v1301 = vmul.f32 %v1281, %v1281
  %v1302 = vmul.f32 %v1282, %v1282
  %v1303 = vmul.f32 %v1283, %v1283
  %v1304 = vmul.f32 %v1284, %v1284
  %v1305 = vmul.f32 %v1285, %v1285
  %v1306 = vmul.f32 %v1286, %v1286
  %v1307 = vmul.f32 %v1287, %v1287
  %v1308 = vmul.f32 %v1288, %v1288
  %v1309 = vmul.f32 %v1289, %v1289
  %v1310 = vmul.f32 %v1290, %v1290
  %v1311 = vmul.f32 %v1291, %v1291
  %v1312 = vmul.f32 %v1292, %v1292
  %v1313 = vmul.f32 %v1293, %v1293
  %v1314 = vmul.f32 %v1294, %v1294
  %v1315 = vmul.f32 %v1295, %v1295
  %v1316 = vmul.f32 %v1296, %v1296
  %v1317 = vmul.f32 %v1297, %v1297
  %1318 = vadd.xlane.f32.xlu0 %v1298
  %v1319 = vpop.xlane.xlu0 %1318
  %1320 = vadd.xlane.f32.xlu0 %v1299
  %v1321 = vpop.xlane.xlu0 %1320
  %1322 = vadd.xlane.f32.xlu0 %v1300
  %v1323 = vpop.xlane.xlu0 %1322
  %1324 = vadd.xlane.f32.xlu0 %v1301
  %v1325 = vpop.xlane.xlu0 %1324
  %1326 = vadd.xlane.f32.xlu0 %v1302
  %v1327 = vpop.xlane.xlu0 %1326
  %1328 = vadd.xlane.f32.xlu0 %v1303
  %v1329 = vpop.xlane.xlu0 %1328
  %1330 = vadd.xlane.f32.xlu0 %v1304
  %v1331 = vpop.xlane.xlu0 %1330
  %1332 = vadd.xlane.f32.xlu0 %v1305
  %v1333 = vpop.xlane.xlu0 %1332
  %1334 = vadd.xlane.f32.xlu0 %v1306
  %v1335 = vpop.xlane.xlu0 %1334
  %1336 = vadd.xlane.f32.xlu0 %v1307
  %v1337 = vpop.xlane.xlu0 %1336
  %1338 = vadd.xlane.f32.xlu0 %v1308
  %v1339 = vpop.xlane.xlu0 %1338
  %1340 = vadd.xlane.f32.xlu0 %v1309
  %v1341 = vpop.xlane.xlu0 %1340
  %1342 = vadd.xlane.f32.xlu0 %v1310
  %v1343 = vpop.xlane.xlu0 %1342
  %1344 = vadd.xlane.f32.xlu0 %v1311
  %v1345 = vpop.xlane.xlu0 %1344
  %1346 = vadd.xlane.f32.xlu0 %v1312
  %v1347 = vpop.xlane.xlu0 %1346
  %1348 = vadd.xlane.f32.xlu0 %v1313
  %v1349 = vpop.xlane.xlu0 %1348
  %1350 = vadd.xlane.f32.xlu0 %v1314
  %v1351 = vpop.xlane.xlu0 %1350
  %1352 = vadd.xlane.f32.xlu0 %v1315
  %v1353 = vpop.xlane.xlu0 %1352
  %1354 = vadd.xlane.f32.xlu0 %v1316
  %v1355 = vpop.xlane.xlu0 %1354
  %1356 = vadd.xlane.f32.xlu0 %v1317
  %v1357 = vpop.xlane.xlu0 %1356
  %v1358 = vmul.f32 %v1319, %v404
  %v1359 = vmul.f32 %v1321, %v404
  %v1360 = vmul.f32 %v1323, %v404
  %v1361 = vmul.f32 %v1325, %v404
  %v1362 = vmul.f32 %v1327, %v404
  %v1363 = vmul.f32 %v1329, %v404
  %v1364 = vmul.f32 %v1331, %v404
  %v1365 = vmul.f32 %v1333, %v404
  %v1366 = vmul.f32 %v1335, %v404
  %v1367 = vmul.f32 %v1337, %v404
  %v1368 = vmul.f32 %v1339, %v404
  %v1369 = vmul.f32 %v1341, %v404
  %v1370 = vmul.f32 %v1343, %v404
  %v1371 = vmul.f32 %v1345, %v404
  %v1372 = vmul.f32 %v1347, %v404
  %v1373 = vmul.f32 %v1349, %v404
  %v1374 = vmul.f32 %v1351, %v404
  %v1375 = vmul.f32 %v1353, %v404
  %v1376 = vmul.f32 %v1355, %v404
  %v1377 = vmul.f32 %v1357, %v404
  %v1378 = vadd.f32 %v1358, 1e-05
  %v1379 = vadd.f32 %v1359, 1e-05
  %v1380 = vadd.f32 %v1360, 1e-05
  %v1381 = vadd.f32 %v1361, 1e-05
  %v1382 = vadd.f32 %v1362, 1e-05
  %v1383 = vadd.f32 %v1363, 1e-05
  %v1384 = vadd.f32 %v1364, 1e-05
  %v1385 = vadd.f32 %v1365, 1e-05
  %v1386 = vadd.f32 %v1366, 1e-05
  %v1387 = vadd.f32 %v1367, 1e-05
  %v1388 = vadd.f32 %v1368, 1e-05
  %v1389 = vadd.f32 %v1369, 1e-05
  %v1390 = vadd.f32 %v1370, 1e-05
  %v1391 = vadd.f32 %v1371, 1e-05
  %v1392 = vadd.f32 %v1372, 1e-05
  %v1393 = vadd.f32 %v1373, 1e-05
  %v1394 = vadd.f32 %v1374, 1e-05
  %v1395 = vadd.f32 %v1375, 1e-05
  %v1396 = vadd.f32 %v1376, 1e-05
  %v1397 = vadd.f32 %v1377, 1e-05
  %v1398 = vrsqrt.pop %v1378
  %v1399 = vrsqrt.pop %v1379
  %v1400 = vrsqrt.pop %v1380
  %v1401 = vrsqrt.pop %v1381
  %v1402 = vrsqrt.pop %v1382
  %v1403 = vrsqrt.pop %v1383
  %v1404 = vrsqrt.pop %v1384
  %v1405 = vrsqrt.pop %v1385
  %v1406 = vrsqrt.pop %v1386
  %v1407 = vrsqrt.pop %v1387
  %v1408 = vrsqrt.pop %v1388
  %v1409 = vrsqrt.pop %v1389
  %v1410 = vrsqrt.pop %v1390
  %v1411 = vrsqrt.pop %v1391
  %v1412 = vrsqrt.pop %v1392
  %v1413 = vrsqrt.pop %v1393
  %v1414 = vrsqrt.pop %v1394
  %v1415 = vrsqrt.pop %v1395
  %v1416 = vrsqrt.pop %v1396
  %v1417 = vrsqrt.pop %v1397
  %v1418 = vmul.f32 %v1278, %v1398
  %v1419 = vmul.f32 %v1279, %v1399
  %v1420 = vmul.f32 %v1280, %v1400
  %v1421 = vmul.f32 %v1281, %v1401
  %v1422 = vmul.f32 %v1282, %v1402
  %v1423 = vmul.f32 %v1283, %v1403
  %v1424 = vmul.f32 %v1284, %v1404
  %v1425 = vmul.f32 %v1285, %v1405
  %v1426 = vmul.f32 %v1286, %v1406
  %v1427 = vmul.f32 %v1287, %v1407
  %v1428 = vmul.f32 %v1288, %v1408
  %v1429 = vmul.f32 %v1289, %v1409
  %v1430 = vmul.f32 %v1290, %v1410
  %v1431 = vmul.f32 %v1291, %v1411
  %v1432 = vmul.f32 %v1292, %v1412
  %v1433 = vmul.f32 %v1293, %v1413
  %v1434 = vmul.f32 %v1294, %v1414
  %v1435 = vmul.f32 %v1295, %v1415
  %v1436 = vmul.f32 %v1296, %v1416
  %v1437 = vmul.f32 %v1297, %v1417
  %v1438 = vld [vmem:[%s11] sm:$0x1]
  %v1440 = vlaneseq
  %v1441 = vshrl.u32 %v1440, 7
  %v1442 = vsub.s32 0, %v1441
  %v1443 = vrot.slane %v1438, %v1442
  %v1445 = vmul.f32 %v1418, %v1443
  %v1446 = vmul.f32 %v1419, %v1443
  %v1447 = vmul.f32 %v1420, %v1443
  %v1448 = vmul.f32 %v1421, %v1443
  %v1449 = vmul.f32 %v1422, %v1443
  %v1450 = vmul.f32 %v1423, %v1443
  %v1451 = vmul.f32 %v1424, %v1443
  %v1452 = vmul.f32 %v1425, %v1443
  %v1453 = vmul.f32 %v1426, %v1443
  %v1454 = vmul.f32 %v1427, %v1443
  %v1455 = vmul.f32 %v1428, %v1443
  %v1456 = vmul.f32 %v1429, %v1443
  %v1457 = vmul.f32 %v1430, %v1443
  %v1458 = vmul.f32 %v1431, %v1443
  %v1459 = vmul.f32 %v1432, %v1443
  %v1460 = vmul.f32 %v1433, %v1443
  %v1461 = vmul.f32 %v1434, %v1443
  %v1462 = vmul.f32 %v1435, %v1443
  %v1463 = vmul.f32 %v1436, %v1443
  %v1464 = vmul.f32 %v1437, %v1443
  %v1465 = vld [vmem:[%s12] sm:$0x1]
  %v1467 = vlaneseq
  %v1468 = vshrl.u32 %v1467, 7
  %v1469 = vsub.s32 0, %v1468
  %v1470 = vrot.slane %v1465, %v1469
  %v1472 = vadd.f32 %v1445, %v1470
  %v1473 = vadd.f32 %v1446, %v1470
  %v1474 = vadd.f32 %v1447, %v1470
  %v1475 = vadd.f32 %v1448, %v1470
  %v1476 = vadd.f32 %v1449, %v1470
  %v1477 = vadd.f32 %v1450, %v1470
  %v1478 = vadd.f32 %v1451, %v1470
  %v1479 = vadd.f32 %v1452, %v1470
  %v1480 = vadd.f32 %v1453, %v1470
  %v1481 = vadd.f32 %v1454, %v1470
  %v1482 = vadd.f32 %v1455, %v1470
  %v1483 = vadd.f32 %v1456, %v1470
  %v1484 = vadd.f32 %v1457, %v1470
  %v1485 = vadd.f32 %v1458, %v1470
  %v1486 = vadd.f32 %v1459, %v1470
  %v1487 = vadd.f32 %v1460, %v1470
  %v1488 = vadd.f32 %v1461, %v1470
  %v1489 = vadd.f32 %v1462, %v1470
  %v1490 = vadd.f32 %v1463, %v1470
  %v1491 = vadd.f32 %v1464, %v1470
  %1492 = vst [vmem:[%s17] sm:$0xff] %v1472
  %1493 = vst [vmem:[%s17 + $0x8] sm:$0xff] %v1473
  %1494 = vst [vmem:[%s17 + $0x10] sm:$0xff] %v1474
  %1495 = vst [vmem:[%s17 + $0x18] sm:$0xff] %v1475
  %1496 = vst [vmem:[%s17 + $0x20] sm:$0xff] %v1476
  %1497 = vst [vmem:[%s17 + $0x28] sm:$0xff] %v1477
  %1498 = vst [vmem:[%s17 + $0x30] sm:$0xff] %v1478
  %1499 = vst [vmem:[%s17 + $0x38] sm:$0xff] %v1479
  %1500 = vst [vmem:[%s17 + $0x40] sm:$0xff] %v1480
  %1501 = vst [vmem:[%s17 + $0x48] sm:$0xff] %v1481
  %1502 = vst [vmem:[%s17 + $0x50] sm:$0xff] %v1482
  %1503 = vst [vmem:[%s17 + $0x58] sm:$0xff] %v1483
  %1504 = vst [vmem:[%s17 + $0x60] sm:$0xff] %v1484
  %1505 = vst [vmem:[%s17 + $0x68] sm:$0xff] %v1485
  %1506 = vst [vmem:[%s17 + $0x70] sm:$0xff] %v1486
  %1507 = vst [vmem:[%s17 + $0x78] sm:$0xff] %v1487
  %1508 = vst [vmem:[%s17 + $0x80] sm:$0xff] %v1488
  %1509 = vst [vmem:[%s17 + $0x88] sm:$0xff] %v1489
  %1510 = vst [vmem:[%s17 + $0x90] sm:$0xff] %v1490
  %1511 = vst [vmem:[%s17 + $0x98] sm:$0xff] %v1491
  %v1512 = vld [vmem:[%s2] sm:$0xff]
  %v1513 = vld [vmem:[%s2 + $0x8] sm:$0xff]
  %v1514 = vld [vmem:[%s2 + $0x10] sm:$0xff]
  %v1515 = vld [vmem:[%s2 + $0x18] sm:$0xff]
  %v1516 = vld [vmem:[%s2 + $0x20] sm:$0xff]
  %v1517 = vld [vmem:[%s2 + $0x28] sm:$0xff]
  %v1518 = vld [vmem:[%s2 + $0x30] sm:$0xff]
  %v1519 = vld [vmem:[%s2 + $0x38] sm:$0xff]
  %v1520 = vld [vmem:[%s2 + $0x40] sm:$0xff]
  %v1521 = vld [vmem:[%s2 + $0x48] sm:$0xff]
  %v1522 = vld [vmem:[%s2 + $0x50] sm:$0xff]
  %v1523 = vld [vmem:[%s2 + $0x58] sm:$0xff]
  %v1524 = vld [vmem:[%s2 + $0x60] sm:$0xff]
  %v1525 = vld [vmem:[%s2 + $0x68] sm:$0xff]
  %v1526 = vld [vmem:[%s2 + $0x70] sm:$0xff]
  %v1527 = vld [vmem:[%s2 + $0x78] sm:$0xff]
  %v1528 = vld [vmem:[%s2 + $0x80] sm:$0xff]
  %v1529 = vld [vmem:[%s2 + $0x88] sm:$0xff]
  %v1530 = vld [vmem:[%s2 + $0x90] sm:$0xff]
  %v1531 = vld [vmem:[%s2 + $0x98] sm:$0xff]
  %v1532 = vadd.f32 %v1472, %v1512
  %v1533 = vadd.f32 %v1473, %v1513
  %v1534 = vadd.f32 %v1474, %v1514
  %v1535 = vadd.f32 %v1475, %v1515
  %v1536 = vadd.f32 %v1476, %v1516
  %v1537 = vadd.f32 %v1477, %v1517
  %v1538 = vadd.f32 %v1478, %v1518
  %v1539 = vadd.f32 %v1479, %v1519
  %v1540 = vadd.f32 %v1480, %v1520
  %v1541 = vadd.f32 %v1481, %v1521
  %v1542 = vadd.f32 %v1482, %v1522
  %v1543 = vadd.f32 %v1483, %v1523
  %v1544 = vadd.f32 %v1484, %v1524
  %v1545 = vadd.f32 %v1485, %v1525
  %v1546 = vadd.f32 %v1486, %v1526
  %v1547 = vadd.f32 %v1487, %v1527
  %v1548 = vadd.f32 %v1488, %v1528
  %v1549 = vadd.f32 %v1489, %v1529
  %v1550 = vadd.f32 %v1490, %v1530
  %v1551 = vadd.f32 %v1491, %v1531
  %v1552 = vpack.c.bf16 %v1473, %v1472
  %v1553 = vpack.c.bf16 %v1475, %v1474
  %v1554 = vpack.c.bf16 %v1477, %v1476
  %v1555 = vpack.c.bf16 %v1479, %v1478
  %v1556 = vpack.c.bf16 %v1481, %v1480
  %v1557 = vpack.c.bf16 %v1483, %v1482
  %v1558 = vpack.c.bf16 %v1485, %v1484
  %v1559 = vpack.c.bf16 %v1487, %v1486
  %v1560 = vpack.c.bf16 %v1489, %v1488
  %v1561 = vpack.c.bf16 %v1491, %v1490
  %v1562 = vld [vmem:[%s13] sm:$0xf]
  %v1563 = vld [vmem:[%s13 + $0x4] sm:$0xf]
  %v1564 = vld [vmem:[%s13 + $0x8] sm:$0xf]
  %v1565 = vld [vmem:[%s13 + $0xc] sm:$0xf]
  %v1566 = vld [vmem:[%s13 + $0x10] sm:$0xf]
  %v1567 = vld [vmem:[%s13 + $0x14] sm:$0xf]
  %v1568 = vld [vmem:[%s13 + $0x18] sm:$0xf]
  %v1569 = vld [vmem:[%s13 + $0x1c] sm:$0xf]
  %v1570 = vld [vmem:[%s13 + $0x20] sm:$0xf]
  %v1571 = vld [vmem:[%s13 + $0x24] sm:$0xf]
  %v1572 = vld [vmem:[%s13 + $0x28] sm:$0xf]
  %v1573 = vld [vmem:[%s13 + $0x2c] sm:$0xf]
  %v1574 = vld [vmem:[%s13 + $0x30] sm:$0xf]
  %v1575 = vld [vmem:[%s13 + $0x34] sm:$0xf]
  %v1576 = vld [vmem:[%s13 + $0x38] sm:$0xf]
  %v1577 = vld [vmem:[%s13 + $0x3c] sm:$0xf]
  %v1578 = vld [vmem:[%s15] sm:$0x1]
  %v1580 = vlaneseq
  %v1581 = vshrl.u32 %v1580, 7
  %v1582 = vsub.s32 0, %v1581
  %v1583 = vrot.slane %v1578, %v1582
  %v1601 = vunpack.c.l.b16 %v1562
  %v1602 = vunpack.c.l.b16 %v1563
  %v1603 = vunpack.c.l.b16 %v1564
  %v1604 = vunpack.c.l.b16 %v1565
  %v1605 = vunpack.c.l.b16 %v1566
  %v1606 = vunpack.c.l.b16 %v1567
  %v1607 = vunpack.c.l.b16 %v1568
  %v1608 = vunpack.c.l.b16 %v1569
  %v1609 = vunpack.c.l.b16 %v1570
  %v1610 = vunpack.c.l.b16 %v1571
  %v1611 = vunpack.c.l.b16 %v1572
  %v1612 = vunpack.c.l.b16 %v1573
  %v1613 = vunpack.c.l.b16 %v1574
  %v1614 = vunpack.c.l.b16 %v1575
  %v1615 = vunpack.c.l.b16 %v1576
  %v1616 = vunpack.c.l.b16 %v1577
  %v1617 = vpack.c.b16 %v1602, %v1601
  %v1618 = vpack.c.b16 %v1604, %v1603
  %v1619 = vpack.c.b16 %v1606, %v1605
  %v1620 = vpack.c.b16 %v1608, %v1607
  %v1621 = vpack.c.b16 %v1610, %v1609
  %v1622 = vpack.c.b16 %v1612, %v1611
  %v1623 = vpack.c.b16 %v1614, %v1613
  %v1624 = vpack.c.b16 %v1616, %v1615
  %1633 = vmatprep.subr.bf16.mxu0 0
  %1634 = vmatpush1.bf16.msra.mxu0 %v1617
  %1635 = vmatprep.subr.bf16.mxu0 0
  %1636 = vmatpush1.bf16.msra.mxu0 %v1618
  %1637 = vmatprep.subr.bf16.mxu0 0
  %1638 = vmatpush1.bf16.msra.mxu0 %v1619
  %1639 = vmatprep.subr.bf16.mxu0 0
  %1640 = vmatpush1.bf16.msra.mxu0 %v1620
  %1641 = vmatprep.subr.bf16.mxu0 0
  %1642 = vmatpush1.bf16.msra.mxu0 %v1621
  %1643 = vmatprep.subr.bf16.mxu0 0
  %1644 = vmatpush1.bf16.msra.mxu0 %v1622
  %1645 = vmatprep.subr.bf16.mxu0 0
  %1646 = vmatpush1.bf16.msra.mxu0 %v1623
  %1647 = vmatprep.subr.bf16.mxu0 0
  %1648 = vmatpush1.bf16.msra.mxu0 %v1624
  %1649 = vmatprep.subr.bf16.mxu0 0
  %1650 = vmatpush1.bf16.msra.mxu0 0
  %1651 = vmatprep.subr.bf16.mxu0 0
  %1652 = vmatpush1.bf16.msra.mxu0 0
  %1653 = vmatprep.subr.bf16.mxu0 0
  %1654 = vmatpush1.bf16.msra.mxu0 0
  %1655 = vmatprep.subr.bf16.mxu0 0
  %1656 = vmatpush1.bf16.msra.mxu0 0
  %1657 = vmatprep.subr.bf16.mxu0 0
  %1658 = vmatpush1.bf16.msra.mxu0 0
  %1659 = vmatprep.subr.bf16.mxu0 0
  %1660 = vmatpush1.bf16.msra.mxu0 0
  %1661 = vmatprep.subr.bf16.mxu0 0
  %1662 = vmatpush1.bf16.msra.mxu0 0
  %1663 = vmatprep.subr.bf16.mxu0 0
  %1664 = vmatpush1.bf16.msra.mxu0 0
  %1665 = vmatprep.mubr.bf16.mxu0 0
  %1666 = vmatmul.mubr.bf16.gmra.mrb[0].mxu0 %v1552
  %v1667 = vpop.f32.mrb[0].mxu0
  %v1668 = vadd.f32 %v1583, %v1667
  %v1669 = vpop.f32.mrb[0].mxu0
  %v1670 = vpop.f32.mrb[0].mxu0
  %v1671 = vadd.f32 %v1583, %v1670
  %v1672 = vpop.f32.mrb[0].mxu0
  %1673 = vmatprep.mubr.bf16.mxu0 0
  %1674 = vmatmul.mubr.bf16.gmra.mrb[0].mxu0 %v1553
  %v1675 = vpop.f32.mrb[0].mxu0
  %v1676 = vadd.f32 %v1583, %v1675
  %v1677 = vpop.f32.mrb[0].mxu0
  %v1678 = vpop.f32.mrb[0].mxu0
  %v1679 = vadd.f32 %v1583, %v1678
  %v1680 = vpop.f32.mrb[0].mxu0
  %1681 = vmatprep.mubr.bf16.mxu0 0
  %1682 = vmatmul.mubr.bf16.gmra.mrb[0].mxu0 %v1554
  %v1683 = vpop.f32.mrb[0].mxu0
  %v1684 = vadd.f32 %v1583, %v1683
  %v1685 = vpop.f32.mrb[0].mxu0
  %v1686 = vpop.f32.mrb[0].mxu0
  %v1687 = vadd.f32 %v1583, %v1686
  %v1688 = vpop.f32.mrb[0].mxu0
  %1689 = vmatprep.mubr.bf16.mxu0 0
  %1690 = vmatmul.mubr.bf16.gmra.mrb[0].mxu0 %v1555
  %v1691 = vpop.f32.mrb[0].mxu0
  %v1692 = vadd.f32 %v1583, %v1691
  %v1693 = vpop.f32.mrb[0].mxu0
  %v1694 = vpop.f32.mrb[0].mxu0
  %v1695 = vadd.f32 %v1583, %v1694
  %v1696 = vpop.f32.mrb[0].mxu0
  %1697 = vmatprep.mubr.bf16.mxu0 0
  %1698 = vmatmul.mubr.bf16.gmra.mrb[0].mxu0 %v1556
  %v1699 = vpop.f32.mrb[0].mxu0
  %v1700 = vadd.f32 %v1583, %v1699
  %v1701 = vpop.f32.mrb[0].mxu0
  %v1702 = vpop.f32.mrb[0].mxu0
  %v1703 = vadd.f32 %v1583, %v1702
  %v1704 = vpop.f32.mrb[0].mxu0
  %1705 = vmatprep.mubr.bf16.mxu0 0
  %1706 = vmatmul.mubr.bf16.gmra.mrb[0].mxu0 %v1557
  %v1707 = vpop.f32.mrb[0].mxu0
  %v1708 = vadd.f32 %v1583, %v1707
  %v1709 = vpop.f32.mrb[0].mxu0
  %v1710 = vpop.f32.mrb[0].mxu0
  %v1711 = vadd.f32 %v1583, %v1710
  %v1712 = vpop.f32.mrb[0].mxu0
  %1713 = vmatprep.mubr.bf16.mxu0 0
  %1714 = vmatmul.mubr.bf16.gmra.mrb[0].mxu0 %v1558
  %v1715 = vpop.f32.mrb[0].mxu0
  %v1716 = vadd.f32 %v1583, %v1715
  %v1717 = vpop.f32.mrb[0].mxu0
  %v1718 = vpop.f32.mrb[0].mxu0
  %v1719 = vadd.f32 %v1583, %v1718
  %v1720 = vpop.f32.mrb[0].mxu0
  %1721 = vmatprep.mubr.bf16.mxu0 0
  %1722 = vmatmul.mubr.bf16.gmra.mrb[0].mxu0 %v1559
  %v1723 = vpop.f32.mrb[0].mxu0
  %v1724 = vadd.f32 %v1583, %v1723
  %v1725 = vpop.f32.mrb[0].mxu0
  %v1726 = vpop.f32.mrb[0].mxu0
  %v1727 = vadd.f32 %v1583, %v1726
  %v1728 = vpop.f32.mrb[0].mxu0
  %1729 = vmatprep.mubr.bf16.mxu0 0
  %1730 = vmatmul.mubr.bf16.gmra.mrb[0].mxu0 %v1560
  %v1731 = vpop.f32.mrb[0].mxu0
  %v1732 = vadd.f32 %v1583, %v1731
  %v1733 = vpop.f32.mrb[0].mxu0
  %v1734 = vpop.f32.mrb[0].mxu0
  %v1735 = vadd.f32 %v1583, %v1734
  %v1736 = vpop.f32.mrb[0].mxu0
  %1737 = vmatprep.mubr.bf16.mxu0 0
  %1738 = vmatmul.mubr.bf16.gmra.mrb[0].mxu0 %v1561
  %v1739 = vpop.f32.mrb[0].mxu0
  %v1740 = vadd.f32 %v1583, %v1739
  %v1741 = vpop.f32.mrb[0].mxu0
  %v1742 = vpop.f32.mrb[0].mxu0
  %v1743 = vadd.f32 %v1583, %v1742
  %v1744 = vpop.f32.mrb[0].mxu0
  %1745 = vdwg.mxu0
  %v1746 = vpack.c.bf16 %v1533, %v1532
  %v1747 = vpack.c.bf16 %v1535, %v1534
  %v1748 = vpack.c.bf16 %v1537, %v1536
  %v1749 = vpack.c.bf16 %v1539, %v1538
  %v1750 = vpack.c.bf16 %v1541, %v1540
  %v1751 = vpack.c.bf16 %v1543, %v1542
  %v1752 = vpack.c.bf16 %v1545, %v1544
  %v1753 = vpack.c.bf16 %v1547, %v1546
  %v1754 = vpack.c.bf16 %v1549, %v1548
  %v1755 = vpack.c.bf16 %v1551, %v1550
  %v1756 = vld [vmem:[%s14] sm:$0xf]
  %v1757 = vld [vmem:[%s14 + $0x4] sm:$0xf]
  %v1758 = vld [vmem:[%s14 + $0x8] sm:$0xf]
  %v1759 = vld [vmem:[%s14 + $0xc] sm:$0xf]
  %v1760 = vld [vmem:[%s14 + $0x10] sm:$0xf]
  %v1761 = vld [vmem:[%s14 + $0x14] sm:$0xf]
  %v1762 = vld [vmem:[%s14 + $0x18] sm:$0xf]
  %v1763 = vld [vmem:[%s14 + $0x1c] sm:$0xf]
  %v1764 = vld [vmem:[%s14 + $0x20] sm:$0xf]
  %v1765 = vld [vmem:[%s14 + $0x24] sm:$0xf]
  %v1766 = vld [vmem:[%s14 + $0x28] sm:$0xf]
  %v1767 = vld [vmem:[%s14 + $0x2c] sm:$0xf]
  %v1768 = vld [vmem:[%s14 + $0x30] sm:$0xf]
  %v1769 = vld [vmem:[%s14 + $0x34] sm:$0xf]
  %v1770 = vld [vmem:[%s14 + $0x38] sm:$0xf]
  %v1771 = vld [vmem:[%s14 + $0x3c] sm:$0xf]
  %v1772 = vld [vmem:[%s16] sm:$0x1]
  %v1774 = vlaneseq
  %v1775 = vshrl.u32 %v1774, 7
  %v1776 = vsub.s32 0, %v1775
  %v1777 = vrot.slane %v1772, %v1776
  %v1795 = vunpack.c.l.b16 %v1756
  %v1796 = vunpack.c.l.b16 %v1757
  %v1797 = vunpack.c.l.b16 %v1758
  %v1798 = vunpack.c.l.b16 %v1759
  %v1799 = vunpack.c.l.b16 %v1760
  %v1800 = vunpack.c.l.b16 %v1761
  %v1801 = vunpack.c.l.b16 %v1762
  %v1802 = vunpack.c.l.b16 %v1763
  %v1803 = vunpack.c.l.b16 %v1764
  %v1804 = vunpack.c.l.b16 %v1765
  %v1805 = vunpack.c.l.b16 %v1766
  %v1806 = vunpack.c.l.b16 %v1767
  %v1807 = vunpack.c.l.b16 %v1768
  %v1808 = vunpack.c.l.b16 %v1769
  %v1809 = vunpack.c.l.b16 %v1770
  %v1810 = vunpack.c.l.b16 %v1771
  %v1811 = vpack.c.b16 %v1796, %v1795
  %v1812 = vpack.c.b16 %v1798, %v1797
  %v1813 = vpack.c.b16 %v1800, %v1799
  %v1814 = vpack.c.b16 %v1802, %v1801
  %v1815 = vpack.c.b16 %v1804, %v1803
  %v1816 = vpack.c.b16 %v1806, %v1805
  %v1817 = vpack.c.b16 %v1808, %v1807
  %v1818 = vpack.c.b16 %v1810, %v1809
  %1827 = vmatprep.subr.bf16.mxu0 0
  %1828 = vmatpush1.bf16.msra.mxu0 %v1811
  %1829 = vmatprep.subr.bf16.mxu0 0
  %1830 = vmatpush1.bf16.msra.mxu0 %v1812
  %1831 = vmatprep.subr.bf16.mxu0 0
  %1832 = vmatpush1.bf16.msra.mxu0 %v1813
  %1833 = vmatprep.subr.bf16.mxu0 0
  %1834 = vmatpush1.bf16.msra.mxu0 %v1814
  %1835 = vmatprep.subr.bf16.mxu0 0
  %1836 = vmatpush1.bf16.msra.mxu0 %v1815
  %1837 = vmatprep.subr.bf16.mxu0 0
  %1838 = vmatpush1.bf16.msra.mxu0 %v1816
  %1839 = vmatprep.subr.bf16.mxu0 0
  %1840 = vmatpush1.bf16.msra.mxu0 %v1817
  %1841 = vmatprep.subr.bf16.mxu0 0
  %1842 = vmatpush1.bf16.msra.mxu0 %v1818
  %1843 = vmatprep.subr.bf16.mxu0 0
  %1844 = vmatpush1.bf16.msra.mxu0 0
  %1845 = vmatprep.subr.bf16.mxu0 0
  %1846 = vmatpush1.bf16.msra.mxu0 0
  %1847 = vmatprep.subr.bf16.mxu0 0
  %1848 = vmatpush1.bf16.msra.mxu0 0
  %1849 = vmatprep.subr.bf16.mxu0 0
  %1850 = vmatpush1.bf16.msra.mxu0 0
  %1851 = vmatprep.subr.bf16.mxu0 0
  %1852 = vmatpush1.bf16.msra.mxu0 0
  %1853 = vmatprep.subr.bf16.mxu0 0
  %1854 = vmatpush1.bf16.msra.mxu0 0
  %1855 = vmatprep.subr.bf16.mxu0 0
  %1856 = vmatpush1.bf16.msra.mxu0 0
  %1857 = vmatprep.subr.bf16.mxu0 0
  %1858 = vmatpush1.bf16.msra.mxu0 0
  %1859 = vmatprep.mubr.bf16.mxu0 0
  %1860 = vmatmul.mubr.bf16.gmra.mrb[0].mxu0 %v1746
  %v1861 = vpop.f32.mrb[0].mxu0
  %v1862 = vadd.f32 %v1777, %v1861
  %v1863 = vpop.f32.mrb[0].mxu0
  %v1864 = vpop.f32.mrb[0].mxu0
  %v1865 = vadd.f32 %v1777, %v1864
  %v1866 = vpop.f32.mrb[0].mxu0
  %1867 = vmatprep.mubr.bf16.mxu0 0
  %1868 = vmatmul.mubr.bf16.gmra.mrb[0].mxu0 %v1747
  %v1869 = vpop.f32.mrb[0].mxu0
  %v1870 = vadd.f32 %v1777, %v1869
  %v1871 = vpop.f32.mrb[0].mxu0
  %v1872 = vpop.f32.mrb[0].mxu0
  %v1873 = vadd.f32 %v1777, %v1872
  %v1874 = vpop.f32.mrb[0].mxu0
  %1875 = vmatprep.mubr.bf16.mxu0 0
  %1876 = vmatmul.mubr.bf16.gmra.mrb[0].mxu0 %v1748
  %v1877 = vpop.f32.mrb[0].mxu0
  %v1878 = vadd.f32 %v1777, %v1877
  %v1879 = vpop.f32.mrb[0].mxu0
  %v1880 = vpop.f32.mrb[0].mxu0
  %v1881 = vadd.f32 %v1777, %v1880
  %v1882 = vpop.f32.mrb[0].mxu0
  %1883 = vmatprep.mubr.bf16.mxu0 0
  %1884 = vmatmul.mubr.bf16.gmra.mrb[0].mxu0 %v1749
  %v1885 = vpop.f32.mrb[0].mxu0
  %v1886 = vadd.f32 %v1777, %v1885
  %v1887 = vpop.f32.mrb[0].mxu0
  %v1888 = vpop.f32.mrb[0].mxu0
  %v1889 = vadd.f32 %v1777, %v1888
  %v1890 = vpop.f32.mrb[0].mxu0
  %1891 = vmatprep.mubr.bf16.mxu0 0
  %1892 = vmatmul.mubr.bf16.gmra.mrb[0].mxu0 %v1750
  %v1893 = vpop.f32.mrb[0].mxu0
  %v1894 = vadd.f32 %v1777, %v1893
  %v1895 = vpop.f32.mrb[0].mxu0
  %v1896 = vpop.f32.mrb[0].mxu0
  %v1897 = vadd.f32 %v1777, %v1896
  %v1898 = vpop.f32.mrb[0].mxu0
  %1899 = vmatprep.mubr.bf16.mxu0 0
  %1900 = vmatmul.mubr.bf16.gmra.mrb[0].mxu0 %v1751
  %v1901 = vpop.f32.mrb[0].mxu0
  %v1902 = vadd.f32 %v1777, %v1901
  %v1903 = vpop.f32.mrb[0].mxu0
  %v1904 = vpop.f32.mrb[0].mxu0
  %v1905 = vadd.f32 %v1777, %v1904
  %v1906 = vpop.f32.mrb[0].mxu0
  %1907 = vmatprep.mubr.bf16.mxu0 0
  %1908 = vmatmul.mubr.bf16.gmra.mrb[0].mxu0 %v1752
  %v1909 = vpop.f32.mrb[0].mxu0
  %v1910 = vadd.f32 %v1777, %v1909
  %v1911 = vpop.f32.mrb[0].mxu0
  %v1912 = vpop.f32.mrb[0].mxu0
  %v1913 = vadd.f32 %v1777, %v1912
  %v1914 = vpop.f32.mrb[0].mxu0
  %1915 = vmatprep.mubr.bf16.mxu0 0
  %1916 = vmatmul.mubr.bf16.gmra.mrb[0].mxu0 %v1753
  %v1917 = vpop.f32.mrb[0].mxu0
  %v1918 = vadd.f32 %v1777, %v1917
  %v1919 = vpop.f32.mrb[0].mxu0
  %v1920 = vpop.f32.mrb[0].mxu0
  %v1921 = vadd.f32 %v1777, %v1920
  %v1922 = vpop.f32.mrb[0].mxu0
  %1923 = vmatprep.mubr.bf16.mxu0 0
  %1924 = vmatmul.mubr.bf16.gmra.mrb[0].mxu0 %v1754
  %v1925 = vpop.f32.mrb[0].mxu0
  %v1926 = vadd.f32 %v1777, %v1925
  %v1927 = vpop.f32.mrb[0].mxu0
  %v1928 = vpop.f32.mrb[0].mxu0
  %v1929 = vadd.f32 %v1777, %v1928
  %v1930 = vpop.f32.mrb[0].mxu0
  %1931 = vmatprep.mubr.bf16.mxu0 0
  %1932 = vmatmul.mubr.bf16.gmra.mrb[0].mxu0 %v1755
  %v1933 = vpop.f32.mrb[0].mxu0
  %v1934 = vadd.f32 %v1777, %v1933
  %v1935 = vpop.f32.mrb[0].mxu0
  %v1936 = vpop.f32.mrb[0].mxu0
  %v1937 = vadd.f32 %v1777, %v1936
  %v1938 = vpop.f32.mrb[0].mxu0
  %1939 = vdwg.mxu0
  %v1940 = vpack.c.bf16 %v1671, %v1668
  %v1941 = vpack.c.bf16 %v1679, %v1676
  %v1942 = vpack.c.bf16 %v1687, %v1684
  %v1943 = vpack.c.bf16 %v1695, %v1692
  %v1944 = vpack.c.bf16 %v1703, %v1700
  %v1945 = vpack.c.bf16 %v1711, %v1708
  %v1946 = vpack.c.bf16 %v1719, %v1716
  %v1947 = vpack.c.bf16 %v1727, %v1724
  %v1948 = vpack.c.bf16 %v1735, %v1732
  %v1949 = vpack.c.bf16 %v1743, %v1740
  %v1960 = vunpack.c.l.b16 %v1940
  %v1961 = vunpack.c.h.b16 %v1940
  %v1962 = vunpack.c.l.b16 %v1941
  %v1963 = vunpack.c.h.b16 %v1941
  %v1964 = vunpack.c.l.b16 %v1942
  %v1965 = vunpack.c.h.b16 %v1942
  %v1966 = vunpack.c.l.b16 %v1943
  %v1967 = vunpack.c.h.b16 %v1943
  %v1968 = vunpack.c.l.b16 %v1944
  %v1969 = vunpack.c.h.b16 %v1944
  %v1970 = vunpack.c.l.b16 %v1945
  %v1971 = vunpack.c.h.b16 %v1945
  %v1972 = vunpack.c.l.b16 %v1946
  %v1973 = vunpack.c.h.b16 %v1946
  %v1974 = vunpack.c.l.b16 %v1947
  %v1975 = vunpack.c.h.b16 %v1947
  %v1976 = vunpack.c.l.b16 %v1948
  %v1977 = vunpack.c.h.b16 %v1948
  %v1978 = vunpack.c.l.b16 %v1949
  %v1979 = vunpack.c.h.b16 %v1949
  %v1980 = vpack.c.b16 %v1960, %v1960
  %v1981 = vpack.c.b16 %v1961, %v1961
  %v1982 = vpack.c.b16 %v1962, %v1962
  %v1983 = vpack.c.b16 %v1963, %v1963
  %v1984 = vpack.c.b16 %v1964, %v1964
  %v1985 = vpack.c.b16 %v1965, %v1965
  %v1986 = vpack.c.b16 %v1966, %v1966
  %v1987 = vpack.c.b16 %v1967, %v1967
  %v1988 = vpack.c.b16 %v1968, %v1968
  %v1989 = vpack.c.b16 %v1969, %v1969
  %v1990 = vpack.c.b16 %v1970, %v1970
  %v1991 = vpack.c.b16 %v1971, %v1971
  %v1992 = vpack.c.b16 %v1972, %v1972
  %v1993 = vpack.c.b16 %v1973, %v1973
  %v1994 = vpack.c.b16 %v1974, %v1974
  %v1995 = vpack.c.b16 %v1975, %v1975
  %v1996 = vpack.c.b16 %v1976, %v1976
  %v1997 = vpack.c.b16 %v1977, %v1977
  %v1998 = vpack.c.b16 %v1978, %v1978
  %v1999 = vpack.c.b16 %v1979, %v1979
  %2020 = vst [vmem:[%s18] sm:$0xf] %v1980
  %2021 = vst [vmem:[%s18 + $0x4] sm:$0xf] %v1981
  %2022 = vst [vmem:[%s18 + $0x8] sm:$0xf] %v1982
  %2023 = vst [vmem:[%s18 + $0xc] sm:$0xf] %v1983
  %2024 = vst [vmem:[%s18 + $0x10] sm:$0xf] %v1984
  %2025 = vst [vmem:[%s18 + $0x14] sm:$0xf] %v1985
  %2026 = vst [vmem:[%s18 + $0x18] sm:$0xf] %v1986
  %2027 = vst [vmem:[%s18 + $0x1c] sm:$0xf] %v1987
  %2028 = vst [vmem:[%s18 + $0x20] sm:$0xf] %v1988
  %2029 = vst [vmem:[%s18 + $0x24] sm:$0xf] %v1989
  %2030 = vst [vmem:[%s18 + $0x28] sm:$0xf] %v1990
  %2031 = vst [vmem:[%s18 + $0x2c] sm:$0xf] %v1991
  %2032 = vst [vmem:[%s18 + $0x30] sm:$0xf] %v1992
  %2033 = vst [vmem:[%s18 + $0x34] sm:$0xf] %v1993
  %2034 = vst [vmem:[%s18 + $0x38] sm:$0xf] %v1994
  %2035 = vst [vmem:[%s18 + $0x3c] sm:$0xf] %v1995
  %2036 = vst [vmem:[%s18 + $0x40] sm:$0xf] %v1996
  %2037 = vst [vmem:[%s18 + $0x44] sm:$0xf] %v1997
  %2038 = vst [vmem:[%s18 + $0x48] sm:$0xf] %v1998
  %2039 = vst [vmem:[%s18 + $0x4c] sm:$0xf] %v1999
  %vm2040 = vcmask 785408
  %2041 = vst.msk [vmem:[%s19] sm:$0xff] %vm2040, %v1862
  %2042 = vst.msk [vmem:[%s19 + $0x8] sm:$0xff] %vm2040, %v1865
  %2043 = vst.msk [vmem:[%s19 + $0x10] sm:$0xff] %vm2040, %v1870
  %2044 = vst.msk [vmem:[%s19 + $0x18] sm:$0xff] %vm2040, %v1873
  %2045 = vst.msk [vmem:[%s19 + $0x20] sm:$0xff] %vm2040, %v1878
  %2046 = vst.msk [vmem:[%s19 + $0x28] sm:$0xff] %vm2040, %v1881
  %2047 = vst.msk [vmem:[%s19 + $0x30] sm:$0xff] %vm2040, %v1886
  %2048 = vst.msk [vmem:[%s19 + $0x38] sm:$0xff] %vm2040, %v1889
  %2049 = vst.msk [vmem:[%s19 + $0x40] sm:$0xff] %vm2040, %v1894
  %2050 = vst.msk [vmem:[%s19 + $0x48] sm:$0xff] %vm2040, %v1897
  %2051 = vst.msk [vmem:[%s19 + $0x50] sm:$0xff] %vm2040, %v1902
  %2052 = vst.msk [vmem:[%s19 + $0x58] sm:$0xff] %vm2040, %v1905
  %2053 = vst.msk [vmem:[%s19 + $0x60] sm:$0xff] %vm2040, %v1910
  %2054 = vst.msk [vmem:[%s19 + $0x68] sm:$0xff] %vm2040, %v1913
  %2055 = vst.msk [vmem:[%s19 + $0x70] sm:$0xff] %vm2040, %v1918
  %2056 = vst.msk [vmem:[%s19 + $0x78] sm:$0xff] %vm2040, %v1921
  %2057 = vst.msk [vmem:[%s19 + $0x80] sm:$0xff] %vm2040, %v1926
  %2058 = vst.msk [vmem:[%s19 + $0x88] sm:$0xff] %vm2040, %v1929
  %2059 = vst.msk [vmem:[%s19 + $0x90] sm:$0xff] %vm2040, %v1934
  %2060 = vst.msk [vmem:[%s19 + $0x98] sm:$0xff] %vm2040, %v1937
  // Predicated region
  $region70: #{deformable_transformer_encoder.4} parent=0 // pred_check
    _
  $region71: #{deformable_transformer_encoder.4} parent=0 // pred_check_branch
    %2062 = sbr.rel (0) target = $region73
  $region72: #{deformable_transformer_encoder.4} parent=0 // pred_region
    _
  $region73: #{deformable_transformer_encoder.4} parent=0 // pred_fallthru
    _
  // Predicated region
  $region74: #{deformable_transformer_encoder.4} parent=0 // pred_check
    _
  $region75: #{deformable_transformer_encoder.4} parent=0 // pred_check_branch
    %2064 = sbr.rel (0) target = $region77
  $region76: #{deformable_transformer_encoder.4} parent=0 // pred_region
    _
  $region77: #{deformable_transformer_encoder.4} parent=0 // pred_fallthru
    _
  // Predicated region
  $region78: #{deformable_transformer_encoder.4} parent=0 // pred_check
    _
  $region79: #{deformable_transformer_encoder.4} parent=0 // pred_check_branch
    %2066 = sbr.rel (0) target = $region81
  $region80: #{deformable_transformer_encoder.4} parent=0 // pred_region
    _
  $region81: #{deformable_transformer_encoder.4} parent=0 // pred_fallthru
    _
  // Predicated region
  $region82: #{deformable_transformer_encoder.4} parent=0 // pred_check
    _
  $region83: #{deformable_transformer_encoder.4} parent=0 // pred_check_branch
    %2068 = sbr.rel (0) target = $region85
  $region84: #{deformable_transformer_encoder.4} parent=0 // pred_region
    _
  $region85: #{deformable_transformer_encoder.4} parent=0 // pred_fallthru
    _
  // Predicated region
  $region86: #{deformable_transformer_encoder.4} parent=0 // pred_check
    _
  $region87: #{deformable_transformer_encoder.4} parent=0 // pred_check_branch
    %2070 = sbr.rel (0) target = $region89
  $region88: #{deformable_transformer_encoder.4} parent=0 // pred_region
    _
  $region89: #{deformable_transformer_encoder.4} parent=0 // pred_fallthru
    _
  // Predicated region
  $region90: #{deformable_transformer_encoder.4} parent=0 // pred_check
    _
  $region91: #{deformable_transformer_encoder.4} parent=0 // pred_check_branch
    %2072 = sbr.rel (0) target = $region93
  $region92: #{deformable_transformer_encoder.4} parent=0 // pred_region
    _
  $region93: #{deformable_transformer_encoder.4} parent=0 // pred_fallthru
    _

// kernel: deformable_transformer_encoder.5
$region0: #{deformable_transformer_encoder.5}
  #allocation0 [shape = 'u32[]', space=smem, size = 0x4, offset = 0x4, fixed_abs, tag = 'smem constant byte address 0x4 - core index']
  #allocation1 [shape = 'u32[144,128]{1,0:T(1,128)}', space=vmem, size = 0x12000, scoped, tag = 'internal scratch']
  %s0 = inlined_call_operand.vmem [shape: bf16[160,128], index: 0, kind: input, shape index: {}]
  %s1 = inlined_call_operand.vmem [shape: f32[160,128], index: 1, kind: input, shape index: {}]
  %s2 = inlined_call_operand.vmem [shape: bf16[128,128], index: 2, kind: input, shape index: {}]
  %s3 = inlined_call_operand.vmem [shape: f32[1,128], index: 3, kind: input, shape index: {}]
  %s4 = inlined_call_operand.vmem [shape: f32[1,128], index: 4, kind: input, shape index: {}]
  %s5 = inlined_call_operand.vmem [shape: f32[1,128], index: 5, kind: input, shape index: {}]
  %s6 = inlined_call_operand.vmem [shape: bf16[128,256], index: 6, kind: input, shape index: {}]
  %s7 = inlined_call_operand.vmem [shape: f32[1,256], index: 7, kind: input, shape index: {}]
  %s8 = inlined_call_operand.vmem [shape: bf16[256,128], index: 8, kind: input, shape index: {}]
  %s9 = inlined_call_operand.vmem [shape: f32[1,128], index: 9, kind: input, shape index: {}]
  %s10 = inlined_call_operand.vmem [shape: f32[1,128], index: 10, kind: input, shape index: {}]
  %s11 = inlined_call_operand.vmem [shape: f32[1,128], index: 11, kind: input, shape index: {}]
  %s12 = inlined_call_operand.hbm [shape: f32[160,128], index: 12, kind: output, shape index: {}]
  %s13 = sld [smem:[#allocation0]]
  $region58: #{deformable_transformer_encoder.5} parent=0
    _
  %s15 = ssub.s32 1, %s13
  %s16 = scalar_select 0, %s15, %s13
  $region1: #{deformable_transformer_encoder.5} parent=0
    #allocation2 [shape = 'u8[81920]{0}', space=vmem, size = 0x14000, scoped, tag = 'output window, operand 0, single buffered']
    #allocation3 [shape = 's32[1]{0}', space=sflag, size = 0x4, scoped, tag = 'scoped memory for deformable_transformer_encoder.5']
    %17 = vsyncpa [#allocation3], 0
    // Predicated region
    $region2: #{deformable_transformer_encoder.5} parent=1 // pred_check
      _
    $region3: #{deformable_transformer_encoder.5} parent=1 // pred_check_branch
      %19 = sbr.rel (0) target = $region5
    $region4: #{deformable_transformer_encoder.5} parent=1 // pred_region
      _
    $region5: #{deformable_transformer_encoder.5} parent=1 // pred_fallthru
      _
    // Predicated region
    $region6: #{deformable_transformer_encoder.5} parent=1 // pred_check
      _
    $region7: #{deformable_transformer_encoder.5} parent=1 // pred_check_branch
      %21 = sbr.rel (0) target = $region9
    $region8: #{deformable_transformer_encoder.5} parent=1 // pred_region
      _
    $region9: #{deformable_transformer_encoder.5} parent=1 // pred_fallthru
      _
    // Predicated region
    $region10: #{deformable_transformer_encoder.5} parent=1 // pred_check
      _
    $region11: #{deformable_transformer_encoder.5} parent=1 // pred_check_branch
      %23 = sbr.rel (0) target = $region13
    $region12: #{deformable_transformer_encoder.5} parent=1 // pred_region
      _
    $region13: #{deformable_transformer_encoder.5} parent=1 // pred_fallthru
      _
    // Predicated region
    $region14: #{deformable_transformer_encoder.5} parent=1 // pred_check
      _
    $region15: #{deformable_transformer_encoder.5} parent=1 // pred_check_branch
      %25 = sbr.rel (0) target = $region17
    $region16: #{deformable_transformer_encoder.5} parent=1 // pred_region
      _
    $region17: #{deformable_transformer_encoder.5} parent=1 // pred_fallthru
      _
    // Predicated region
    $region18: #{deformable_transformer_encoder.5} parent=1 // pred_check
      _
    $region19: #{deformable_transformer_encoder.5} parent=1 // pred_check_branch
      %27 = sbr.rel (0) target = $region21
    $region20: #{deformable_transformer_encoder.5} parent=1 // pred_region
      _
    $region21: #{deformable_transformer_encoder.5} parent=1 // pred_fallthru
      _
    // Predicated region
    $region22: #{deformable_transformer_encoder.5} parent=1 // pred_check
      _
    $region23: #{deformable_transformer_encoder.5} parent=1 // pred_check_branch
      %29 = sbr.rel (0) target = $region25
    $region24: #{deformable_transformer_encoder.5} parent=1 // pred_region
      _
    $region25: #{deformable_transformer_encoder.5} parent=1 // pred_fallthru
      _
    // Predicated region
    $region26: #{deformable_transformer_encoder.5} parent=1 // pred_check
      _
    $region27: #{deformable_transformer_encoder.5} parent=1 // pred_check_branch
      %31 = sbr.rel (0) target = $region29
    $region28: #{deformable_transformer_encoder.5} parent=1 // pred_region
      _
    $region29: #{deformable_transformer_encoder.5} parent=1 // pred_fallthru
      _
    // Predicated region
    $region30: #{deformable_transformer_encoder.5} parent=1 // pred_check
      _
    $region31: #{deformable_transformer_encoder.5} parent=1 // pred_check_branch
      %33 = sbr.rel (0) target = $region33
    $region32: #{deformable_transformer_encoder.5} parent=1 // pred_region
      _
    $region33: #{deformable_transformer_encoder.5} parent=1 // pred_fallthru
      _
    // Predicated region
    $region34: #{deformable_transformer_encoder.5} parent=1 // pred_check
      _
    $region35: #{deformable_transformer_encoder.5} parent=1 // pred_check_branch
      %35 = sbr.rel (0) target = $region37
    $region36: #{deformable_transformer_encoder.5} parent=1 // pred_region
      _
    $region37: #{deformable_transformer_encoder.5} parent=1 // pred_fallthru
      _
    // Predicated region
    $region38: #{deformable_transformer_encoder.5} parent=1 // pred_check
      _
    $region39: #{deformable_transformer_encoder.5} parent=1 // pred_check_branch
      %37 = sbr.rel (0) target = $region41
    $region40: #{deformable_transformer_encoder.5} parent=1 // pred_region
      _
    $region41: #{deformable_transformer_encoder.5} parent=1 // pred_fallthru
      _
    // Predicated region
    $region42: #{deformable_transformer_encoder.5} parent=1 // pred_check
      _
    $region43: #{deformable_transformer_encoder.5} parent=1 // pred_check_branch
      %39 = sbr.rel (0) target = $region45
    $region44: #{deformable_transformer_encoder.5} parent=1 // pred_region
      _
    $region45: #{deformable_transformer_encoder.5} parent=1 // pred_fallthru
      _
    // Predicated region
    $region46: #{deformable_transformer_encoder.5} parent=1 // pred_check
      _
    $region47: #{deformable_transformer_encoder.5} parent=1 // pred_check_branch
      %41 = sbr.rel (0) target = $region49
    $region48: #{deformable_transformer_encoder.5} parent=1 // pred_region
      _
    $region49: #{deformable_transformer_encoder.5} parent=1 // pred_fallthru
      _
    %v43 = vld [vmem:[%s0] sm:$0xf]
    %v44 = vld [vmem:[%s0 + $0x4] sm:$0xf]
    %v45 = vld [vmem:[%s0 + $0x8] sm:$0xf]
    %v46 = vld [vmem:[%s0 + $0xc] sm:$0xf]
    %v47 = vld [vmem:[%s0 + $0x10] sm:$0xf]
    %v48 = vld [vmem:[%s0 + $0x14] sm:$0xf]
    %v49 = vld [vmem:[%s0 + $0x18] sm:$0xf]
    %v50 = vld [vmem:[%s0 + $0x1c] sm:$0xf]
    %v51 = vld [vmem:[%s0 + $0x20] sm:$0xf]
    %v52 = vld [vmem:[%s0 + $0x24] sm:$0xf]
    %v53 = vld [vmem:[%s0 + $0x28] sm:$0xf]
    %v54 = vld [vmem:[%s0 + $0x2c] sm:$0xf]
    %v55 = vld [vmem:[%s0 + $0x30] sm:$0xf]
    %v56 = vld [vmem:[%s0 + $0x34] sm:$0xf]
    %v57 = vld [vmem:[%s0 + $0x38] sm:$0xf]
    %v58 = vld [vmem:[%s0 + $0x3c] sm:$0xf]
    %v59 = vld [vmem:[%s0 + $0x40] sm:$0xf]
    %v60 = vld [vmem:[%s0 + $0x44] sm:$0xf]
    %v61 = vld [vmem:[%s0 + $0x48] sm:$0xf]
    %v62 = vld [vmem:[%s0 + $0x4c] sm:$0xf]
    %v63 = vld [vmem:[%s2] sm:$0xf]
    %v64 = vld [vmem:[%s2 + $0x4] sm:$0xf]
    %v65 = vld [vmem:[%s2 + $0x8] sm:$0xf]
    %v66 = vld [vmem:[%s2 + $0xc] sm:$0xf]
    %v67 = vld [vmem:[%s2 + $0x10] sm:$0xf]
    %v68 = vld [vmem:[%s2 + $0x14] sm:$0xf]
    %v69 = vld [vmem:[%s2 + $0x18] sm:$0xf]
    %v70 = vld [vmem:[%s2 + $0x1c] sm:$0xf]
    %v71 = vld [vmem:[%s2 + $0x20] sm:$0xf]
    %v72 = vld [vmem:[%s2 + $0x24] sm:$0xf]
    %v73 = vld [vmem:[%s2 + $0x28] sm:$0xf]
    %v74 = vld [vmem:[%s2 + $0x2c] sm:$0xf]
    %v75 = vld [vmem:[%s2 + $0x30] sm:$0xf]
    %v76 = vld [vmem:[%s2 + $0x34] sm:$0xf]
    %v77 = vld [vmem:[%s2 + $0x38] sm:$0xf]
    %v78 = vld [vmem:[%s2 + $0x3c] sm:$0xf]
    %v79 = vld [vmem:[%s3] sm:$0x1]
    %v81 = vlaneseq
    %v82 = vshrl.u32 %v81, 7
    %v83 = vsub.s32 0, %v82
    %v84 = vrot.slane %v79, %v83
    %v106 = vunpack.c.l.b16 %v43
    %v107 = vunpack.c.l.b16 %v44
    %v108 = vunpack.c.l.b16 %v45
    %v109 = vunpack.c.l.b16 %v46
    %v110 = vunpack.c.l.b16 %v47
    %v111 = vunpack.c.l.b16 %v48
    %v112 = vunpack.c.l.b16 %v49
    %v113 = vunpack.c.l.b16 %v50
    %v114 = vunpack.c.l.b16 %v51
    %v115 = vunpack.c.l.b16 %v52
    %v116 = vunpack.c.l.b16 %v53
    %v117 = vunpack.c.l.b16 %v54
    %v118 = vunpack.c.l.b16 %v55
    %v119 = vunpack.c.l.b16 %v56
    %v120 = vunpack.c.l.b16 %v57
    %v121 = vunpack.c.l.b16 %v58
    %v122 = vunpack.c.l.b16 %v59
    %v123 = vunpack.c.l.b16 %v60
    %v124 = vunpack.c.l.b16 %v61
    %v125 = vunpack.c.l.b16 %v62
    %v126 = vpack.c.b16 %v107, %v106
    %v127 = vpack.c.b16 %v109, %v108
    %v128 = vpack.c.b16 %v111, %v110
    %v129 = vpack.c.b16 %v113, %v112
    %v130 = vpack.c.b16 %v115, %v114
    %v131 = vpack.c.b16 %v117, %v116
    %v132 = vpack.c.b16 %v119, %v118
    %v133 = vpack.c.b16 %v121, %v120
    %v134 = vpack.c.b16 %v123, %v122
    %v135 = vpack.c.b16 %v125, %v124
    %v162 = vunpack.c.l.b16 %v63
    %v163 = vunpack.c.l.b16 %v64
    %v164 = vunpack.c.l.b16 %v65
    %v165 = vunpack.c.l.b16 %v66
    %v166 = vunpack.c.l.b16 %v67
    %v167 = vunpack.c.l.b16 %v68
    %v168 = vunpack.c.l.b16 %v69
    %v169 = vunpack.c.l.b16 %v70
    %v170 = vunpack.c.l.b16 %v71
    %v171 = vunpack.c.l.b16 %v72
    %v172 = vunpack.c.l.b16 %v73
    %v173 = vunpack.c.l.b16 %v74
    %v174 = vunpack.c.l.b16 %v75
    %v175 = vunpack.c.l.b16 %v76
    %v176 = vunpack.c.l.b16 %v77
    %v177 = vunpack.c.l.b16 %v78
    %v178 = vpack.c.b16 %v163, %v162
    %v179 = vpack.c.b16 %v165, %v164
    %v180 = vpack.c.b16 %v167, %v166
    %v181 = vpack.c.b16 %v169, %v168
    %v182 = vpack.c.b16 %v171, %v170
    %v183 = vpack.c.b16 %v173, %v172
    %v184 = vpack.c.b16 %v175, %v174
    %v185 = vpack.c.b16 %v177, %v176
    %194 = vmatprep.subr.bf16.mxu0 0
    %195 = vmatpush1.bf16.msra.mxu0 %v178
    %196 = vmatprep.subr.bf16.mxu0 0
    %197 = vmatpush1.bf16.msra.mxu0 %v179
    %198 = vmatprep.subr.bf16.mxu0 0
    %199 = vmatpush1.bf16.msra.mxu0 %v180
    %200 = vmatprep.subr.bf16.mxu0 0
    %201 = vmatpush1.bf16.msra.mxu0 %v181
    %202 = vmatprep.subr.bf16.mxu0 0
    %203 = vmatpush1.bf16.msra.mxu0 %v182
    %204 = vmatprep.subr.bf16.mxu0 0
    %205 = vmatpush1.bf16.msra.mxu0 %v183
    %206 = vmatprep.subr.bf16.mxu0 0
    %207 = vmatpush1.bf16.msra.mxu0 %v184
    %208 = vmatprep.subr.bf16.mxu0 0
    %209 = vmatpush1.bf16.msra.mxu0 %v185
    %210 = vmatprep.subr.bf16.mxu0 0
    %211 = vmatpush1.bf16.msra.mxu0 0
    %212 = vmatprep.subr.bf16.mxu0 0
    %213 = vmatpush1.bf16.msra.mxu0 0
    %214 = vmatprep.subr.bf16.mxu0 0
    %215 = vmatpush1.bf16.msra.mxu0 0
    %216 = vmatprep.subr.bf16.mxu0 0
    %217 = vmatpush1.bf16.msra.mxu0 0
    %218 = vmatprep.subr.bf16.mxu0 0
    %219 = vmatpush1.bf16.msra.mxu0 0
    %220 = vmatprep.subr.bf16.mxu0 0
    %221 = vmatpush1.bf16.msra.mxu0 0
    %222 = vmatprep.subr.bf16.mxu0 0
    %223 = vmatpush1.bf16.msra.mxu0 0
    %224 = vmatprep.subr.bf16.mxu0 0
    %225 = vmatpush1.bf16.msra.mxu0 0
    %226 = vmatprep.mubr.bf16.mxu0 0
    %227 = vmatmul.mubr.bf16.gmra.mrb[0].mxu0 %v126
    %v228 = vpop.f32.mrb[0].mxu0
    %v229 = vadd.f32 %v84, %v228
    %v230 = vpop.f32.mrb[0].mxu0
    %v231 = vpop.f32.mrb[0].mxu0
    %v232 = vadd.f32 %v84, %v231
    %v233 = vpop.f32.mrb[0].mxu0
    %234 = vmatprep.mubr.bf16.mxu0 0
    %235 = vmatmul.mubr.bf16.gmra.mrb[0].mxu0 %v127
    %v236 = vpop.f32.mrb[0].mxu0
    %v237 = vadd.f32 %v84, %v236
    %v238 = vpop.f32.mrb[0].mxu0
    %v239 = vpop.f32.mrb[0].mxu0
    %v240 = vadd.f32 %v84, %v239
    %v241 = vpop.f32.mrb[0].mxu0
    %242 = vmatprep.mubr.bf16.mxu0 0
    %243 = vmatmul.mubr.bf16.gmra.mrb[0].mxu0 %v128
    %v244 = vpop.f32.mrb[0].mxu0
    %v245 = vadd.f32 %v84, %v244
    %v246 = vpop.f32.mrb[0].mxu0
    %v247 = vpop.f32.mrb[0].mxu0
    %v248 = vadd.f32 %v84, %v247
    %v249 = vpop.f32.mrb[0].mxu0
    %250 = vmatprep.mubr.bf16.mxu0 0
    %251 = vmatmul.mubr.bf16.gmra.mrb[0].mxu0 %v129
    %v252 = vpop.f32.mrb[0].mxu0
    %v253 = vadd.f32 %v84, %v252
    %v254 = vpop.f32.mrb[0].mxu0
    %v255 = vpop.f32.mrb[0].mxu0
    %v256 = vadd.f32 %v84, %v255
    %v257 = vpop.f32.mrb[0].mxu0
    %258 = vmatprep.mubr.bf16.mxu0 0
    %259 = vmatmul.mubr.bf16.gmra.mrb[0].mxu0 %v130
    %v260 = vpop.f32.mrb[0].mxu0
    %v261 = vadd.f32 %v84, %v260
    %v262 = vpop.f32.mrb[0].mxu0
    %v263 = vpop.f32.mrb[0].mxu0
    %v264 = vadd.f32 %v84, %v263
    %v265 = vpop.f32.mrb[0].mxu0
    %266 = vmatprep.mubr.bf16.mxu0 0
    %267 = vmatmul.mubr.bf16.gmra.mrb[0].mxu0 %v131
    %v268 = vpop.f32.mrb[0].mxu0
    %v269 = vadd.f32 %v84, %v268
    %v270 = vpop.f32.mrb[0].mxu0
    %v271 = vpop.f32.mrb[0].mxu0
    %v272 = vadd.f32 %v84, %v271
    %v273 = vpop.f32.mrb[0].mxu0
    %274 = vmatprep.mubr.bf16.mxu0 0
    %275 = vmatmul.mubr.bf16.gmra.mrb[0].mxu0 %v132
    %v276 = vpop.f32.mrb[0].mxu0
    %v277 = vadd.f32 %v84, %v276
    %v278 = vpop.f32.mrb[0].mxu0
    %v279 = vpop.f32.mrb[0].mxu0
    %v280 = vadd.f32 %v84, %v279
    %v281 = vpop.f32.mrb[0].mxu0
    %282 = vmatprep.mubr.bf16.mxu0 0
    %283 = vmatmul.mubr.bf16.gmra.mrb[0].mxu0 %v133
    %v284 = vpop.f32.mrb[0].mxu0
    %v285 = vadd.f32 %v84, %v284
    %v286 = vpop.f32.mrb[0].mxu0
    %v287 = vpop.f32.mrb[0].mxu0
    %v288 = vadd.f32 %v84, %v287
    %v289 = vpop.f32.mrb[0].mxu0
    %290 = vmatprep.mubr.bf16.mxu0 0
    %291 = vmatmul.mubr.bf16.gmra.mrb[0].mxu0 %v134
    %v292 = vpop.f32.mrb[0].mxu0
    %v293 = vadd.f32 %v84, %v292
    %v294 = vpop.f32.mrb[0].mxu0
    %v295 = vpop.f32.mrb[0].mxu0
    %v296 = vadd.f32 %v84, %v295
    %v297 = vpop.f32.mrb[0].mxu0
    %298 = vmatprep.mubr.bf16.mxu0 0
    %299 = vmatmul.mubr.bf16.gmra.mrb[0].mxu0 %v135
    %v300 = vpop.f32.mrb[0].mxu0
    %v301 = vadd.f32 %v84, %v300
    %v302 = vpop.f32.mrb[0].mxu0
    %v303 = vpop.f32.mrb[0].mxu0
    %v304 = vadd.f32 %v84, %v303
    %v305 = vpop.f32.mrb[0].mxu0
    %306 = vdwg.mxu0
    %v307 = vld [vmem:[%s1] sm:$0xff]
    %v308 = vld [vmem:[%s1 + $0x8] sm:$0xff]
    %v309 = vld [vmem:[%s1 + $0x10] sm:$0xff]
    %v310 = vld [vmem:[%s1 + $0x18] sm:$0xff]
    %v311 = vld [vmem:[%s1 + $0x20] sm:$0xff]
    %v312 = vld [vmem:[%s1 + $0x28] sm:$0xff]
    %v313 = vld [vmem:[%s1 + $0x30] sm:$0xff]
    %v314 = vld [vmem:[%s1 + $0x38] sm:$0xff]
    %v315 = vld [vmem:[%s1 + $0x40] sm:$0xff]
    %v316 = vld [vmem:[%s1 + $0x48] sm:$0xff]
    %v317 = vld [vmem:[%s1 + $0x50] sm:$0xff]
    %v318 = vld [vmem:[%s1 + $0x58] sm:$0xff]
    %v319 = vld [vmem:[%s1 + $0x60] sm:$0xff]
    %v320 = vld [vmem:[%s1 + $0x68] sm:$0xff]
    %v321 = vld [vmem:[%s1 + $0x70] sm:$0xff]
    %v322 = vld [vmem:[%s1 + $0x78] sm:$0xff]
    %v323 = vld [vmem:[%s1 + $0x80] sm:$0xff]
    %v324 = vld [vmem:[%s1 + $0x88] sm:$0xff]
    %v325 = vld [vmem:[%s1 + $0x90] sm:$0xff]
    %v326 = vld [vmem:[%s1 + $0x98] sm:$0xff]
    %v327 = vadd.f32 %v307, %v229
    %v328 = vadd.f32 %v308, %v232
    %v329 = vadd.f32 %v309, %v237
    %v330 = vadd.f32 %v310, %v240
    %v331 = vadd.f32 %v311, %v245
    %v332 = vadd.f32 %v312, %v248
    %v333 = vadd.f32 %v313, %v253
    %v334 = vadd.f32 %v314, %v256
    %v335 = vadd.f32 %v315, %v261
    %v336 = vadd.f32 %v316, %v264
    %v337 = vadd.f32 %v317, %v269
    %v338 = vadd.f32 %v318, %v272
    %v339 = vadd.f32 %v319, %v277
    %v340 = vadd.f32 %v320, %v280
    %v341 = vadd.f32 %v321, %v285
    %v342 = vadd.f32 %v322, %v288
    %v343 = vadd.f32 %v323, %v293
    %v344 = vadd.f32 %v324, %v296
    %v345 = vadd.f32 %v325, %v301
    %v346 = vadd.f32 %v326, %v304
    %347 = vadd.xlane.f32.xlu0 %v327
    %v348 = vpop.xlane.xlu0 %347
    %349 = vadd.xlane.f32.xlu0 %v328
    %v350 = vpop.xlane.xlu0 %349
    %351 = vadd.xlane.f32.xlu0 %v329
    %v352 = vpop.xlane.xlu0 %351
    %353 = vadd.xlane.f32.xlu0 %v330
    %v354 = vpop.xlane.xlu0 %353
    %355 = vadd.xlane.f32.xlu0 %v331
    %v356 = vpop.xlane.xlu0 %355
    %357 = vadd.xlane.f32.xlu0 %v332
    %v358 = vpop.xlane.xlu0 %357
    %359 = vadd.xlane.f32.xlu0 %v333
    %v360 = vpop.xlane.xlu0 %359
    %361 = vadd.xlane.f32.xlu0 %v334
    %v362 = vpop.xlane.xlu0 %361
    %363 = vadd.xlane.f32.xlu0 %v335
    %v364 = vpop.xlane.xlu0 %363
    %365 = vadd.xlane.f32.xlu0 %v336
    %v366 = vpop.xlane.xlu0 %365
    %367 = vadd.xlane.f32.xlu0 %v337
    %v368 = vpop.xlane.xlu0 %367
    %369 = vadd.xlane.f32.xlu0 %v338
    %v370 = vpop.xlane.xlu0 %369
    %371 = vadd.xlane.f32.xlu0 %v339
    %v372 = vpop.xlane.xlu0 %371
    %373 = vadd.xlane.f32.xlu0 %v340
    %v374 = vpop.xlane.xlu0 %373
    %375 = vadd.xlane.f32.xlu0 %v341
    %v376 = vpop.xlane.xlu0 %375
    %377 = vadd.xlane.f32.xlu0 %v342
    %v378 = vpop.xlane.xlu0 %377
    %379 = vadd.xlane.f32.xlu0 %v343
    %v380 = vpop.xlane.xlu0 %379
    %381 = vadd.xlane.f32.xlu0 %v344
    %v382 = vpop.xlane.xlu0 %381
    %383 = vadd.xlane.f32.xlu0 %v345
    %v384 = vpop.xlane.xlu0 %383
    %385 = vadd.xlane.f32.xlu0 %v346
    %v386 = vpop.xlane.xlu0 %385
    %v387 = vrcp.pop 128.0
    %v388 = vmul.f32 %v348, %v387
    %v389 = vmul.f32 %v350, %v387
    %v390 = vmul.f32 %v352, %v387
    %v391 = vmul.f32 %v354, %v387
    %v392 = vmul.f32 %v356, %v387
    %v393 = vmul.f32 %v358, %v387
    %v394 = vmul.f32 %v360, %v387
    %v395 = vmul.f32 %v362, %v387
    %v396 = vmul.f32 %v364, %v387
    %v397 = vmul.f32 %v366, %v387
    %v398 = vmul.f32 %v368, %v387
    %v399 = vmul.f32 %v370, %v387
    %v400 = vmul.f32 %v372, %v387
    %v401 = vmul.f32 %v374, %v387
    %v402 = vmul.f32 %v376, %v387
    %v403 = vmul.f32 %v378, %v387
    %v404 = vmul.f32 %v380, %v387
    %v405 = vmul.f32 %v382, %v387
    %v406 = vmul.f32 %v384, %v387
    %v407 = vmul.f32 %v386, %v387
    %v408 = vsub.f32 %v327, %v388
    %v409 = vsub.f32 %v328, %v389
    %v410 = vsub.f32 %v329, %v390
    %v411 = vsub.f32 %v330, %v391
    %v412 = vsub.f32 %v331, %v392
    %v413 = vsub.f32 %v332, %v393
    %v414 = vsub.f32 %v333, %v394
    %v415 = vsub.f32 %v334, %v395
    %v416 = vsub.f32 %v335, %v396
    %v417 = vsub.f32 %v336, %v397
    %v418 = vsub.f32 %v337, %v398
    %v419 = vsub.f32 %v338, %v399
    %v420 = vsub.f32 %v339, %v400
    %v421 = vsub.f32 %v340, %v401
    %v422 = vsub.f32 %v341, %v402
    %v423 = vsub.f32 %v342, %v403
    %v424 = vsub.f32 %v343, %v404
    %v425 = vsub.f32 %v344, %v405
    %v426 = vsub.f32 %v345, %v406
    %v427 = vsub.f32 %v346, %v407
    %v428 = vmul.f32 %v408, %v408
    %v429 = vmul.f32 %v409, %v409
    %v430 = vmul.f32 %v410, %v410
    %v431 = vmul.f32 %v411, %v411
    %v432 = vmul.f32 %v412, %v412
    %v433 = vmul.f32 %v413, %v413
    %v434 = vmul.f32 %v414, %v414
    %v435 = vmul.f32 %v415, %v415
    %v436 = vmul.f32 %v416, %v416
    %v437 = vmul.f32 %v417, %v417
    %v438 = vmul.f32 %v418, %v418
    %v439 = vmul.f32 %v419, %v419
    %v440 = vmul.f32 %v420, %v420
    %v441 = vmul.f32 %v421, %v421
    %v442 = vmul.f32 %v422, %v422
    %v443 = vmul.f32 %v423, %v423
    %v444 = vmul.f32 %v424, %v424
    %v445 = vmul.f32 %v425, %v425
    %v446 = vmul.f32 %v426, %v426
    %v447 = vmul.f32 %v427, %v427
    %448 = vadd.xlane.f32.xlu0 %v428
    %v449 = vpop.xlane.xlu0 %448
    %450 = vadd.xlane.f32.xlu0 %v429
    %v451 = vpop.xlane.xlu0 %450
    %452 = vadd.xlane.f32.xlu0 %v430
    %v453 = vpop.xlane.xlu0 %452
    %454 = vadd.xlane.f32.xlu0 %v431
    %v455 = vpop.xlane.xlu0 %454
    %456 = vadd.xlane.f32.xlu0 %v432
    %v457 = vpop.xlane.xlu0 %456
    %458 = vadd.xlane.f32.xlu0 %v433
    %v459 = vpop.xlane.xlu0 %458
    %460 = vadd.xlane.f32.xlu0 %v434
    %v461 = vpop.xlane.xlu0 %460
    %462 = vadd.xlane.f32.xlu0 %v435
    %v463 = vpop.xlane.xlu0 %462
    %464 = vadd.xlane.f32.xlu0 %v436
    %v465 = vpop.xlane.xlu0 %464
    %466 = vadd.xlane.f32.xlu0 %v437
    %v467 = vpop.xlane.xlu0 %466
    %468 = vadd.xlane.f32.xlu0 %v438
    %v469 = vpop.xlane.xlu0 %468
    %470 = vadd.xlane.f32.xlu0 %v439
    %v471 = vpop.xlane.xlu0 %470
    %472 = vadd.xlane.f32.xlu0 %v440
    %v473 = vpop.xlane.xlu0 %472
    %474 = vadd.xlane.f32.xlu0 %v441
    %v475 = vpop.xlane.xlu0 %474
    %476 = vadd.xlane.f32.xlu0 %v442
    %v477 = vpop.xlane.xlu0 %476
    %478 = vadd.xlane.f32.xlu0 %v443
    %v479 = vpop.xlane.xlu0 %478
    %480 = vadd.xlane.f32.xlu0 %v444
    %v481 = vpop.xlane.xlu0 %480
    %482 = vadd.xlane.f32.xlu0 %v445
    %v483 = vpop.xlane.xlu0 %482
    %484 = vadd.xlane.f32.xlu0 %v446
    %v485 = vpop.xlane.xlu0 %484
    %486 = vadd.xlane.f32.xlu0 %v447
    %v487 = vpop.xlane.xlu0 %486
    %v488 = vmul.f32 %v449, %v387
    %v489 = vmul.f32 %v451, %v387
    %v490 = vmul.f32 %v453, %v387
    %v491 = vmul.f32 %v455, %v387
    %v492 = vmul.f32 %v457, %v387
    %v493 = vmul.f32 %v459, %v387
    %v494 = vmul.f32 %v461, %v387
    %v495 = vmul.f32 %v463, %v387
    %v496 = vmul.f32 %v465, %v387
    %v497 = vmul.f32 %v467, %v387
    %v498 = vmul.f32 %v469, %v387
    %v499 = vmul.f32 %v471, %v387
    %v500 = vmul.f32 %v473, %v387
    %v501 = vmul.f32 %v475, %v387
    %v502 = vmul.f32 %v477, %v387
    %v503 = vmul.f32 %v479, %v387
    %v504 = vmul.f32 %v481, %v387
    %v505 = vmul.f32 %v483, %v387
    %v506 = vmul.f32 %v485, %v387
    %v507 = vmul.f32 %v487, %v387
    %v508 = vadd.f32 %v488, 1e-05
    %v509 = vadd.f32 %v489, 1e-05
    %v510 = vadd.f32 %v490, 1e-05
    %v511 = vadd.f32 %v491, 1e-05
    %v512 = vadd.f32 %v492, 1e-05
    %v513 = vadd.f32 %v493, 1e-05
    %v514 = vadd.f32 %v494, 1e-05
    %v515 = vadd.f32 %v495, 1e-05
    %v516 = vadd.f32 %v496, 1e-05
    %v517 = vadd.f32 %v497, 1e-05
    %v518 = vadd.f32 %v498, 1e-05
    %v519 = vadd.f32 %v499, 1e-05
    %v520 = vadd.f32 %v500, 1e-05
    %v521 = vadd.f32 %v501, 1e-05
    %v522 = vadd.f32 %v502, 1e-05
    %v523 = vadd.f32 %v503, 1e-05
    %v524 = vadd.f32 %v504, 1e-05
    %v525 = vadd.f32 %v505, 1e-05
    %v526 = vadd.f32 %v506, 1e-05
    %v527 = vadd.f32 %v507, 1e-05
    %v528 = vrsqrt.pop %v508
    %v529 = vrsqrt.pop %v509
    %v530 = vrsqrt.pop %v510
    %v531 = vrsqrt.pop %v511
    %v532 = vrsqrt.pop %v512
    %v533 = vrsqrt.pop %v513
    %v534 = vrsqrt.pop %v514
    %v535 = vrsqrt.pop %v515
    %v536 = vrsqrt.pop %v516
    %v537 = vrsqrt.pop %v517
    %v538 = vrsqrt.pop %v518
    %v539 = vrsqrt.pop %v519
    %v540 = vrsqrt.pop %v520
    %v541 = vrsqrt.pop %v521
    %v542 = vrsqrt.pop %v522
    %v543 = vrsqrt.pop %v523
    %v544 = vrsqrt.pop %v524
    %v545 = vrsqrt.pop %v525
    %v546 = vrsqrt.pop %v526
    %v547 = vrsqrt.pop %v527
    %v548 = vmul.f32 %v408, %v528
    %v549 = vmul.f32 %v409, %v529
    %v550 = vmul.f32 %v410, %v530
    %v551 = vmul.f32 %v411, %v531
    %v552 = vmul.f32 %v412, %v532
    %v553 = vmul.f32 %v413, %v533
    %v554 = vmul.f32 %v414, %v534
    %v555 = vmul.f32 %v415, %v535
    %v556 = vmul.f32 %v416, %v536
    %v557 = vmul.f32 %v417, %v537
    %v558 = vmul.f32 %v418, %v538
    %v559 = vmul.f32 %v419, %v539
    %v560 = vmul.f32 %v420, %v540
    %v561 = vmul.f32 %v421, %v541
    %v562 = vmul.f32 %v422, %v542
    %v563 = vmul.f32 %v423, %v543
    %v564 = vmul.f32 %v424, %v544
    %v565 = vmul.f32 %v425, %v545
    %v566 = vmul.f32 %v426, %v546
    %v567 = vmul.f32 %v427, %v547
    %v568 = vld [vmem:[%s4] sm:$0x1]
    %v570 = vlaneseq
    %v571 = vshrl.u32 %v570, 7
    %v572 = vsub.s32 0, %v571
    %v573 = vrot.slane %v568, %v572
    %v575 = vmul.f32 %v548, %v573
    %v576 = vmul.f32 %v549, %v573
    %v577 = vmul.f32 %v550, %v573
    %v578 = vmul.f32 %v551, %v573
    %v579 = vmul.f32 %v552, %v573
    %v580 = vmul.f32 %v553, %v573
    %v581 = vmul.f32 %v554, %v573
    %v582 = vmul.f32 %v555, %v573
    %v583 = vmul.f32 %v556, %v573
    %v584 = vmul.f32 %v557, %v573
    %v585 = vmul.f32 %v558, %v573
    %v586 = vmul.f32 %v559, %v573
    %v587 = vmul.f32 %v560, %v573
    %v588 = vmul.f32 %v561, %v573
    %v589 = vmul.f32 %v562, %v573
    %v590 = vmul.f32 %v563, %v573
    %v591 = vmul.f32 %v564, %v573
    %v592 = vmul.f32 %v565, %v573
    %v593 = vmul.f32 %v566, %v573
    %v594 = vmul.f32 %v567, %v573
    %v595 = vld [vmem:[%s5] sm:$0x1]
    %v597 = vlaneseq
    %v598 = vshrl.u32 %v597, 7
    %v599 = vsub.s32 0, %v598
    %v600 = vrot.slane %v595, %v599
    %v602 = vadd.f32 %v575, %v600
    %v603 = vadd.f32 %v576, %v600
    %v604 = vadd.f32 %v577, %v600
    %v605 = vadd.f32 %v578, %v600
    %v606 = vadd.f32 %v579, %v600
    %v607 = vadd.f32 %v580, %v600
    %v608 = vadd.f32 %v581, %v600
    %v609 = vadd.f32 %v582, %v600
    %v610 = vadd.f32 %v583, %v600
    %v611 = vadd.f32 %v584, %v600
    %v612 = vadd.f32 %v585, %v600
    %v613 = vadd.f32 %v586, %v600
    %v614 = vadd.f32 %v587, %v600
    %v615 = vadd.f32 %v588, %v600
    %v616 = vadd.f32 %v589, %v600
    %v617 = vadd.f32 %v590, %v600
    %v618 = vadd.f32 %v591, %v600
    %v619 = vadd.f32 %v592, %v600
    %v620 = vadd.f32 %v593, %v600
    %v621 = vadd.f32 %v594, %v600
    %v622 = vpack.c.bf16 %v603, %v602
    %v623 = vpack.c.bf16 %v605, %v604
    %v624 = vpack.c.bf16 %v607, %v606
    %v625 = vpack.c.bf16 %v609, %v608
    %v626 = vpack.c.bf16 %v611, %v610
    %v627 = vpack.c.bf16 %v613, %v612
    %v628 = vpack.c.bf16 %v615, %v614
    %v629 = vpack.c.bf16 %v617, %v616
    %v630 = vpack.c.bf16 %v619, %v618
    %v631 = vpack.c.bf16 %v621, %v620
    %v632 = vld [vmem:[%s6] sm:$0xff]
    %v633 = vld [vmem:[%s6 + $0x8] sm:$0xff]
    %v634 = vld [vmem:[%s6 + $0x10] sm:$0xff]
    %v635 = vld [vmem:[%s6 + $0x18] sm:$0xff]
    %v636 = vld [vmem:[%s6 + $0x20] sm:$0xff]
    %v637 = vld [vmem:[%s6 + $0x28] sm:$0xff]
    %v638 = vld [vmem:[%s6 + $0x30] sm:$0xff]
    %v639 = vld [vmem:[%s6 + $0x38] sm:$0xff]
    %v640 = vld [vmem:[%s6 + $0x40] sm:$0xff]
    %v641 = vld [vmem:[%s6 + $0x48] sm:$0xff]
    %v642 = vld [vmem:[%s6 + $0x50] sm:$0xff]
    %v643 = vld [vmem:[%s6 + $0x58] sm:$0xff]
    %v644 = vld [vmem:[%s6 + $0x60] sm:$0xff]
    %v645 = vld [vmem:[%s6 + $0x68] sm:$0xff]
    %v646 = vld [vmem:[%s6 + $0x70] sm:$0xff]
    %v647 = vld [vmem:[%s6 + $0x78] sm:$0xff]
    %v648 = vld [vmem:[%s7] sm:$0x3]
    %v650 = vlaneseq
    %v651 = vshrl.u32 %v650, 7
    %v652 = vsub.s32 0, %v651
    %v653 = vrot.slane %v648, %v652
    %v654 = vlaneseq
    %v655 = vshrl.u32 %v654, 7
    %v656 = vsub.s32 1, %v655
    %v657 = vrot.slane %v648, %v656
    %v676 = vunpack.c.l.b16 %v632
    %v677 = vunpack.c.h.b16 %v632
    %v678 = vunpack.c.l.b16 %v633
    %v679 = vunpack.c.h.b16 %v633
    %v680 = vunpack.c.l.b16 %v634
    %v681 = vunpack.c.h.b16 %v634
    %v682 = vunpack.c.l.b16 %v635
    %v683 = vunpack.c.h.b16 %v635
    %v684 = vunpack.c.l.b16 %v636
    %v685 = vunpack.c.h.b16 %v636
    %v686 = vunpack.c.l.b16 %v637
    %v687 = vunpack.c.h.b16 %v637
    %v688 = vunpack.c.l.b16 %v638
    %v689 = vunpack.c.h.b16 %v638
    %v690 = vunpack.c.l.b16 %v639
    %v691 = vunpack.c.h.b16 %v639
    %v692 = vunpack.c.l.b16 %v640
    %v693 = vunpack.c.h.b16 %v640
    %v694 = vunpack.c.l.b16 %v641
    %v695 = vunpack.c.h.b16 %v641
    %v696 = vunpack.c.l.b16 %v642
    %v697 = vunpack.c.h.b16 %v642
    %v698 = vunpack.c.l.b16 %v643
    %v699 = vunpack.c.h.b16 %v643
    %v700 = vunpack.c.l.b16 %v644
    %v701 = vunpack.c.h.b16 %v644
    %v702 = vunpack.c.l.b16 %v645
    %v703 = vunpack.c.h.b16 %v645
    %v704 = vunpack.c.l.b16 %v646
    %v705 = vunpack.c.h.b16 %v646
    %v706 = vunpack.c.l.b16 %v647
    %v707 = vunpack.c.h.b16 %v647
    %v708 = vpack.c.b16 %v678, %v676
    %v709 = vpack.c.b16 %v679, %v677
    %v710 = vpack.c.b16 %v682, %v680
    %v711 = vpack.c.b16 %v683, %v681
    %v712 = vpack.c.b16 %v686, %v684
    %v713 = vpack.c.b16 %v687, %v685
    %v714 = vpack.c.b16 %v690, %v688
    %v715 = vpack.c.b16 %v691, %v689
    %v716 = vpack.c.b16 %v694, %v692
    %v717 = vpack.c.b16 %v695, %v693
    %v718 = vpack.c.b16 %v698, %v696
    %v719 = vpack.c.b16 %v699, %v697
    %v720 = vpack.c.b16 %v702, %v700
    %v721 = vpack.c.b16 %v703, %v701
    %v722 = vpack.c.b16 %v706, %v704
    %v723 = vpack.c.b16 %v707, %v705
    %740 = vmatprep.subr.bf16.mxu0 %v709
    %741 = vmatpush1.bf16.msra.mxu0 %v708
    %742 = vmatprep.subr.bf16.mxu0 %v711
    %743 = vmatpush1.bf16.msra.mxu0 %v710
    %744 = vmatprep.subr.bf16.mxu0 %v713
    %745 = vmatpush1.bf16.msra.mxu0 %v712
    %746 = vmatprep.subr.bf16.mxu0 %v715
    %747 = vmatpush1.bf16.msra.mxu0 %v714
    %748 = vmatprep.subr.bf16.mxu0 %v717
    %749 = vmatpush1.bf16.msra.mxu0 %v716
    %750 = vmatprep.subr.bf16.mxu0 %v719
    %751 = vmatpush1.bf16.msra.mxu0 %v718
    %752 = vmatprep.subr.bf16.mxu0 %v721
    %753 = vmatpush1.bf16.msra.mxu0 %v720
    %754 = vmatprep.subr.bf16.mxu0 %v723
    %755 = vmatpush1.bf16.msra.mxu0 %v722
    %756 = vmatprep.subr.bf16.mxu0 0
    %757 = vmatpush1.bf16.msra.mxu0 0
    %758 = vmatprep.subr.bf16.mxu0 0
    %759 = vmatpush1.bf16.msra.mxu0 0
    %760 = vmatprep.subr.bf16.mxu0 0
    %761 = vmatpush1.bf16.msra.mxu0 0
    %762 = vmatprep.subr.bf16.mxu0 0
    %763 = vmatpush1.bf16.msra.mxu0 0
    %764 = vmatprep.subr.bf16.mxu0 0
    %765 = vmatpush1.bf16.msra.mxu0 0
    %766 = vmatprep.subr.bf16.mxu0 0
    %767 = vmatpush1.bf16.msra.mxu0 0
    %768 = vmatprep.subr.bf16.mxu0 0
    %769 = vmatpush1.bf16.msra.mxu0 0
    %770 = vmatprep.subr.bf16.mxu0 0
    %771 = vmatpush1.bf16.msra.mxu0 0
    %772 = vmatprep.mubr.bf16.mxu0 0
    %773 = vmatmul.mubr.bf16.gmra.mrb[0].mxu0 %v622
    %v774 = vpop.f32.mrb[0].mxu0
    %v775 = vadd.f32 %v653, %v774
    %v776 = vpop.f32.mrb[0].mxu0
    %v777 = vadd.f32 %v657, %v776
    %v778 = vpop.f32.mrb[0].mxu0
    %v779 = vadd.f32 %v653, %v778
    %v780 = vpop.f32.mrb[0].mxu0
    %v781 = vadd.f32 %v657, %v780
    %782 = vmatprep.mubr.bf16.mxu0 0
    %783 = vmatmul.mubr.bf16.gmra.mrb[0].mxu0 %v623
    %v784 = vpop.f32.mrb[0].mxu0
    %v785 = vadd.f32 %v653, %v784
    %v786 = vpop.f32.mrb[0].mxu0
    %v787 = vadd.f32 %v657, %v786
    %v788 = vpop.f32.mrb[0].mxu0
    %v789 = vadd.f32 %v653, %v788
    %v790 = vpop.f32.mrb[0].mxu0
    %v791 = vadd.f32 %v657, %v790
    %792 = vmatprep.mubr.bf16.mxu0 0
    %793 = vmatmul.mubr.bf16.gmra.mrb[0].mxu0 %v624
    %v794 = vpop.f32.mrb[0].mxu0
    %v795 = vadd.f32 %v653, %v794
    %v796 = vpop.f32.mrb[0].mxu0
    %v797 = vadd.f32 %v657, %v796
    %v798 = vpop.f32.mrb[0].mxu0
    %v799 = vadd.f32 %v653, %v798
    %v800 = vpop.f32.mrb[0].mxu0
    %v801 = vadd.f32 %v657, %v800
    %802 = vmatprep.mubr.bf16.mxu0 0
    %803 = vmatmul.mubr.bf16.gmra.mrb[0].mxu0 %v625
    %v804 = vpop.f32.mrb[0].mxu0
    %v805 = vadd.f32 %v653, %v804
    %v806 = vpop.f32.mrb[0].mxu0
    %v807 = vadd.f32 %v657, %v806
    %v808 = vpop.f32.mrb[0].mxu0
    %v809 = vadd.f32 %v653, %v808
    %v810 = vpop.f32.mrb[0].mxu0
    %v811 = vadd.f32 %v657, %v810
    %812 = vmatprep.mubr.bf16.mxu0 0
    %813 = vmatmul.mubr.bf16.gmra.mrb[0].mxu0 %v626
    %v814 = vpop.f32.mrb[0].mxu0
    %v815 = vadd.f32 %v653, %v814
    %v816 = vpop.f32.mrb[0].mxu0
    %v817 = vadd.f32 %v657, %v816
    %v818 = vpop.f32.mrb[0].mxu0
    %v819 = vadd.f32 %v653, %v818
    %v820 = vpop.f32.mrb[0].mxu0
    %v821 = vadd.f32 %v657, %v820
    %822 = vmatprep.mubr.bf16.mxu0 0
    %823 = vmatmul.mubr.bf16.gmra.mrb[0].mxu0 %v627
    %v824 = vpop.f32.mrb[0].mxu0
    %v825 = vadd.f32 %v653, %v824
    %v826 = vpop.f32.mrb[0].mxu0
    %v827 = vadd.f32 %v657, %v826
    %v828 = vpop.f32.mrb[0].mxu0
    %v829 = vadd.f32 %v653, %v828
    %v830 = vpop.f32.mrb[0].mxu0
    %v831 = vadd.f32 %v657, %v830
    %832 = vmatprep.mubr.bf16.mxu0 0
    %833 = vmatmul.mubr.bf16.gmra.mrb[0].mxu0 %v628
    %v834 = vpop.f32.mrb[0].mxu0
    %v835 = vadd.f32 %v653, %v834
    %v836 = vpop.f32.mrb[0].mxu0
    %v837 = vadd.f32 %v657, %v836
    %v838 = vpop.f32.mrb[0].mxu0
    %v839 = vadd.f32 %v653, %v838
    %v840 = vpop.f32.mrb[0].mxu0
    %v841 = vadd.f32 %v657, %v840
    %842 = vmatprep.mubr.bf16.mxu0 0
    %843 = vmatmul.mubr.bf16.gmra.mrb[0].mxu0 %v629
    %v844 = vpop.f32.mrb[0].mxu0
    %v845 = vadd.f32 %v653, %v844
    %v846 = vpop.f32.mrb[0].mxu0
    %v847 = vadd.f32 %v657, %v846
    %v848 = vpop.f32.mrb[0].mxu0
    %v849 = vadd.f32 %v653, %v848
    %v850 = vpop.f32.mrb[0].mxu0
    %v851 = vadd.f32 %v657, %v850
    %852 = vmatprep.mubr.bf16.mxu0 0
    %853 = vmatmul.mubr.bf16.gmra.mrb[0].mxu0 %v630
    %v854 = vpop.f32.mrb[0].mxu0
    %v855 = vadd.f32 %v653, %v854
    %v856 = vpop.f32.mrb[0].mxu0
    %v857 = vadd.f32 %v657, %v856
    %v858 = vpop.f32.mrb[0].mxu0
    %v859 = vadd.f32 %v653, %v858
    %v860 = vpop.f32.mrb[0].mxu0
    %v861 = vadd.f32 %v657, %v860
    %862 = vmatprep.mubr.bf16.mxu0 0
    %863 = vmatmul.mubr.bf16.gmra.mrb[0].mxu0 %v631
    %v864 = vpop.f32.mrb[0].mxu0
    %v865 = vadd.f32 %v653, %v864
    %v866 = vpop.f32.mrb[0].mxu0
    %v867 = vadd.f32 %v657, %v866
    %v868 = vpop.f32.mrb[0].mxu0
    %v869 = vadd.f32 %v653, %v868
    %v870 = vpop.f32.mrb[0].mxu0
    %v871 = vadd.f32 %v657, %v870
    %872 = vdwg.mxu0
    %v873 = vmax.f32 %v775, 0.0
    %v874 = vmax.f32 %v777, 0.0
    %v875 = vmax.f32 %v779, 0.0
    %v876 = vmax.f32 %v781, 0.0
    %v877 = vmax.f32 %v785, 0.0
    %v878 = vmax.f32 %v787, 0.0
    %v879 = vmax.f32 %v789, 0.0
    %v880 = vmax.f32 %v791, 0.0
    %v881 = vmax.f32 %v795, 0.0
    %v882 = vmax.f32 %v797, 0.0
    %v883 = vmax.f32 %v799, 0.0
    %v884 = vmax.f32 %v801, 0.0
    %v885 = vmax.f32 %v805, 0.0
    %v886 = vmax.f32 %v807, 0.0
    %v887 = vmax.f32 %v809, 0.0
    %v888 = vmax.f32 %v811, 0.0
    %v889 = vmax.f32 %v815, 0.0
    %v890 = vmax.f32 %v817, 0.0
    %v891 = vmax.f32 %v819, 0.0
    %v892 = vmax.f32 %v821, 0.0
    %v893 = vmax.f32 %v825, 0.0
    %v894 = vmax.f32 %v827, 0.0
    %v895 = vmax.f32 %v829, 0.0
    %v896 = vmax.f32 %v831, 0.0
    %v897 = vmax.f32 %v835, 0.0
    %v898 = vmax.f32 %v837, 0.0
    %v899 = vmax.f32 %v839, 0.0
    %v900 = vmax.f32 %v841, 0.0
    %v901 = vmax.f32 %v845, 0.0
    %v902 = vmax.f32 %v847, 0.0
    %v903 = vmax.f32 %v849, 0.0
    %v904 = vmax.f32 %v851, 0.0
    %v905 = vmax.f32 %v855, 0.0
    %v906 = vmax.f32 %v857, 0.0
    %v907 = vmax.f32 %v859, 0.0
    %v908 = vmax.f32 %v861, 0.0
    %v909 = vmax.f32 %v865, 0.0
    %v910 = vmax.f32 %v867, 0.0
    %v911 = vmax.f32 %v869, 0.0
    %v912 = vmax.f32 %v871, 0.0
    %v913 = vpack.c.bf16 %v875, %v873
    %v914 = vpack.c.bf16 %v876, %v874
    %v915 = vpack.c.bf16 %v879, %v877
    %v916 = vpack.c.bf16 %v880, %v878
    %v917 = vpack.c.bf16 %v883, %v881
    %v918 = vpack.c.bf16 %v884, %v882
    %v919 = vpack.c.bf16 %v887, %v885
    %v920 = vpack.c.bf16 %v888, %v886
    %v921 = vpack.c.bf16 %v891, %v889
    %v922 = vpack.c.bf16 %v892, %v890
    %v923 = vpack.c.bf16 %v895, %v893
    %v924 = vpack.c.bf16 %v896, %v894
    %v925 = vpack.c.bf16 %v899, %v897
    %v926 = vpack.c.bf16 %v900, %v898
    %v927 = vpack.c.bf16 %v903, %v901
    %v928 = vpack.c.bf16 %v904, %v902
    %v929 = vpack.c.bf16 %v907, %v905
    %v930 = vpack.c.bf16 %v908, %v906
    %v931 = vpack.c.bf16 %v911, %v909
    %v932 = vpack.c.bf16 %v912, %v910
    %v933 = vld [vmem:[%s8] sm:$0xf]
    %v934 = vld [vmem:[%s8 + $0x4] sm:$0xf]
    %v935 = vld [vmem:[%s8 + $0x8] sm:$0xf]
    %v936 = vld [vmem:[%s8 + $0xc] sm:$0xf]
    %v937 = vld [vmem:[%s8 + $0x10] sm:$0xf]
    %v938 = vld [vmem:[%s8 + $0x14] sm:$0xf]
    %v939 = vld [vmem:[%s8 + $0x18] sm:$0xf]
    %v940 = vld [vmem:[%s8 + $0x1c] sm:$0xf]
    %v941 = vld [vmem:[%s8 + $0x20] sm:$0xf]
    %v942 = vld [vmem:[%s8 + $0x24] sm:$0xf]
    %v943 = vld [vmem:[%s8 + $0x28] sm:$0xf]
    %v944 = vld [vmem:[%s8 + $0x2c] sm:$0xf]
    %v945 = vld [vmem:[%s8 + $0x30] sm:$0xf]
    %v946 = vld [vmem:[%s8 + $0x34] sm:$0xf]
    %v947 = vld [vmem:[%s8 + $0x38] sm:$0xf]
    %v948 = vld [vmem:[%s8 + $0x3c] sm:$0xf]
    %v949 = vld [vmem:[%s8 + $0x40] sm:$0xf]
    %v950 = vld [vmem:[%s8 + $0x44] sm:$0xf]
    %v951 = vld [vmem:[%s8 + $0x48] sm:$0xf]
    %v952 = vld [vmem:[%s8 + $0x4c] sm:$0xf]
    %v953 = vld [vmem:[%s8 + $0x50] sm:$0xf]
    %v954 = vld [vmem:[%s8 + $0x54] sm:$0xf]
    %v955 = vld [vmem:[%s8 + $0x58] sm:$0xf]
    %v956 = vld [vmem:[%s8 + $0x5c] sm:$0xf]
    %v957 = vld [vmem:[%s8 + $0x60] sm:$0xf]
    %v958 = vld [vmem:[%s8 + $0x64] sm:$0xf]
    %v959 = vld [vmem:[%s8 + $0x68] sm:$0xf]
    %v960 = vld [vmem:[%s8 + $0x6c] sm:$0xf]
    %v961 = vld [vmem:[%s8 + $0x70] sm:$0xf]
    %v962 = vld [vmem:[%s8 + $0x74] sm:$0xf]
    %v963 = vld [vmem:[%s8 + $0x78] sm:$0xf]
    %v964 = vld [vmem:[%s8 + $0x7c] sm:$0xf]
    %v965 = vld [vmem:[%s9] sm:$0x1]
    %v967 = vlaneseq
    %v968 = vshrl.u32 %v967, 7
    %v969 = vsub.s32 0, %v968
    %v970 = vrot.slane %v965, %v969
    %v1004 = vunpack.c.l.b16 %v933
    %v1005 = vunpack.c.l.b16 %v934
    %v1006 = vunpack.c.l.b16 %v935
    %v1007 = vunpack.c.l.b16 %v936
    %v1008 = vunpack.c.l.b16 %v937
    %v1009 = vunpack.c.l.b16 %v938
    %v1010 = vunpack.c.l.b16 %v939
    %v1011 = vunpack.c.l.b16 %v940
    %v1012 = vunpack.c.l.b16 %v941
    %v1013 = vunpack.c.l.b16 %v942
    %v1014 = vunpack.c.l.b16 %v943
    %v1015 = vunpack.c.l.b16 %v944
    %v1016 = vunpack.c.l.b16 %v945
    %v1017 = vunpack.c.l.b16 %v946
    %v1018 = vunpack.c.l.b16 %v947
    %v1019 = vunpack.c.l.b16 %v948
    %v1020 = vunpack.c.l.b16 %v949
    %v1021 = vunpack.c.l.b16 %v950
    %v1022 = vunpack.c.l.b16 %v951
    %v1023 = vunpack.c.l.b16 %v952
    %v1024 = vunpack.c.l.b16 %v953
    %v1025 = vunpack.c.l.b16 %v954
    %v1026 = vunpack.c.l.b16 %v955
    %v1027 = vunpack.c.l.b16 %v956
    %v1028 = vunpack.c.l.b16 %v957
    %v1029 = vunpack.c.l.b16 %v958
    %v1030 = vunpack.c.l.b16 %v959
    %v1031 = vunpack.c.l.b16 %v960
    %v1032 = vunpack.c.l.b16 %v961
    %v1033 = vunpack.c.l.b16 %v962
    %v1034 = vunpack.c.l.b16 %v963
    %v1035 = vunpack.c.l.b16 %v964
    %v1036 = vpack.c.b16 %v1005, %v1004
    %v1037 = vpack.c.b16 %v1007, %v1006
    %v1038 = vpack.c.b16 %v1009, %v1008
    %v1039 = vpack.c.b16 %v1011, %v1010
    %v1040 = vpack.c.b16 %v1013, %v1012
    %v1041 = vpack.c.b16 %v1015, %v1014
    %v1042 = vpack.c.b16 %v1017, %v1016
    %v1043 = vpack.c.b16 %v1019, %v1018
    %v1044 = vpack.c.b16 %v1021, %v1020
    %v1045 = vpack.c.b16 %v1023, %v1022
    %v1046 = vpack.c.b16 %v1025, %v1024
    %v1047 = vpack.c.b16 %v1027, %v1026
    %v1048 = vpack.c.b16 %v1029, %v1028
    %v1049 = vpack.c.b16 %v1031, %v1030
    %v1050 = vpack.c.b16 %v1033, %v1032
    %v1051 = vpack.c.b16 %v1035, %v1034
    %1068 = vmatprep.subr.bf16.mxu0 0
    %1069 = vmatpush1.bf16.msra.mxu0 %v1036
    %1070 = vmatprep.subr.bf16.mxu0 0
    %1071 = vmatpush1.bf16.msra.mxu0 %v1037
    %1072 = vmatprep.subr.bf16.mxu0 0
    %1073 = vmatpush1.bf16.msra.mxu0 %v1038
    %1074 = vmatprep.subr.bf16.mxu0 0
    %1075 = vmatpush1.bf16.msra.mxu0 %v1039
    %1076 = vmatprep.subr.bf16.mxu0 0
    %1077 = vmatpush1.bf16.msra.mxu0 %v1040
    %1078 = vmatprep.subr.bf16.mxu0 0
    %1079 = vmatpush1.bf16.msra.mxu0 %v1041
    %1080 = vmatprep.subr.bf16.mxu0 0
    %1081 = vmatpush1.bf16.msra.mxu0 %v1042
    %1082 = vmatprep.subr.bf16.mxu0 0
    %1083 = vmatpush1.bf16.msra.mxu0 %v1043
    %1084 = vmatprep.subr.bf16.mxu0 0
    %1085 = vmatpush1.bf16.msra.mxu0 %v1044
    %1086 = vmatprep.subr.bf16.mxu0 0
    %1087 = vmatpush1.bf16.msra.mxu0 %v1045
    %1088 = vmatprep.subr.bf16.mxu0 0
    %1089 = vmatpush1.bf16.msra.mxu0 %v1046
    %1090 = vmatprep.subr.bf16.mxu0 0
    %1091 = vmatpush1.bf16.msra.mxu0 %v1047
    %1092 = vmatprep.subr.bf16.mxu0 0
    %1093 = vmatpush1.bf16.msra.mxu0 %v1048
    %1094 = vmatprep.subr.bf16.mxu0 0
    %1095 = vmatpush1.bf16.msra.mxu0 %v1049
    %1096 = vmatprep.subr.bf16.mxu0 0
    %1097 = vmatpush1.bf16.msra.mxu0 %v1050
    %1098 = vmatprep.subr.bf16.mxu0 0
    %1099 = vmatpush1.bf16.msra.mxu0 %v1051
    %1100 = vmatprep.mubr.bf16.mxu0 %v914
    %1101 = vmatmul.mubr.bf16.gmra.mrb[0].mxu0 %v913
    %v1102 = vpop.f32.mrb[0].mxu0
    %v1103 = vadd.f32 %v970, %v1102
    %v1104 = vpop.f32.mrb[0].mxu0
    %v1105 = vpop.f32.mrb[0].mxu0
    %v1106 = vadd.f32 %v970, %v1105
    %v1107 = vpop.f32.mrb[0].mxu0
    %1108 = vmatprep.mubr.bf16.mxu0 %v916
    %1109 = vmatmul.mubr.bf16.gmra.mrb[0].mxu0 %v915
    %v1110 = vpop.f32.mrb[0].mxu0
    %v1111 = vadd.f32 %v970, %v1110
    %v1112 = vpop.f32.mrb[0].mxu0
    %v1113 = vpop.f32.mrb[0].mxu0
    %v1114 = vadd.f32 %v970, %v1113
    %v1115 = vpop.f32.mrb[0].mxu0
    %1116 = vmatprep.mubr.bf16.mxu0 %v918
    %1117 = vmatmul.mubr.bf16.gmra.mrb[0].mxu0 %v917
    %v1118 = vpop.f32.mrb[0].mxu0
    %v1119 = vadd.f32 %v970, %v1118
    %v1120 = vpop.f32.mrb[0].mxu0
    %v1121 = vpop.f32.mrb[0].mxu0
    %v1122 = vadd.f32 %v970, %v1121
    %v1123 = vpop.f32.mrb[0].mxu0
    %1124 = vmatprep.mubr.bf16.mxu0 %v920
    %1125 = vmatmul.mubr.bf16.gmra.mrb[0].mxu0 %v919
    %v1126 = vpop.f32.mrb[0].mxu0
    %v1127 = vadd.f32 %v970, %v1126
    %v1128 = vpop.f32.mrb[0].mxu0
    %v1129 = vpop.f32.mrb[0].mxu0
    %v1130 = vadd.f32 %v970, %v1129
    %v1131 = vpop.f32.mrb[0].mxu0
    %1132 = vmatprep.mubr.bf16.mxu0 %v922
    %1133 = vmatmul.mubr.bf16.gmra.mrb[0].mxu0 %v921
    %v1134 = vpop.f32.mrb[0].mxu0
    %v1135 = vadd.f32 %v970, %v1134
    %v1136 = vpop.f32.mrb[0].mxu0
    %v1137 = vpop.f32.mrb[0].mxu0
    %v1138 = vadd.f32 %v970, %v1137
    %v1139 = vpop.f32.mrb[0].mxu0
    %1140 = vmatprep.mubr.bf16.mxu0 %v924
    %1141 = vmatmul.mubr.bf16.gmra.mrb[0].mxu0 %v923
    %v1142 = vpop.f32.mrb[0].mxu0
    %v1143 = vadd.f32 %v970, %v1142
    %v1144 = vpop.f32.mrb[0].mxu0
    %v1145 = vpop.f32.mrb[0].mxu0
    %v1146 = vadd.f32 %v970, %v1145
    %v1147 = vpop.f32.mrb[0].mxu0
    %1148 = vmatprep.mubr.bf16.mxu0 %v926
    %1149 = vmatmul.mubr.bf16.gmra.mrb[0].mxu0 %v925
    %v1150 = vpop.f32.mrb[0].mxu0
    %v1151 = vadd.f32 %v970, %v1150
    %v1152 = vpop.f32.mrb[0].mxu0
    %v1153 = vpop.f32.mrb[0].mxu0
    %v1154 = vadd.f32 %v970, %v1153
    %v1155 = vpop.f32.mrb[0].mxu0
    %1156 = vmatprep.mubr.bf16.mxu0 %v928
    %1157 = vmatmul.mubr.bf16.gmra.mrb[0].mxu0 %v927
    %v1158 = vpop.f32.mrb[0].mxu0
    %v1159 = vadd.f32 %v970, %v1158
    %v1160 = vpop.f32.mrb[0].mxu0
    %v1161 = vpop.f32.mrb[0].mxu0
    %v1162 = vadd.f32 %v970, %v1161
    %v1163 = vpop.f32.mrb[0].mxu0
    %1164 = vmatprep.mubr.bf16.mxu0 %v930
    %1165 = vmatmul.mubr.bf16.gmra.mrb[0].mxu0 %v929
    %v1166 = vpop.f32.mrb[0].mxu0
    %v1167 = vadd.f32 %v970, %v1166
    %v1168 = vpop.f32.mrb[0].mxu0
    %v1169 = vpop.f32.mrb[0].mxu0
    %v1170 = vadd.f32 %v970, %v1169
    %v1171 = vpop.f32.mrb[0].mxu0
    %1172 = vmatprep.mubr.bf16.mxu0 %v932
    %1173 = vmatmul.mubr.bf16.gmra.mrb[0].mxu0 %v931
    %v1174 = vpop.f32.mrb[0].mxu0
    %v1175 = vadd.f32 %v970, %v1174
    %v1176 = vpop.f32.mrb[0].mxu0
    %v1177 = vpop.f32.mrb[0].mxu0
    %v1178 = vadd.f32 %v970, %v1177
    %v1179 = vpop.f32.mrb[0].mxu0
    %1180 = vdwg.mxu0
    %v1181 = vadd.f32 %v602, %v1103
    %v1182 = vadd.f32 %v603, %v1106
    %v1183 = vadd.f32 %v604, %v1111
    %v1184 = vadd.f32 %v605, %v1114
    %v1185 = vadd.f32 %v606, %v1119
    %v1186 = vadd.f32 %v607, %v1122
    %v1187 = vadd.f32 %v608, %v1127
    %v1188 = vadd.f32 %v609, %v1130
    %v1189 = vadd.f32 %v610, %v1135
    %v1190 = vadd.f32 %v611, %v1138
    %v1191 = vadd.f32 %v612, %v1143
    %v1192 = vadd.f32 %v613, %v1146
    %v1193 = vadd.f32 %v614, %v1151
    %v1194 = vadd.f32 %v615, %v1154
    %v1195 = vadd.f32 %v616, %v1159
    %v1196 = vadd.f32 %v617, %v1162
    %v1197 = vadd.f32 %v618, %v1167
    %v1198 = vadd.f32 %v619, %v1170
    %v1199 = vadd.f32 %v620, %v1175
    %v1200 = vadd.f32 %v621, %v1178
    %1201 = vadd.xlane.f32.xlu0 %v1181
    %v1202 = vpop.xlane.xlu0 %1201
    %1203 = vadd.xlane.f32.xlu0 %v1182
    %v1204 = vpop.xlane.xlu0 %1203
    %1205 = vadd.xlane.f32.xlu0 %v1183
    %v1206 = vpop.xlane.xlu0 %1205
    %1207 = vadd.xlane.f32.xlu0 %v1184
    %v1208 = vpop.xlane.xlu0 %1207
    %1209 = vadd.xlane.f32.xlu0 %v1185
    %v1210 = vpop.xlane.xlu0 %1209
    %1211 = vadd.xlane.f32.xlu0 %v1186
    %v1212 = vpop.xlane.xlu0 %1211
    %1213 = vadd.xlane.f32.xlu0 %v1187
    %v1214 = vpop.xlane.xlu0 %1213
    %1215 = vadd.xlane.f32.xlu0 %v1188
    %v1216 = vpop.xlane.xlu0 %1215
    %1217 = vadd.xlane.f32.xlu0 %v1189
    %v1218 = vpop.xlane.xlu0 %1217
    %1219 = vadd.xlane.f32.xlu0 %v1190
    %v1220 = vpop.xlane.xlu0 %1219
    %1221 = vadd.xlane.f32.xlu0 %v1191
    %v1222 = vpop.xlane.xlu0 %1221
    %1223 = vadd.xlane.f32.xlu0 %v1192
    %v1224 = vpop.xlane.xlu0 %1223
    %1225 = vadd.xlane.f32.xlu0 %v1193
    %v1226 = vpop.xlane.xlu0 %1225
    %1227 = vadd.xlane.f32.xlu0 %v1194
    %v1228 = vpop.xlane.xlu0 %1227
    %1229 = vadd.xlane.f32.xlu0 %v1195
    %v1230 = vpop.xlane.xlu0 %1229
    %1231 = vadd.xlane.f32.xlu0 %v1196
    %v1232 = vpop.xlane.xlu0 %1231
    %1233 = vadd.xlane.f32.xlu0 %v1197
    %v1234 = vpop.xlane.xlu0 %1233
    %1235 = vadd.xlane.f32.xlu0 %v1198
    %v1236 = vpop.xlane.xlu0 %1235
    %1237 = vadd.xlane.f32.xlu0 %v1199
    %v1238 = vpop.xlane.xlu0 %1237
    %1239 = vadd.xlane.f32.xlu0 %v1200
    %v1240 = vpop.xlane.xlu0 %1239
    %v1241 = vmul.f32 %v1202, %v387
    %v1242 = vmul.f32 %v1204, %v387
    %v1243 = vmul.f32 %v1206, %v387
    %v1244 = vmul.f32 %v1208, %v387
    %v1245 = vmul.f32 %v1210, %v387
    %v1246 = vmul.f32 %v1212, %v387
    %v1247 = vmul.f32 %v1214, %v387
    %v1248 = vmul.f32 %v1216, %v387
    %v1249 = vmul.f32 %v1218, %v387
    %v1250 = vmul.f32 %v1220, %v387
    %v1251 = vmul.f32 %v1222, %v387
    %v1252 = vmul.f32 %v1224, %v387
    %v1253 = vmul.f32 %v1226, %v387
    %v1254 = vmul.f32 %v1228, %v387
    %v1255 = vmul.f32 %v1230, %v387
    %v1256 = vmul.f32 %v1232, %v387
    %v1257 = vmul.f32 %v1234, %v387
    %v1258 = vmul.f32 %v1236, %v387
    %v1259 = vmul.f32 %v1238, %v387
    %v1260 = vmul.f32 %v1240, %v387
    %v1261 = vsub.f32 %v1181, %v1241
    %v1262 = vsub.f32 %v1182, %v1242
    %v1263 = vsub.f32 %v1183, %v1243
    %v1264 = vsub.f32 %v1184, %v1244
    %v1265 = vsub.f32 %v1185, %v1245
    %v1266 = vsub.f32 %v1186, %v1246
    %v1267 = vsub.f32 %v1187, %v1247
    %v1268 = vsub.f32 %v1188, %v1248
    %v1269 = vsub.f32 %v1189, %v1249
    %v1270 = vsub.f32 %v1190, %v1250
    %v1271 = vsub.f32 %v1191, %v1251
    %v1272 = vsub.f32 %v1192, %v1252
    %v1273 = vsub.f32 %v1193, %v1253
    %v1274 = vsub.f32 %v1194, %v1254
    %v1275 = vsub.f32 %v1195, %v1255
    %v1276 = vsub.f32 %v1196, %v1256
    %v1277 = vsub.f32 %v1197, %v1257
    %v1278 = vsub.f32 %v1198, %v1258
    %v1279 = vsub.f32 %v1199, %v1259
    %v1280 = vsub.f32 %v1200, %v1260
    %v1281 = vmul.f32 %v1261, %v1261
    %v1282 = vmul.f32 %v1262, %v1262
    %v1283 = vmul.f32 %v1263, %v1263
    %v1284 = vmul.f32 %v1264, %v1264
    %v1285 = vmul.f32 %v1265, %v1265
    %v1286 = vmul.f32 %v1266, %v1266
    %v1287 = vmul.f32 %v1267, %v1267
    %v1288 = vmul.f32 %v1268, %v1268
    %v1289 = vmul.f32 %v1269, %v1269
    %v1290 = vmul.f32 %v1270, %v1270
    %v1291 = vmul.f32 %v1271, %v1271
    %v1292 = vmul.f32 %v1272, %v1272
    %v1293 = vmul.f32 %v1273, %v1273
    %v1294 = vmul.f32 %v1274, %v1274
    %v1295 = vmul.f32 %v1275, %v1275
    %v1296 = vmul.f32 %v1276, %v1276
    %v1297 = vmul.f32 %v1277, %v1277
    %v1298 = vmul.f32 %v1278, %v1278
    %v1299 = vmul.f32 %v1279, %v1279
    %v1300 = vmul.f32 %v1280, %v1280
    %1301 = vadd.xlane.f32.xlu0 %v1281
    %v1302 = vpop.xlane.xlu0 %1301
    %1303 = vadd.xlane.f32.xlu0 %v1282
    %v1304 = vpop.xlane.xlu0 %1303
    %1305 = vadd.xlane.f32.xlu0 %v1283
    %v1306 = vpop.xlane.xlu0 %1305
    %1307 = vadd.xlane.f32.xlu0 %v1284
    %v1308 = vpop.xlane.xlu0 %1307
    %1309 = vadd.xlane.f32.xlu0 %v1285
    %v1310 = vpop.xlane.xlu0 %1309
    %1311 = vadd.xlane.f32.xlu0 %v1286
    %v1312 = vpop.xlane.xlu0 %1311
    %1313 = vadd.xlane.f32.xlu0 %v1287
    %v1314 = vpop.xlane.xlu0 %1313
    %1315 = vadd.xlane.f32.xlu0 %v1288
    %v1316 = vpop.xlane.xlu0 %1315
    %1317 = vadd.xlane.f32.xlu0 %v1289
    %v1318 = vpop.xlane.xlu0 %1317
    %1319 = vadd.xlane.f32.xlu0 %v1290
    %v1320 = vpop.xlane.xlu0 %1319
    %1321 = vadd.xlane.f32.xlu0 %v1291
    %v1322 = vpop.xlane.xlu0 %1321
    %1323 = vadd.xlane.f32.xlu0 %v1292
    %v1324 = vpop.xlane.xlu0 %1323
    %1325 = vadd.xlane.f32.xlu0 %v1293
    %v1326 = vpop.xlane.xlu0 %1325
    %1327 = vadd.xlane.f32.xlu0 %v1294
    %v1328 = vpop.xlane.xlu0 %1327
    %1329 = vadd.xlane.f32.xlu0 %v1295
    %v1330 = vpop.xlane.xlu0 %1329
    %1331 = vadd.xlane.f32.xlu0 %v1296
    %v1332 = vpop.xlane.xlu0 %1331
    %1333 = vadd.xlane.f32.xlu0 %v1297
    %v1334 = vpop.xlane.xlu0 %1333
    %1335 = vadd.xlane.f32.xlu0 %v1298
    %v1336 = vpop.xlane.xlu0 %1335
    %1337 = vadd.xlane.f32.xlu0 %v1299
    %v1338 = vpop.xlane.xlu0 %1337
    %1339 = vadd.xlane.f32.xlu0 %v1300
    %v1340 = vpop.xlane.xlu0 %1339
    %v1341 = vmul.f32 %v1302, %v387
    %v1342 = vmul.f32 %v1304, %v387
    %v1343 = vmul.f32 %v1306, %v387
    %v1344 = vmul.f32 %v1308, %v387
    %v1345 = vmul.f32 %v1310, %v387
    %v1346 = vmul.f32 %v1312, %v387
    %v1347 = vmul.f32 %v1314, %v387
    %v1348 = vmul.f32 %v1316, %v387
    %v1349 = vmul.f32 %v1318, %v387
    %v1350 = vmul.f32 %v1320, %v387
    %v1351 = vmul.f32 %v1322, %v387
    %v1352 = vmul.f32 %v1324, %v387
    %v1353 = vmul.f32 %v1326, %v387
    %v1354 = vmul.f32 %v1328, %v387
    %v1355 = vmul.f32 %v1330, %v387
    %v1356 = vmul.f32 %v1332, %v387
    %v1357 = vmul.f32 %v1334, %v387
    %v1358 = vmul.f32 %v1336, %v387
    %v1359 = vmul.f32 %v1338, %v387
    %v1360 = vmul.f32 %v1340, %v387
    %v1361 = vadd.f32 %v1341, 1e-05
    %v1362 = vadd.f32 %v1342, 1e-05
    %v1363 = vadd.f32 %v1343, 1e-05
    %v1364 = vadd.f32 %v1344, 1e-05
    %v1365 = vadd.f32 %v1345, 1e-05
    %v1366 = vadd.f32 %v1346, 1e-05
    %v1367 = vadd.f32 %v1347, 1e-05
    %v1368 = vadd.f32 %v1348, 1e-05
    %v1369 = vadd.f32 %v1349, 1e-05
    %v1370 = vadd.f32 %v1350, 1e-05
    %v1371 = vadd.f32 %v1351, 1e-05
    %v1372 = vadd.f32 %v1352, 1e-05
    %v1373 = vadd.f32 %v1353, 1e-05
    %v1374 = vadd.f32 %v1354, 1e-05
    %v1375 = vadd.f32 %v1355, 1e-05
    %v1376 = vadd.f32 %v1356, 1e-05
    %v1377 = vadd.f32 %v1357, 1e-05
    %v1378 = vadd.f32 %v1358, 1e-05
    %v1379 = vadd.f32 %v1359, 1e-05
    %v1380 = vadd.f32 %v1360, 1e-05
    %v1381 = vrsqrt.pop %v1361
    %v1382 = vrsqrt.pop %v1362
    %v1383 = vrsqrt.pop %v1363
    %v1384 = vrsqrt.pop %v1364
    %v1385 = vrsqrt.pop %v1365
    %v1386 = vrsqrt.pop %v1366
    %v1387 = vrsqrt.pop %v1367
    %v1388 = vrsqrt.pop %v1368
    %v1389 = vrsqrt.pop %v1369
    %v1390 = vrsqrt.pop %v1370
    %v1391 = vrsqrt.pop %v1371
    %v1392 = vrsqrt.pop %v1372
    %v1393 = vrsqrt.pop %v1373
    %v1394 = vrsqrt.pop %v1374
    %v1395 = vrsqrt.pop %v1375
    %v1396 = vrsqrt.pop %v1376
    %v1397 = vrsqrt.pop %v1377
    %v1398 = vrsqrt.pop %v1378
    %v1399 = vrsqrt.pop %v1379
    %v1400 = vrsqrt.pop %v1380
    %v1401 = vmul.f32 %v1261, %v1381
    %v1402 = vmul.f32 %v1262, %v1382
    %v1403 = vmul.f32 %v1263, %v1383
    %v1404 = vmul.f32 %v1264, %v1384
    %v1405 = vmul.f32 %v1265, %v1385
    %v1406 = vmul.f32 %v1266, %v1386
    %v1407 = vmul.f32 %v1267, %v1387
    %v1408 = vmul.f32 %v1268, %v1388
    %v1409 = vmul.f32 %v1269, %v1389
    %v1410 = vmul.f32 %v1270, %v1390
    %v1411 = vmul.f32 %v1271, %v1391
    %v1412 = vmul.f32 %v1272, %v1392
    %v1413 = vmul.f32 %v1273, %v1393
    %v1414 = vmul.f32 %v1274, %v1394
    %v1415 = vmul.f32 %v1275, %v1395
    %v1416 = vmul.f32 %v1276, %v1396
    %v1417 = vmul.f32 %v1277, %v1397
    %v1418 = vmul.f32 %v1278, %v1398
    %v1419 = vmul.f32 %v1279, %v1399
    %v1420 = vmul.f32 %v1280, %v1400
    %v1421 = vld [vmem:[%s10] sm:$0x1]
    %v1423 = vlaneseq
    %v1424 = vshrl.u32 %v1423, 7
    %v1425 = vsub.s32 0, %v1424
    %v1426 = vrot.slane %v1421, %v1425
    %v1428 = vmul.f32 %v1401, %v1426
    %v1429 = vmul.f32 %v1402, %v1426
    %v1430 = vmul.f32 %v1403, %v1426
    %v1431 = vmul.f32 %v1404, %v1426
    %v1432 = vmul.f32 %v1405, %v1426
    %v1433 = vmul.f32 %v1406, %v1426
    %v1434 = vmul.f32 %v1407, %v1426
    %v1435 = vmul.f32 %v1408, %v1426
    %v1436 = vmul.f32 %v1409, %v1426
    %v1437 = vmul.f32 %v1410, %v1426
    %v1438 = vmul.f32 %v1411, %v1426
    %v1439 = vmul.f32 %v1412, %v1426
    %v1440 = vmul.f32 %v1413, %v1426
    %v1441 = vmul.f32 %v1414, %v1426
    %v1442 = vmul.f32 %v1415, %v1426
    %v1443 = vmul.f32 %v1416, %v1426
    %v1444 = vmul.f32 %v1417, %v1426
    %v1445 = vmul.f32 %v1418, %v1426
    %v1446 = vmul.f32 %v1419, %v1426
    %v1447 = vmul.f32 %v1420, %v1426
    %v1448 = vld [vmem:[%s11] sm:$0x1]
    %v1450 = vlaneseq
    %v1451 = vshrl.u32 %v1450, 7
    %v1452 = vsub.s32 0, %v1451
    %v1453 = vrot.slane %v1448, %v1452
    %v1455 = vadd.f32 %v1428, %v1453
    %v1456 = vadd.f32 %v1429, %v1453
    %v1457 = vadd.f32 %v1430, %v1453
    %v1458 = vadd.f32 %v1431, %v1453
    %v1459 = vadd.f32 %v1432, %v1453
    %v1460 = vadd.f32 %v1433, %v1453
    %v1461 = vadd.f32 %v1434, %v1453
    %v1462 = vadd.f32 %v1435, %v1453
    %v1463 = vadd.f32 %v1436, %v1453
    %v1464 = vadd.f32 %v1437, %v1453
    %v1465 = vadd.f32 %v1438, %v1453
    %v1466 = vadd.f32 %v1439, %v1453
    %v1467 = vadd.f32 %v1440, %v1453
    %v1468 = vadd.f32 %v1441, %v1453
    %v1469 = vadd.f32 %v1442, %v1453
    %v1470 = vadd.f32 %v1443, %v1453
    %v1471 = vadd.f32 %v1444, %v1453
    %v1472 = vadd.f32 %v1445, %v1453
    %v1473 = vadd.f32 %v1446, %v1453
    %v1474 = vadd.f32 %v1447, %v1453
    %1475 = vst [vmem:[#allocation2] sm:$0xff] %v1455
    %1476 = vst [vmem:[#allocation2 + $0x8] sm:$0xff] %v1456
    %1477 = vst [vmem:[#allocation2 + $0x10] sm:$0xff] %v1457
    %1478 = vst [vmem:[#allocation2 + $0x18] sm:$0xff] %v1458
    %1479 = vst [vmem:[#allocation2 + $0x20] sm:$0xff] %v1459
    %1480 = vst [vmem:[#allocation2 + $0x28] sm:$0xff] %v1460
    %1481 = vst [vmem:[#allocation2 + $0x30] sm:$0xff] %v1461
    %1482 = vst [vmem:[#allocation2 + $0x38] sm:$0xff] %v1462
    %1483 = vst [vmem:[#allocation2 + $0x40] sm:$0xff] %v1463
    %1484 = vst [vmem:[#allocation2 + $0x48] sm:$0xff] %v1464
    %1485 = vst [vmem:[#allocation2 + $0x50] sm:$0xff] %v1465
    %1486 = vst [vmem:[#allocation2 + $0x58] sm:$0xff] %v1466
    %1487 = vst [vmem:[#allocation2 + $0x60] sm:$0xff] %v1467
    %1488 = vst [vmem:[#allocation2 + $0x68] sm:$0xff] %v1468
    %1489 = vst [vmem:[#allocation2 + $0x70] sm:$0xff] %v1469
    %1490 = vst [vmem:[#allocation2 + $0x78] sm:$0xff] %v1470
    %1491 = vst [vmem:[#allocation2 + $0x80] sm:$0xff] %v1471
    %1492 = vst [vmem:[#allocation2 + $0x88] sm:$0xff] %v1472
    %1493 = vst [vmem:[#allocation2 + $0x90] sm:$0xff] %v1473
    %1494 = vst [vmem:[#allocation2 + $0x98] sm:$0xff] %v1474
    // Predicated region
    $region50: #{deformable_transformer_encoder.5} parent=1 // pred_check
      _
    $region51: #{deformable_transformer_encoder.5} parent=1 // pred_check_branch
      %1496 = sbr.rel (0) target = $region53
    $region52: #{deformable_transformer_encoder.5} parent=1 // pred_region
      %s1498 = ssub.s32 2560, 2560
      %1499 = vsyncadd [#allocation3], %s1498
      %s1500 = sshll.u32 [#allocation2], 4
      %s1501 = int_to_ptr.vmem [resolvable:$true] %s1500
      %1506 = dma.vmem_to_hbm [thread:$0]  %s1501, 2560, %s12, [#allocation3], 128, 128, 8
    $region53: #{deformable_transformer_encoder.5} parent=1 // pred_fallthru
      _
    // Predicated region
    $region54: #{deformable_transformer_encoder.5} parent=1 // pred_check
      _
    $region55: #{deformable_transformer_encoder.5} parent=1 // pred_check_branch
      %1508 = sbr.rel (0) target = $region57
    $region56: #{deformable_transformer_encoder.5} parent=1 // pred_region
      %1509 = dma.done [#allocation3], 2560
    $region57: #{deformable_transformer_encoder.5} parent=1 // pred_fallthru
      _
    %1510 = vsyncpa [#allocation3], 1

</llo_original>
